<compile_context>
chip_gen: v7x
topology: tpu7x:2x2x1
jax: 0.10.0
libtpu: 0.0.40
codegen_flags: <defaults>
</compile_context>

<pallas_src>
import functools

import jax
import jax.numpy as jnp
from jax import lax
from jax.experimental import pallas as pl
from jax.experimental.pallas import tpu as pltpu


# ---------------------------------------------------------------------------
# Kernel
# ---------------------------------------------------------------------------
def _out_hw(H, W, stride):
    # 3x3 conv, padding 1:  out = (dim + 2 - 3)//stride + 1
    return (H - 1) // stride + 1, (W - 1) // stride + 1


def _make_kernel(Nb, H, W, Cin, Chid, Cout, stride, has_expand, use_shortcut,
                 mxu_dtype):
    Ho, Wo = _out_hw(H, W, stride)
    # Padded-scratch spatial dims: big enough that every tap's strided read
    # window (offsets 0..2, Ho/Wo samples, stride s) stays in bounds, with
    # zero borders.  For stride==1 this is exactly (H+2, W+2).
    Hp = Ho * stride + 2
    Wp = Wo * stride + 2

    def kernel(x_ref, w1_ref, b1_ref, wdw_ref, bdw_ref, w2_ref, b2_ref,
               o_ref, pad_ref):
        x = x_ref[...].astype(jnp.float32)                    # (Nb, H, W, Cin)

        # ---- expand: 1x1 conv == matmul over channels (MXU, f32 acc).
        # BN scale already folded into w1; only the bias add remains.
        if has_expand:
            x2 = x.reshape(Nb * H * W, Cin)
            h2 = jnp.dot(x2.astype(mxu_dtype), w1_ref[...],
                         preferred_element_type=jnp.float32)  # (Nb*H*W, Chid)
            h2 = jnp.clip(h2 + b1_ref[...], 0.0, 6.0)
            h = h2.reshape(Nb, H, W, Chid)
        else:
            h = x                                             # Chid == Cin

        # ---- depthwise 3x3, pad=1, stride s -------------------------------
        # Zero only the border cells each step (cheap O(border) work; correct
        # even if the parallel batch axis is split across TensorCores); the
        # interior is fully overwritten below.
        pad_ref[:, :1, :, :] = jnp.zeros((Nb, 1, Wp, Chid), jnp.float32)
        if Hp - 1 - H > 0:
            pad_ref[:, 1 + H:, :, :] = jnp.zeros((Nb, Hp - 1 - H, Wp, Chid),
                                                 jnp.float32)
        pad_ref[:, :, :1, :] = jnp.zeros((Nb, Hp, 1, Chid), jnp.float32)
        if Wp - 1 - W > 0:
            pad_ref[:, :, 1 + W:, :] = jnp.zeros((Nb, Hp, Wp - 1 - W, Chid),
                                                 jnp.float32)
        pad_ref[:, 1:1 + H, 1:1 + W, :] = h

        wdw = wdw_ref[...]                                    # (3, 3, Chid), scale folded
        acc = None
        for kh in range(3):
            for kw in range(3):
                if stride == 1:
                    # Static contiguous tap read straight from the scratch.
                    tap = pad_ref[:, kh:kh + Ho, kw:kw + Wo, :]
                else:
                    # Strided slice read: address-only stride in H, sublane
                    # stride in W.  Accumulates only at strided output
                    # positions; no reshape/index intermediates per tap.
                    tap = pad_ref[:, pl.ds(kh, Ho, stride=stride),
                                  pl.ds(kw, Wo, stride=stride), :]
                term = tap * wdw[kh, kw, :].reshape(1, 1, 1, Chid)
                acc = term if acc is None else acc + term

        acc = jnp.clip(acc + bdw_ref[...].reshape(1, 1, 1, Chid), 0.0, 6.0)

        # ---- project: 1x1 conv == matmul (MXU, f32 acc) + bias ------------
        a2 = acc.reshape(Nb * Ho * Wo, Chid)
        y2 = jnp.dot(a2.astype(mxu_dtype), w2_ref[...],
                     preferred_element_type=jnp.float32)      # (Nb*Ho*Wo, Cout)
        y2 = y2 + b2_ref[...]

        if use_shortcut:                                      # stride==1, Cin==Cout
            y2 = y2 + x.reshape(Nb * H * W, Cin)

        o_ref[...] = y2.reshape(Nb, Ho, Wo, Cout).astype(o_ref.dtype)

    return kernel, Ho, Wo, Hp, Wp


# ---------------------------------------------------------------------------
# VMEM sizing (generation-derived)
# ---------------------------------------------------------------------------
def _vmem_f32_bytes(shape):
    """f32 bytes of `shape` after TPU (8,128) layout padding of the last two dims."""
    s = list(shape)
    s[-1] = -(-s[-1] // 128) * 128
    s[-2] = -(-s[-2] // 8) * 8
    n = 1
    for d in s:
        n *= d
    return 4 * n


def _tpu_vmem_and_cores():
    """Per-core VMEM capacity (bytes) and TensorCores-per-chip.
    Conservative (v7x-sized) fallbacks if the query is unavailable."""
    vmem_cap = 64 << 20
    num_cores = 1
    try:
        info = pltpu.get_tpu_info()
        cap = getattr(info, "vmem_capacity_bytes", None)
        if cap:
            vmem_cap = int(cap)
        for name in ("num_cores", "cores_per_chip", "tensorcores_per_chip",
                     "num_tensorcores", "core_count"):
            v = getattr(info, name, None)
            if isinstance(v, int) and v > 0:
                num_cores = v
                break
    except Exception:
        pass
    return vmem_cap, num_cores


def _pick_batch_block(N, per_image_bytes, budget_bytes, num_cores):
    """Largest divisor of N whose per-step working set fits `budget_bytes`.
    On multi-TensorCore chips (v7x) keep >= num_cores grid steps so the
    parallel batch axis can actually be split; on single-TC chips (v5e/v6e)
    let one step cover the whole batch (amortizes per-step overhead)."""
    best = 1
    for nb in range(1, N + 1):
        if N % nb != 0:
            continue
        if nb * per_image_bytes > budget_bytes:
            continue
        if num_cores >= 2 and N >= num_cores and (N // nb) < num_cores:
            continue
        best = nb
    return best


# ---------------------------------------------------------------------------
# Wrapper
# ---------------------------------------------------------------------------
def inverted_residual_pallas(x, params, *, stride, expand_ratio,
                             mxu_dtype=jnp.bfloat16, batch_block=None,
                             data_format="NCHW"):
    """InvertedResidual forward.

    x: (N, Cin, H, W) if data_format == "NCHW" (PyTorch parity, boundary
       transposes) or (N, H, W, Cin) if "NHWC" (no boundary transposes).
    mxu_dtype: operand dtype of the two 1x1-conv matmuls (f32 accumulation);
       pass jnp.float32 for exact parity testing.
    Passing a bf16 `x` halves the boundary DMA bytes (internal math stays f32).
    """
    if data_format == "NCHW":
        x_nhwc = jnp.transpose(x, (0, 2, 3, 1))
    elif data_format == "NHWC":
        x_nhwc = x
    else:
        raise ValueError(data_format)
    N, H, W, Cin = x_nhwc.shape

    # Fold the BN scales into the conv weights (glue): (x.W)*s + b == x.(W*s) + b.
    # Only bias adds remain in the (VALU-bound) kernel.
    w1 = (params["w1"] * params["s1"]).astype(mxu_dtype)                 # (Cin, Chid)
    b1 = params["b1"].astype(jnp.float32)                                # (1, Chid)
    wdw = (params["wdw"] * params["sdw"].reshape(1, 1, -1)).astype(jnp.float32)
    bdw = params["bdw"].astype(jnp.float32)                              # (1, Chid)
    w2 = (params["w2"] * params["s2"]).astype(mxu_dtype)                 # (Chid, Cout)
    b2 = params["b2"].astype(jnp.float32)                                # (1, Cout)

    Chid = wdw.shape[-1]
    Cout = w2.shape[-1]
    has_expand = expand_ratio != 1
    use_shortcut = (stride == 1) and (Cin == Cout)

    Ho, Wo = _out_hw(H, W, stride)
    Hp = Ho * stride + 2
    Wp = Wo * stride + 2

    # Per-image VMEM working-set estimate (f32, (8,128)-layout-padded).
    per_img = (2 * _vmem_f32_bytes((H, W, Cin))        # input block (dbl buffered)
               + _vmem_f32_bytes((H, W, Chid))         # expanded activation
               + _vmem_f32_bytes((Hp, Wp, Chid))       # zero-padded depthwise scratch
               + 2 * _vmem_f32_bytes((Ho, Wo, Chid))   # depthwise acc + tap temp
               + 3 * _vmem_f32_bytes((Ho, Wo, Cout)))  # projected + out block (dbl buf)

    vmem_cap, num_cores = _tpu_vmem_and_cores()
    budget = int(0.70 * vmem_cap)                      # ~90 MiB v5e/v6e, ~45 MiB v7x
    Nb = batch_block if batch_block is not None else _pick_batch_block(
        N, per_img, budget, num_cores)
    assert N % Nb == 0, (N, Nb)
    grid = (N // Nb,)

    # Explicit scoped-VMEM limit with headroom: never request more than ~85%
    # of per-core capacity (compiler still needs room for double buffers,
    # internal scratch and spill slots); floor at the 32 MiB scoped default.
    cap85 = int(0.85 * vmem_cap)
    vmem_limit = int(min(cap85, max(min(32 << 20, cap85),
                                    2 * Nb * per_img + (4 << 20))))

    kernel, *_ = _make_kernel(Nb, H, W, Cin, Chid, Cout, stride,
                              has_expand, use_shortcut, mxu_dtype)

    full = lambda a: pl.BlockSpec(a.shape, lambda n: (0,) * a.ndim)
    # NOTE: the weight/bias blocks are grid-invariant; at realistic channel
    # counts pipeline_mode=pl.Buffered(1) on them would skip redundant double
    # buffering (VMEM headroom on v7x).  They are only a few KiB here.
    # NOTE: on v7x, pltpu.CORE_PARALLEL on the batch axis would guarantee the
    # two-TensorCore split; "parallel" is kept here for portability.
    out = pl.pallas_call(
        kernel,
        out_shape=jax.ShapeDtypeStruct((N, Ho, Wo, Cout), x_nhwc.dtype),
        grid_spec=pltpu.PrefetchScalarGridSpec(
            num_scalar_prefetch=0,
            grid=grid,
            in_specs=[
                pl.BlockSpec((Nb, H, W, Cin), lambda n: (n, 0, 0, 0)),
                full(w1), full(b1),
                full(wdw), full(bdw),
                full(w2), full(b2),
            ],
            out_specs=pl.BlockSpec((Nb, Ho, Wo, Cout), lambda n: (n, 0, 0, 0)),
            scratch_shapes=[pltpu.VMEM((Nb, Hp, Wp, Chid), jnp.float32)],
        ),
        compiler_params=pltpu.CompilerParams(
            dimension_semantics=("parallel",),
            vmem_limit_bytes=vmem_limit),
    )(x_nhwc, w1, b1, wdw, bdw, w2, b2)

    if data_format == "NCHW":
        return jnp.transpose(out, (0, 3, 1, 2))
    return out


# ---------------------------------------------------------------------------
# Deterministic parameter construction (shapes follow the PyTorch __init__)
# ---------------------------------------------------------------------------
def make_params(key, in_planes, out_planes, expand_ratio):
    hidden = int(in_planes * expand_ratio) if expand_ratio != 1 else in_planes
    ks = jax.random.split(key, 15)
    eps = 1e-5

    def bn_fold(kg, kb, km, kv, c):
        gamma = jax.random.uniform(kg, (c,), jnp.float32, 0.5, 1.5)
        beta = 0.1 * jax.random.normal(kb, (c,), jnp.float32)
        mean = 0.1 * jax.random.normal(km, (c,), jnp.float32)
        var = jax.random.uniform(kv, (c,), jnp.float32, 0.5, 1.5)
        scale = gamma / jnp.sqrt(var + eps)
        bias = beta - mean * scale
        return scale.reshape(1, c), bias.reshape(1, c)

    # PyTorch conv weight layouts: (Cout, Cin, kH, kW); depthwise (C, 1, 3, 3)
    w1_oihw = 0.1 * jax.random.normal(ks[0], (hidden, in_planes, 1, 1), jnp.float32)
    wdw_oihw = 0.1 * jax.random.normal(ks[1], (hidden, 1, 3, 3), jnp.float32)
    w2_oihw = 0.1 * jax.random.normal(ks[2], (out_planes, hidden, 1, 1), jnp.float32)

    s1, b1 = bn_fold(ks[3], ks[4], ks[5], ks[6], hidden)
    sdw, bdw = bn_fold(ks[7], ks[8], ks[9], ks[10], hidden)
    s2, b2 = bn_fold(ks[11], ks[12], ks[13], ks[14], out_planes)

    params = dict(
        # kernel-friendly layouts
        w1=jnp.transpose(w1_oihw[:, :, 0, 0], (1, 0)),       # (Cin, Chid)
        wdw=jnp.transpose(wdw_oihw[:, 0, :, :], (1, 2, 0)),  # (3, 3, Chid)
        w2=jnp.transpose(w2_oihw[:, :, 0, 0], (1, 0)),       # (Chid, Cout)
        s1=s1, b1=b1, sdw=sdw, bdw=bdw, s2=s2, b2=b2,
        # original layouts kept for the pure-JAX reference
        w1_oihw=w1_oihw, wdw_oihw=wdw_oihw, w2_oihw=w2_oihw,
    )
    return params, hidden


def ref_inverted_residual(x, p, *, stride, expand_ratio, in_planes, out_planes):
    """Pure-JAX NCHW reference (matches PyTorch semantics) for validation."""
    dn = ("NCHW", "OIHW", "NCHW")
    use_shortcut = (stride == 1) and (in_planes == out_planes)
    identity = x

    def bn(x, scale, bias):
        c = scale.shape[-1]
        return x * scale.reshape(1, c, 1, 1) + bias.reshape(1, c, 1, 1)

    if expand_ratio != 1:
        x = lax.conv_general_dilated(x, p["w1_oihw"], (1, 1), [(0, 0), (0, 0)],
                                     dimension_numbers=dn)
        x = jnp.clip(bn(x, p["s1"], p["b1"]), 0.0, 6.0)

    chid = p["wdw_oihw"].shape[0]
    x = lax.conv_general_dilated(x, p["wdw_oihw"], (stride, stride),
                                 [(1, 1), (1, 1)], dimension_numbers=dn,
                                 feature_group_count=chid)
    x = jnp.clip(bn(x, p["sdw"], p["bdw"]), 0.0, 6.0)

    x = lax.conv_general_dilated(x, p["w2_oihw"], (1, 1), [(0, 0), (0, 0)],
                                 dimension_numbers=dn)
    x = bn(x, p["s2"], p["b2"])
    if use_shortcut:
        x = x + identity
    return x


if __name__ == "__main__":
    # Small MobileNetV2-consistent configurations:
    #   (N, in_planes, out_planes, H, W, stride, expand_ratio)
    configs = [
        (2, 8, 8, 16, 16, 1, 4),     # expand + residual shortcut (stride 1)
        (2, 8, 16, 16, 16, 2, 6),    # strided depthwise, no shortcut
        (2, 16, 16, 16, 16, 1, 1),   # expand_ratio == 1 (no expand conv) + shortcut
    ]

    key = jax.random.PRNGKey(0)
    for idx, (N, cin, cout, H, W, stride, er) in enumerate(configs):
        kx, kp = jax.random.split(jax.random.fold_in(key, idx))
        x = jax.random.normal(kx, (N, cin, H, W), jnp.float32)
        params, hidden = make_params(kp, cin, cout, er)

        y_ref = ref_inverted_residual(x, params, stride=stride, expand_ratio=er,
                                      in_planes=cin, out_planes=cout)

        # Default path: bf16 MXU operands, f32 accumulation.
        run = jax.jit(functools.partial(inverted_residual_pallas,
                                        stride=stride, expand_ratio=er))
        y = jax.block_until_ready(run(x, params))
        assert y.shape == y_ref.shape, (y.shape, y_ref.shape)
        max_err = float(jnp.max(jnp.abs(y - y_ref)))
        assert jnp.allclose(y, y_ref, atol=2e-2, rtol=2e-2), (idx, max_err)

        # Parity switch: f32 MXU operands (tight tolerance vs the reference).
        run32 = jax.jit(functools.partial(inverted_residual_pallas,
                                          stride=stride, expand_ratio=er,
                                          mxu_dtype=jnp.float32))
        y32 = jax.block_until_ready(run32(x, params))
        max_err32 = float(jnp.max(jnp.abs(y32 - y_ref)))
        assert jnp.allclose(y32, y_ref, atol=1e-3, rtol=1e-4), (idx, max_err32)

    print("KERNEL_OK")
</pallas_src>

<mosaic_0001>
module attributes {stable_mosaic.version = 11 : i64} {
  func.func @kernel(%arg0: i32, %arg1: memref<2x16x16x8xf32, #tpu.memory_space<vmem>>, %arg2: memref<8x32xbf16, #tpu.memory_space<vmem>>, %arg3: memref<1x32xf32, #tpu.memory_space<vmem>>, %arg4: memref<3x3x32xf32, #tpu.memory_space<vmem>>, %arg5: memref<1x32xf32, #tpu.memory_space<vmem>>, %arg6: memref<32x8xbf16, #tpu.memory_space<vmem>>, %arg7: memref<1x8xf32, #tpu.memory_space<vmem>>, %arg8: memref<2x16x16x8xf32, #tpu.memory_space<vmem>>, %arg9: memref<2x18x18x32xf32, #tpu.memory_space<vmem>>) attributes {dimension_semantics = [#tpu.dimension_semantics<parallel>], iteration_bounds = array<i64: 1>, scalar_prefetch = 0 : i64, scratch_operands = 1 : i64, tpu.core_type = #tpu.core_type<tc>, window_params = [{transform_indices = @transform_0, window_bounds = array<i64: 2, 16, 16, 8>}, {pipeline_mode = #tpu.pipeline_mode<synchronous>, transform_indices = @transform_1, window_bounds = array<i64: 8, 32>}, {pipeline_mode = #tpu.pipeline_mode<synchronous>, transform_indices = @transform_2, window_bounds = array<i64: 1, 32>}, {pipeline_mode = #tpu.pipeline_mode<synchronous>, transform_indices = @transform_3, window_bounds = array<i64: 3, 3, 32>}, {pipeline_mode = #tpu.pipeline_mode<synchronous>, transform_indices = @transform_4, window_bounds = array<i64: 1, 32>}, {pipeline_mode = #tpu.pipeline_mode<synchronous>, transform_indices = @transform_5, window_bounds = array<i64: 32, 8>}, {pipeline_mode = #tpu.pipeline_mode<synchronous>, transform_indices = @transform_6, window_bounds = array<i64: 1, 8>}, {transform_indices = @transform_7, window_bounds = array<i64: 2, 16, 16, 8>}]} {
    %c0 = arith.constant 0 : index
    %c0_0 = arith.constant 0 : index
    %c0_1 = arith.constant 0 : index
    %c0_2 = arith.constant 0 : index
    %0 = vector.load %arg1[%c0, %c0_0, %c0_1, %c0_2] : memref<2x16x16x8xf32, #tpu.memory_space<vmem>>, vector<2x16x16x8xf32>
    %1 = vector.shape_cast %0 : vector<2x16x16x8xf32> to vector<512x8xf32>
    %2 = arith.truncf %1 : vector<512x8xf32> to vector<512x8xbf16>
    %c0_3 = arith.constant 0 : index
    %c0_4 = arith.constant 0 : index
    %3 = vector.load %arg2[%c0_3, %c0_4] : memref<8x32xbf16, #tpu.memory_space<vmem>>, vector<8x32xbf16>
    %cst = arith.constant dense<0.000000e+00> : vector<512x32xf32>
    %4 = tpu.matmul %2, %3, %cst {dimension_numbers = #tpu.dot_dimension_numbers<[1], [0], [0], [1], [0, 0, 1, 1], [], []>} : vector<512x8xbf16>, vector<8x32xbf16>, vector<512x32xf32> -> vector<512x32xf32>
    %c0_5 = arith.constant 0 : index
    %c0_6 = arith.constant 0 : index
    %5 = vector.load %arg3[%c0_5, %c0_6] : memref<1x32xf32, #tpu.memory_space<vmem>>, vector<1x32xf32>
    %6 = vector.broadcast %5 : vector<1x32xf32> to vector<512x32xf32>
    %7 = arith.addf %4, %6 : vector<512x32xf32>
    %cst_7 = arith.constant 0.000000e+00 : f32
    %cst_8 = arith.constant 6.000000e+00 : f32
    %8 = vector.broadcast %cst_7 : f32 to vector<512x32xf32>
    %9 = arith.maximumf %8, %7 : vector<512x32xf32>
    %10 = vector.broadcast %cst_8 : f32 to vector<512x32xf32>
    %11 = arith.minimumf %10, %9 : vector<512x32xf32>
    %12 = vector.shape_cast %11 : vector<512x32xf32> to vector<2x16x16x32xf32>
    %cst_9 = arith.constant 0.000000e+00 : f32
    %13 = vector.broadcast %cst_9 : f32 to vector<2x1x18x32xf32>
    %c0_10 = arith.constant 0 : index
    %c0_11 = arith.constant 0 : index
    %c0_12 = arith.constant 0 : index
    %c0_13 = arith.constant 0 : index
    %14 = vector.load %arg9[%c0_10, %c0_11, %c0_12, %c0_13] : memref<2x18x18x32xf32, #tpu.memory_space<vmem>>, vector<2x1x18x32xf32>
    tpu.vector_store %arg9[%c0_10, %c0_11, %c0_12, %c0_13], %13 {strides = array<i32>} : memref<2x18x18x32xf32, #tpu.memory_space<vmem>>, vector<2x1x18x32xf32>,
    %cst_14 = arith.constant 0.000000e+00 : f32
    %15 = vector.broadcast %cst_14 : f32 to vector<2x1x18x32xf32>
    %c0_15 = arith.constant 0 : index
    %c17 = arith.constant 17 : index
    %c0_16 = arith.constant 0 : index
    %c0_17 = arith.constant 0 : index
    %16 = vector.load %arg9[%c0_15, %c17, %c0_16, %c0_17] : memref<2x18x18x32xf32, #tpu.memory_space<vmem>>, vector<2x1x18x32xf32>
    tpu.vector_store %arg9[%c0_15, %c17, %c0_16, %c0_17], %15 {strides = array<i32>} : memref<2x18x18x32xf32, #tpu.memory_space<vmem>>, vector<2x1x18x32xf32>,
    %cst_18 = arith.constant 0.000000e+00 : f32
    %17 = vector.broadcast %cst_18 : f32 to vector<2x18x1x32xf32>
    %c0_19 = arith.constant 0 : index
    %c0_20 = arith.constant 0 : index
    %c0_21 = arith.constant 0 : index
    %c0_22 = arith.constant 0 : index
    %18 = vector.load %arg9[%c0_19, %c0_20, %c0_21, %c0_22] : memref<2x18x18x32xf32, #tpu.memory_space<vmem>>, vector<2x18x1x32xf32>
    tpu.vector_store %arg9[%c0_19, %c0_20, %c0_21, %c0_22], %17 {strides = array<i32>} : memref<2x18x18x32xf32, #tpu.memory_space<vmem>>, vector<2x18x1x32xf32>,
    %cst_23 = arith.constant 0.000000e+00 : f32
    %19 = vector.broadcast %cst_23 : f32 to vector<2x18x1x32xf32>
    %c0_24 = arith.constant 0 : index
    %c0_25 = arith.constant 0 : index
    %c17_26 = arith.constant 17 : index
    %c0_27 = arith.constant 0 : index
    %20 = vector.load %arg9[%c0_24, %c0_25, %c17_26, %c0_27] : memref<2x18x18x32xf32, #tpu.memory_space<vmem>>, vector<2x18x1x32xf32>
    tpu.vector_store %arg9[%c0_24, %c0_25, %c17_26, %c0_27], %19 {strides = array<i32>} : memref<2x18x18x32xf32, #tpu.memory_space<vmem>>, vector<2x18x1x32xf32>,
    %c0_28 = arith.constant 0 : index
    %c1 = arith.constant 1 : index
    %c1_29 = arith.constant 1 : index
    %c0_30 = arith.constant 0 : index
    %21 = vector.load %arg9[%c0_28, %c1, %c1_29, %c0_30] : memref<2x18x18x32xf32, #tpu.memory_space<vmem>>, vector<2x16x16x32xf32>
    tpu.vector_store %arg9[%c0_28, %c1, %c1_29, %c0_30], %12 {strides = array<i32>} : memref<2x18x18x32xf32, #tpu.memory_space<vmem>>, vector<2x16x16x32xf32>,
    %c0_31 = arith.constant 0 : index
    %c0_32 = arith.constant 0 : index
    %c0_33 = arith.constant 0 : index
    %22 = vector.load %arg4[%c0_31, %c0_32, %c0_33] : memref<3x3x32xf32, #tpu.memory_space<vmem>>, vector<3x3x32xf32>
    %c0_34 = arith.constant 0 : index
    %c0_35 = arith.constant 0 : index
    %c0_36 = arith.constant 0 : index
    %c0_37 = arith.constant 0 : index
    %23 = vector.load %arg9[%c0_34, %c0_35, %c0_36, %c0_37] : memref<2x18x18x32xf32, #tpu.memory_space<vmem>>, vector<2x16x16x32xf32>
    %24 = vector.extract_strided_slice %22 {offsets = [0, 0, 0], sizes = [1, 1, 32], strides = [1, 1, 1]} : vector<3x3x32xf32> to vector<1x1x32xf32>
    %25 = vector.shape_cast %24 : vector<1x1x32xf32> to vector<32xf32>
    %26 = vector.shape_cast %25 : vector<32xf32> to vector<1x1x1x32xf32>
    %27 = vector.broadcast %26 : vector<1x1x1x32xf32> to vector<2x16x16x32xf32>
    %28 = arith.mulf %23, %27 : vector<2x16x16x32xf32>
    %c0_38 = arith.constant 0 : index
    %c0_39 = arith.constant 0 : index
    %c1_40 = arith.constant 1 : index
    %c0_41 = arith.constant 0 : index
    %29 = vector.load %arg9[%c0_38, %c0_39, %c1_40, %c0_41] : memref<2x18x18x32xf32, #tpu.memory_space<vmem>>, vector<2x16x16x32xf32>
    %30 = vector.extract_strided_slice %22 {offsets = [0, 1, 0], sizes = [1, 1, 32], strides = [1, 1, 1]} : vector<3x3x32xf32> to vector<1x1x32xf32>
    %31 = vector.shape_cast %30 : vector<1x1x32xf32> to vector<32xf32>
    %32 = vector.shape_cast %31 : vector<32xf32> to vector<1x1x1x32xf32>
    %33 = vector.broadcast %32 : vector<1x1x1x32xf32> to vector<2x16x16x32xf32>
    %34 = arith.mulf %29, %33 : vector<2x16x16x32xf32>
    %35 = arith.addf %28, %34 : vector<2x16x16x32xf32>
    %c0_42 = arith.constant 0 : index
    %c0_43 = arith.constant 0 : index
    %c2 = arith.constant 2 : index
    %c0_44 = arith.constant 0 : index
    %36 = vector.load %arg9[%c0_42, %c0_43, %c2, %c0_44] : memref<2x18x18x32xf32, #tpu.memory_space<vmem>>, vector<2x16x16x32xf32>
    %37 = vector.extract_strided_slice %22 {offsets = [0, 2, 0], sizes = [1, 1, 32], strides = [1, 1, 1]} : vector<3x3x32xf32> to vector<1x1x32xf32>
    %38 = vector.shape_cast %37 : vector<1x1x32xf32> to vector<32xf32>
    %39 = vector.shape_cast %38 : vector<32xf32> to vector<1x1x1x32xf32>
    %40 = vector.broadcast %39 : vector<1x1x1x32xf32> to vector<2x16x16x32xf32>
    %41 = arith.mulf %36, %40 : vector<2x16x16x32xf32>
    %42 = arith.addf %35, %41 : vector<2x16x16x32xf32>
    %c0_45 = arith.constant 0 : index
    %c1_46 = arith.constant 1 : index
    %c0_47 = arith.constant 0 : index
    %c0_48 = arith.constant 0 : index
    %43 = vector.load %arg9[%c0_45, %c1_46, %c0_47, %c0_48] : memref<2x18x18x32xf32, #tpu.memory_space<vmem>>, vector<2x16x16x32xf32>
    %44 = vector.extract_strided_slice %22 {offsets = [1, 0, 0], sizes = [1, 1, 32], strides = [1, 1, 1]} : vector<3x3x32xf32> to vector<1x1x32xf32>
    %45 = vector.shape_cast %44 : vector<1x1x32xf32> to vector<32xf32>
    %46 = vector.shape_cast %45 : vector<32xf32> to vector<1x1x1x32xf32>
    %47 = vector.broadcast %46 : vector<1x1x1x32xf32> to vector<2x16x16x32xf32>
    %48 = arith.mulf %43, %47 : vector<2x16x16x32xf32>
    %49 = arith.addf %42, %48 : vector<2x16x16x32xf32>
    %c0_49 = arith.constant 0 : index
    %c1_50 = arith.constant 1 : index
    %c1_51 = arith.constant 1 : index
    %c0_52 = arith.constant 0 : index
    %50 = vector.load %arg9[%c0_49, %c1_50, %c1_51, %c0_52] : memref<2x18x18x32xf32, #tpu.memory_space<vmem>>, vector<2x16x16x32xf32>
    %51 = vector.extract_strided_slice %22 {offsets = [1, 1, 0], sizes = [1, 1, 32], strides = [1, 1, 1]} : vector<3x3x32xf32> to vector<1x1x32xf32>
    %52 = vector.shape_cast %51 : vector<1x1x32xf32> to vector<32xf32>
    %53 = vector.shape_cast %52 : vector<32xf32> to vector<1x1x1x32xf32>
    %54 = vector.broadcast %53 : vector<1x1x1x32xf32> to vector<2x16x16x32xf32>
    %55 = arith.mulf %50, %54 : vector<2x16x16x32xf32>
    %56 = arith.addf %49, %55 : vector<2x16x16x32xf32>
    %c0_53 = arith.constant 0 : index
    %c1_54 = arith.constant 1 : index
    %c2_55 = arith.constant 2 : index
    %c0_56 = arith.constant 0 : index
    %57 = vector.load %arg9[%c0_53, %c1_54, %c2_55, %c0_56] : memref<2x18x18x32xf32, #tpu.memory_space<vmem>>, vector<2x16x16x32xf32>
    %58 = vector.extract_strided_slice %22 {offsets = [1, 2, 0], sizes = [1, 1, 32], strides = [1, 1, 1]} : vector<3x3x32xf32> to vector<1x1x32xf32>
    %59 = vector.shape_cast %58 : vector<1x1x32xf32> to vector<32xf32>
    %60 = vector.shape_cast %59 : vector<32xf32> to vector<1x1x1x32xf32>
    %61 = vector.broadcast %60 : vector<1x1x1x32xf32> to vector<2x16x16x32xf32>
    %62 = arith.mulf %57, %61 : vector<2x16x16x32xf32>
    %63 = arith.addf %56, %62 : vector<2x16x16x32xf32>
    %c0_57 = arith.constant 0 : index
    %c2_58 = arith.constant 2 : index
    %c0_59 = arith.constant 0 : index
    %c0_60 = arith.constant 0 : index
    %64 = vector.load %arg9[%c0_57, %c2_58, %c0_59, %c0_60] : memref<2x18x18x32xf32, #tpu.memory_space<vmem>>, vector<2x16x16x32xf32>
    %65 = vector.extract_strided_slice %22 {offsets = [2, 0, 0], sizes = [1, 1, 32], strides = [1, 1, 1]} : vector<3x3x32xf32> to vector<1x1x32xf32>
    %66 = vector.shape_cast %65 : vector<1x1x32xf32> to vector<32xf32>
    %67 = vector.shape_cast %66 : vector<32xf32> to vector<1x1x1x32xf32>
    %68 = vector.broadcast %67 : vector<1x1x1x32xf32> to vector<2x16x16x32xf32>
    %69 = arith.mulf %64, %68 : vector<2x16x16x32xf32>
    %70 = arith.addf %63, %69 : vector<2x16x16x32xf32>
    %c0_61 = arith.constant 0 : index
    %c2_62 = arith.constant 2 : index
    %c1_63 = arith.constant 1 : index
    %c0_64 = arith.constant 0 : index
    %71 = vector.load %arg9[%c0_61, %c2_62, %c1_63, %c0_64] : memref<2x18x18x32xf32, #tpu.memory_space<vmem>>, vector<2x16x16x32xf32>
    %72 = vector.extract_strided_slice %22 {offsets = [2, 1, 0], sizes = [1, 1, 32], strides = [1, 1, 1]} : vector<3x3x32xf32> to vector<1x1x32xf32>
    %73 = vector.shape_cast %72 : vector<1x1x32xf32> to vector<32xf32>
    %74 = vector.shape_cast %73 : vector<32xf32> to vector<1x1x1x32xf32>
    %75 = vector.broadcast %74 : vector<1x1x1x32xf32> to vector<2x16x16x32xf32>
    %76 = arith.mulf %71, %75 : vector<2x16x16x32xf32>
    %77 = arith.addf %70, %76 : vector<2x16x16x32xf32>
    %c0_65 = arith.constant 0 : index
    %c2_66 = arith.constant 2 : index
    %c2_67 = arith.constant 2 : index
    %c0_68 = arith.constant 0 : index
    %78 = vector.load %arg9[%c0_65, %c2_66, %c2_67, %c0_68] : memref<2x18x18x32xf32, #tpu.memory_space<vmem>>, vector<2x16x16x32xf32>
    %79 = vector.extract_strided_slice %22 {offsets = [2, 2, 0], sizes = [1, 1, 32], strides = [1, 1, 1]} : vector<3x3x32xf32> to vector<1x1x32xf32>
    %80 = vector.shape_cast %79 : vector<1x1x32xf32> to vector<32xf32>
    %81 = vector.shape_cast %80 : vector<32xf32> to vector<1x1x1x32xf32>
    %82 = vector.broadcast %81 : vector<1x1x1x32xf32> to vector<2x16x16x32xf32>
    %83 = arith.mulf %78, %82 : vector<2x16x16x32xf32>
    %84 = arith.addf %77, %83 : vector<2x16x16x32xf32>
    %c0_69 = arith.constant 0 : index
    %c0_70 = arith.constant 0 : index
    %85 = vector.load %arg5[%c0_69, %c0_70] : memref<1x32xf32, #tpu.memory_space<vmem>>, vector<1x32xf32>
    %86 = vector.shape_cast %85 : vector<1x32xf32> to vector<1x1x1x32xf32>
    %87 = vector.broadcast %86 : vector<1x1x1x32xf32> to vector<2x16x16x32xf32>
    %88 = arith.addf %84, %87 : vector<2x16x16x32xf32>
    %cst_71 = arith.constant 0.000000e+00 : f32
    %cst_72 = arith.constant 6.000000e+00 : f32
    %89 = vector.broadcast %cst_71 : f32 to vector<2x16x16x32xf32>
    %90 = arith.maximumf %89, %88 : vector<2x16x16x32xf32>
    %91 = vector.broadcast %cst_72 : f32 to vector<2x16x16x32xf32>
    %92 = arith.minimumf %91, %90 : vector<2x16x16x32xf32>
    %93 = vector.shape_cast %92 : vector<2x16x16x32xf32> to vector<512x32xf32>
    %94 = arith.truncf %93 : vector<512x32xf32> to vector<512x32xbf16>
    %c0_73 = arith.constant 0 : index
    %c0_74 = arith.constant 0 : index
    %95 = vector.load %arg6[%c0_73, %c0_74] : memref<32x8xbf16, #tpu.memory_space<vmem>>, vector<32x8xbf16>
    %cst_75 = arith.constant dense<0.000000e+00> : vector<512x8xf32>
    %96 = tpu.matmul %94, %95, %cst_75 {dimension_numbers = #tpu.dot_dimension_numbers<[1], [0], [0], [1], [0, 0, 1, 1], [], []>} : vector<512x32xbf16>, vector<32x8xbf16>, vector<512x8xf32> -> vector<512x8xf32>
    %c0_76 = arith.constant 0 : index
    %c0_77 = arith.constant 0 : index
    %97 = vector.load %arg7[%c0_76, %c0_77] : memref<1x8xf32, #tpu.memory_space<vmem>>, vector<1x8xf32>
    %98 = vector.broadcast %97 : vector<1x8xf32> to vector<512x8xf32>
    %99 = arith.addf %96, %98 : vector<512x8xf32>
    %100 = vector.shape_cast %0 : vector<2x16x16x8xf32> to vector<512x8xf32>
    %101 = arith.addf %99, %100 : vector<512x8xf32>
    %102 = vector.shape_cast %101 : vector<512x8xf32> to vector<2x16x16x8xf32>
    %c0_78 = arith.constant 0 : index
    %c0_79 = arith.constant 0 : index
    %c0_80 = arith.constant 0 : index
    %c0_81 = arith.constant 0 : index
    %103 = vector.load %arg8[%c0_78, %c0_79, %c0_80, %c0_81] : memref<2x16x16x8xf32, #tpu.memory_space<vmem>>, vector<2x16x16x8xf32>
    tpu.vector_store %arg8[%c0_78, %c0_79, %c0_80, %c0_81], %102 {strides = array<i32>} : memref<2x16x16x8xf32, #tpu.memory_space<vmem>>, vector<2x16x16x8xf32>,
    return
  }
  func.func @transform_0(%arg0: i32) -> (i32, i32, i32, i32) {
    %c0_i32 = arith.constant 0 : i32
    %c0_i32_0 = arith.constant 0 : i32
    %c0_i32_1 = arith.constant 0 : i32
    %c0_i32_2 = arith.constant 0 : i32
    return %arg0, %c0_i32, %c0_i32_0, %c0_i32_1 : i32, i32, i32, i32
  }
  func.func @transform_1(%arg0: i32) -> (i32, i32) {
    %c0_i32 = arith.constant 0 : i32
    %c0_i32_0 = arith.constant 0 : i32
    %c0_i32_1 = arith.constant 0 : i32
    return %c0_i32, %c0_i32_0 : i32, i32
  }
  func.func @transform_2(%arg0: i32) -> (i32, i32) {
    %c0_i32 = arith.constant 0 : i32
    %c0_i32_0 = arith.constant 0 : i32
    %c0_i32_1 = arith.constant 0 : i32
    return %c0_i32, %c0_i32_0 : i32, i32
  }
  func.func @transform_3(%arg0: i32) -> (i32, i32, i32) {
    %c0_i32 = arith.constant 0 : i32
    %c0_i32_0 = arith.constant 0 : i32
    %c0_i32_1 = arith.constant 0 : i32
    %c0_i32_2 = arith.constant 0 : i32
    return %c0_i32, %c0_i32_0, %c0_i32_1 : i32, i32, i32
  }
  func.func @transform_4(%arg0: i32) -> (i32, i32) {
    %c0_i32 = arith.constant 0 : i32
    %c0_i32_0 = arith.constant 0 : i32
    %c0_i32_1 = arith.constant 0 : i32
    return %c0_i32, %c0_i32_0 : i32, i32
  }
  func.func @transform_5(%arg0: i32) -> (i32, i32) {
    %c0_i32 = arith.constant 0 : i32
    %c0_i32_0 = arith.constant 0 : i32
    %c0_i32_1 = arith.constant 0 : i32
    return %c0_i32, %c0_i32_0 : i32, i32
  }
  func.func @transform_6(%arg0: i32) -> (i32, i32) {
    %c0_i32 = arith.constant 0 : i32
    %c0_i32_0 = arith.constant 0 : i32
    %c0_i32_1 = arith.constant 0 : i32
    return %c0_i32, %c0_i32_0 : i32, i32
  }
  func.func @transform_7(%arg0: i32) -> (i32, i32, i32, i32) {
    %c0_i32 = arith.constant 0 : i32
    %c0_i32_0 = arith.constant 0 : i32
    %c0_i32_1 = arith.constant 0 : i32
    %c0_i32_2 = arith.constant 0 : i32
    return %arg0, %c0_i32, %c0_i32_0, %c0_i32_1 : i32, i32, i32, i32
  }
}

</mosaic_0001>

<llo_original>
// kernel: inverted_residual_pallas.1
$region0: #{inverted_residual_pallas.1}
  #allocation0 [shape = 'u32[]', space=smem, size = 0x4, offset = 0x4, fixed_abs, tag = 'smem constant byte address 0x4 - core index']
  #allocation1 [shape = 'u32[144,128]{1,0:T(1,128)}', space=vmem, size = 0x12000, scoped, tag = 'internal scratch']
  #allocation2 [shape = 'f32[2,18,18,32]{3,2,1,0:T(8,128)}', space=vmem, size = 0x6c000, scoped, tag = 'scratch operand']
  %s0 = inlined_call_operand.vmem [shape: f32[2,16,16,8], index: 0, kind: input, shape index: {}]
  %s1 = inlined_call_operand.vmem [shape: bf16[8,32], index: 1, kind: input, shape index: {}]
  %s2 = inlined_call_operand.vmem [shape: f32[1,32], index: 2, kind: input, shape index: {}]
  %s3 = inlined_call_operand.vmem [shape: f32[3,3,32], index: 3, kind: input, shape index: {}]
  %s4 = inlined_call_operand.vmem [shape: f32[1,32], index: 4, kind: input, shape index: {}]
  %s5 = inlined_call_operand.vmem [shape: bf16[32,8], index: 5, kind: input, shape index: {}]
  %s6 = inlined_call_operand.vmem [shape: f32[1,8], index: 6, kind: input, shape index: {}]
  %s7 = inlined_call_operand.vmem [shape: f32[2,16,16,8], index: 7, kind: output, shape index: {}]
  %s8 = sld [smem:[#allocation0]]
  $region38: #{inverted_residual_pallas.1} parent=0
    _
  %s10 = ssub.s32 1, %s8
  %s11 = scalar_select 0, %s10, %s8
  // Predicated region
  $region2: #{inverted_residual_pallas.1} parent=0 // pred_check
    _
  $region3: #{inverted_residual_pallas.1} parent=0 // pred_check_branch
    %13 = sbr.rel (0) target = $region5
  $region4: #{inverted_residual_pallas.1} parent=0 // pred_region
    _
  $region5: #{inverted_residual_pallas.1} parent=0 // pred_fallthru
    _
  // Predicated region
  $region6: #{inverted_residual_pallas.1} parent=0 // pred_check
    _
  $region7: #{inverted_residual_pallas.1} parent=0 // pred_check_branch
    %15 = sbr.rel (0) target = $region9
  $region8: #{inverted_residual_pallas.1} parent=0 // pred_region
    _
  $region9: #{inverted_residual_pallas.1} parent=0 // pred_fallthru
    _
  // Predicated region
  $region10: #{inverted_residual_pallas.1} parent=0 // pred_check
    _
  $region11: #{inverted_residual_pallas.1} parent=0 // pred_check_branch
    %17 = sbr.rel (0) target = $region13
  $region12: #{inverted_residual_pallas.1} parent=0 // pred_region
    _
  $region13: #{inverted_residual_pallas.1} parent=0 // pred_fallthru
    _
  // Predicated region
  $region14: #{inverted_residual_pallas.1} parent=0 // pred_check
    _
  $region15: #{inverted_residual_pallas.1} parent=0 // pred_check_branch
    %19 = sbr.rel (0) target = $region17
  $region16: #{inverted_residual_pallas.1} parent=0 // pred_region
    _
  $region17: #{inverted_residual_pallas.1} parent=0 // pred_fallthru
    _
  // Predicated region
  $region18: #{inverted_residual_pallas.1} parent=0 // pred_check
    _
  $region19: #{inverted_residual_pallas.1} parent=0 // pred_check_branch
    %21 = sbr.rel (0) target = $region21
  $region20: #{inverted_residual_pallas.1} parent=0 // pred_region
    _
  $region21: #{inverted_residual_pallas.1} parent=0 // pred_fallthru
    _
  // Predicated region
  $region22: #{inverted_residual_pallas.1} parent=0 // pred_check
    _
  $region23: #{inverted_residual_pallas.1} parent=0 // pred_check_branch
    %23 = sbr.rel (0) target = $region25
  $region24: #{inverted_residual_pallas.1} parent=0 // pred_region
    _
  $region25: #{inverted_residual_pallas.1} parent=0 // pred_fallthru
    _
  // Predicated region
  $region26: #{inverted_residual_pallas.1} parent=0 // pred_check
    _
  $region27: #{inverted_residual_pallas.1} parent=0 // pred_check_branch
    %25 = sbr.rel (0) target = $region29
  $region28: #{inverted_residual_pallas.1} parent=0 // pred_region
    _
  $region29: #{inverted_residual_pallas.1} parent=0 // pred_fallthru
    _
  %v27 = vld [vmem:[%s0] sm:$0xff]
  %v28 = vld [vmem:[%s0 + $0x8] sm:$0xff]
  %v29 = vld [vmem:[%s0 + $0x10] sm:$0xff]
  %v30 = vld [vmem:[%s0 + $0x18] sm:$0xff]
  %v31 = vld [vmem:[%s0 + $0x20] sm:$0xff]
  %v32 = vld [vmem:[%s0 + $0x28] sm:$0xff]
  %v33 = vld [vmem:[%s0 + $0x30] sm:$0xff]
  %v34 = vld [vmem:[%s0 + $0x38] sm:$0xff]
  %v35 = vld [vmem:[%s0 + $0x40] sm:$0xff]
  %v36 = vld [vmem:[%s0 + $0x48] sm:$0xff]
  %v37 = vld [vmem:[%s0 + $0x50] sm:$0xff]
  %v38 = vld [vmem:[%s0 + $0x58] sm:$0xff]
  %v39 = vld [vmem:[%s0 + $0x60] sm:$0xff]
  %v40 = vld [vmem:[%s0 + $0x68] sm:$0xff]
  %v41 = vld [vmem:[%s0 + $0x70] sm:$0xff]
  %v42 = vld [vmem:[%s0 + $0x78] sm:$0xff]
  %v43 = vld [vmem:[%s0 + $0x80] sm:$0xff]
  %v44 = vld [vmem:[%s0 + $0x88] sm:$0xff]
  %v45 = vld [vmem:[%s0 + $0x90] sm:$0xff]
  %v46 = vld [vmem:[%s0 + $0x98] sm:$0xff]
  %v47 = vld [vmem:[%s0 + $0xa0] sm:$0xff]
  %v48 = vld [vmem:[%s0 + $0xa8] sm:$0xff]
  %v49 = vld [vmem:[%s0 + $0xb0] sm:$0xff]
  %v50 = vld [vmem:[%s0 + $0xb8] sm:$0xff]
  %v51 = vld [vmem:[%s0 + $0xc0] sm:$0xff]
  %v52 = vld [vmem:[%s0 + $0xc8] sm:$0xff]
  %v53 = vld [vmem:[%s0 + $0xd0] sm:$0xff]
  %v54 = vld [vmem:[%s0 + $0xd8] sm:$0xff]
  %v55 = vld [vmem:[%s0 + $0xe0] sm:$0xff]
  %v56 = vld [vmem:[%s0 + $0xe8] sm:$0xff]
  %v57 = vld [vmem:[%s0 + $0xf0] sm:$0xff]
  %v58 = vld [vmem:[%s0 + $0xf8] sm:$0xff]
  %v59 = vld [vmem:[%s0 + $0x100] sm:$0xff]
  %v60 = vld [vmem:[%s0 + $0x108] sm:$0xff]
  %v61 = vld [vmem:[%s0 + $0x110] sm:$0xff]
  %v62 = vld [vmem:[%s0 + $0x118] sm:$0xff]
  %v63 = vld [vmem:[%s0 + $0x120] sm:$0xff]
  %v64 = vld [vmem:[%s0 + $0x128] sm:$0xff]
  %v65 = vld [vmem:[%s0 + $0x130] sm:$0xff]
  %v66 = vld [vmem:[%s0 + $0x138] sm:$0xff]
  %v67 = vld [vmem:[%s0 + $0x140] sm:$0xff]
  %v68 = vld [vmem:[%s0 + $0x148] sm:$0xff]
  %v69 = vld [vmem:[%s0 + $0x150] sm:$0xff]
  %v70 = vld [vmem:[%s0 + $0x158] sm:$0xff]
  %v71 = vld [vmem:[%s0 + $0x160] sm:$0xff]
  %v72 = vld [vmem:[%s0 + $0x168] sm:$0xff]
  %v73 = vld [vmem:[%s0 + $0x170] sm:$0xff]
  %v74 = vld [vmem:[%s0 + $0x178] sm:$0xff]
  %v75 = vld [vmem:[%s0 + $0x180] sm:$0xff]
  %v76 = vld [vmem:[%s0 + $0x188] sm:$0xff]
  %v77 = vld [vmem:[%s0 + $0x190] sm:$0xff]
  %v78 = vld [vmem:[%s0 + $0x198] sm:$0xff]
  %v79 = vld [vmem:[%s0 + $0x1a0] sm:$0xff]
  %v80 = vld [vmem:[%s0 + $0x1a8] sm:$0xff]
  %v81 = vld [vmem:[%s0 + $0x1b0] sm:$0xff]
  %v82 = vld [vmem:[%s0 + $0x1b8] sm:$0xff]
  %v83 = vld [vmem:[%s0 + $0x1c0] sm:$0xff]
  %v84 = vld [vmem:[%s0 + $0x1c8] sm:$0xff]
  %v85 = vld [vmem:[%s0 + $0x1d0] sm:$0xff]
  %v86 = vld [vmem:[%s0 + $0x1d8] sm:$0xff]
  %v87 = vld [vmem:[%s0 + $0x1e0] sm:$0xff]
  %v88 = vld [vmem:[%s0 + $0x1e8] sm:$0xff]
  %v89 = vld [vmem:[%s0 + $0x1f0] sm:$0xff]
  %v90 = vld [vmem:[%s0 + $0x1f8] sm:$0xff]
  %v91 = vpack.c.bf16 %v28, %v27
  %v92 = vpack.c.bf16 %v30, %v29
  %v93 = vpack.c.bf16 %v32, %v31
  %v94 = vpack.c.bf16 %v34, %v33
  %v95 = vpack.c.bf16 %v36, %v35
  %v96 = vpack.c.bf16 %v38, %v37
  %v97 = vpack.c.bf16 %v40, %v39
  %v98 = vpack.c.bf16 %v42, %v41
  %v99 = vpack.c.bf16 %v44, %v43
  %v100 = vpack.c.bf16 %v46, %v45
  %v101 = vpack.c.bf16 %v48, %v47
  %v102 = vpack.c.bf16 %v50, %v49
  %v103 = vpack.c.bf16 %v52, %v51
  %v104 = vpack.c.bf16 %v54, %v53
  %v105 = vpack.c.bf16 %v56, %v55
  %v106 = vpack.c.bf16 %v58, %v57
  %v107 = vpack.c.bf16 %v60, %v59
  %v108 = vpack.c.bf16 %v62, %v61
  %v109 = vpack.c.bf16 %v64, %v63
  %v110 = vpack.c.bf16 %v66, %v65
  %v111 = vpack.c.bf16 %v68, %v67
  %v112 = vpack.c.bf16 %v70, %v69
  %v113 = vpack.c.bf16 %v72, %v71
  %v114 = vpack.c.bf16 %v74, %v73
  %v115 = vpack.c.bf16 %v76, %v75
  %v116 = vpack.c.bf16 %v78, %v77
  %v117 = vpack.c.bf16 %v80, %v79
  %v118 = vpack.c.bf16 %v82, %v81
  %v119 = vpack.c.bf16 %v84, %v83
  %v120 = vpack.c.bf16 %v86, %v85
  %v121 = vpack.c.bf16 %v88, %v87
  %v122 = vpack.c.bf16 %v90, %v89
  %v123 = vld [vmem:[%s1] sm:$0xf]
  %v124 = vld [vmem:[%s2] sm:$0x1]
  %v126 = vlaneseq
  %v127 = vshrl.u32 %v126, 7
  %v128 = vsub.s32 0, %v127
  %v129 = vrot.slane %v124, %v128
  %vm131 = vcmask 64512
  %v133 = vsel %vm131, %v91, 0
  %v136 = vsel %vm131, %v92, 0
  %v139 = vsel %vm131, %v93, 0
  %v142 = vsel %vm131, %v94, 0
  %v145 = vsel %vm131, %v95, 0
  %v148 = vsel %vm131, %v96, 0
  %v151 = vsel %vm131, %v97, 0
  %v154 = vsel %vm131, %v98, 0
  %v157 = vsel %vm131, %v99, 0
  %v160 = vsel %vm131, %v100, 0
  %v163 = vsel %vm131, %v101, 0
  %v166 = vsel %vm131, %v102, 0
  %v169 = vsel %vm131, %v103, 0
  %v172 = vsel %vm131, %v104, 0
  %v175 = vsel %vm131, %v105, 0
  %v178 = vsel %vm131, %v106, 0
  %v181 = vsel %vm131, %v107, 0
  %v184 = vsel %vm131, %v108, 0
  %v187 = vsel %vm131, %v109, 0
  %v190 = vsel %vm131, %v110, 0
  %v193 = vsel %vm131, %v111, 0
  %v196 = vsel %vm131, %v112, 0
  %v199 = vsel %vm131, %v113, 0
  %v202 = vsel %vm131, %v114, 0
  %v205 = vsel %vm131, %v115, 0
  %v208 = vsel %vm131, %v116, 0
  %v211 = vsel %vm131, %v117, 0
  %v214 = vsel %vm131, %v118, 0
  %v217 = vsel %vm131, %v119, 0
  %v220 = vsel %vm131, %v120, 0
  %v223 = vsel %vm131, %v121, 0
  %v226 = vsel %vm131, %v122, 0
  %vm228 = vcmask 1043456
  %v230 = vsel %vm228, %v123, 0
  %232 = vmatprep.subr.bf16.mxu0 0
  %233 = vmatpush1.bf16.msra.mxu0 %v230
  %234 = vmatprep.subr.bf16.mxu0 0
  %235 = vmatpush1.bf16.msra.mxu0 0
  %236 = vmatprep.subr.bf16.mxu0 0
  %237 = vmatpush1.bf16.msra.mxu0 0
  %238 = vmatprep.subr.bf16.mxu0 0
  %239 = vmatpush1.bf16.msra.mxu0 0
  %240 = vmatprep.subr.bf16.mxu0 0
  %241 = vmatpush1.bf16.msra.mxu0 0
  %242 = vmatprep.subr.bf16.mxu0 0
  %243 = vmatpush1.bf16.msra.mxu0 0
  %244 = vmatprep.subr.bf16.mxu0 0
  %245 = vmatpush1.bf16.msra.mxu0 0
  %246 = vmatprep.subr.bf16.mxu0 0
  %247 = vmatpush1.bf16.msra.mxu0 0
  %248 = vmatprep.subr.bf16.mxu0 0
  %249 = vmatpush1.bf16.msra.mxu0 0
  %250 = vmatprep.subr.bf16.mxu0 0
  %251 = vmatpush1.bf16.msra.mxu0 0
  %252 = vmatprep.subr.bf16.mxu0 0
  %253 = vmatpush1.bf16.msra.mxu0 0
  %254 = vmatprep.subr.bf16.mxu0 0
  %255 = vmatpush1.bf16.msra.mxu0 0
  %256 = vmatprep.subr.bf16.mxu0 0
  %257 = vmatpush1.bf16.msra.mxu0 0
  %258 = vmatprep.subr.bf16.mxu0 0
  %259 = vmatpush1.bf16.msra.mxu0 0
  %260 = vmatprep.subr.bf16.mxu0 0
  %261 = vmatpush1.bf16.msra.mxu0 0
  %262 = vmatprep.subr.bf16.mxu0 0
  %263 = vmatpush1.bf16.msra.mxu0 0
  %264 = vmatprep.mubr.bf16.mxu0 0
  %265 = vmatmul.mubr.bf16.gmra.mrb[0].mxu0 %v133
  %v266 = vpop.f32.mrb[0].mxu0
  %v267 = vadd.f32 %v129, %v266
  %v268 = vpop.f32.mrb[0].mxu0
  %v269 = vpop.f32.mrb[0].mxu0
  %v270 = vadd.f32 %v129, %v269
  %v271 = vpop.f32.mrb[0].mxu0
  %272 = vmatprep.mubr.bf16.mxu0 0
  %273 = vmatmul.mubr.bf16.gmra.mrb[0].mxu0 %v136
  %v274 = vpop.f32.mrb[0].mxu0
  %v275 = vadd.f32 %v129, %v274
  %v276 = vpop.f32.mrb[0].mxu0
  %v277 = vpop.f32.mrb[0].mxu0
  %v278 = vadd.f32 %v129, %v277
  %v279 = vpop.f32.mrb[0].mxu0
  %280 = vmatprep.mubr.bf16.mxu0 0
  %281 = vmatmul.mubr.bf16.gmra.mrb[0].mxu0 %v139
  %v282 = vpop.f32.mrb[0].mxu0
  %v283 = vadd.f32 %v129, %v282
  %v284 = vpop.f32.mrb[0].mxu0
  %v285 = vpop.f32.mrb[0].mxu0
  %v286 = vadd.f32 %v129, %v285
  %v287 = vpop.f32.mrb[0].mxu0
  %288 = vmatprep.mubr.bf16.mxu0 0
  %289 = vmatmul.mubr.bf16.gmra.mrb[0].mxu0 %v142
  %v290 = vpop.f32.mrb[0].mxu0
  %v291 = vadd.f32 %v129, %v290
  %v292 = vpop.f32.mrb[0].mxu0
  %v293 = vpop.f32.mrb[0].mxu0
  %v294 = vadd.f32 %v129, %v293
  %v295 = vpop.f32.mrb[0].mxu0
  %296 = vmatprep.mubr.bf16.mxu0 0
  %297 = vmatmul.mubr.bf16.gmra.mrb[0].mxu0 %v145
  %v298 = vpop.f32.mrb[0].mxu0
  %v299 = vadd.f32 %v129, %v298
  %v300 = vpop.f32.mrb[0].mxu0
  %v301 = vpop.f32.mrb[0].mxu0
  %v302 = vadd.f32 %v129, %v301
  %v303 = vpop.f32.mrb[0].mxu0
  %304 = vmatprep.mubr.bf16.mxu0 0
  %305 = vmatmul.mubr.bf16.gmra.mrb[0].mxu0 %v148
  %v306 = vpop.f32.mrb[0].mxu0
  %v307 = vadd.f32 %v129, %v306
  %v308 = vpop.f32.mrb[0].mxu0
  %v309 = vpop.f32.mrb[0].mxu0
  %v310 = vadd.f32 %v129, %v309
  %v311 = vpop.f32.mrb[0].mxu0
  %312 = vmatprep.mubr.bf16.mxu0 0
  %313 = vmatmul.mubr.bf16.gmra.mrb[0].mxu0 %v151
  %v314 = vpop.f32.mrb[0].mxu0
  %v315 = vadd.f32 %v129, %v314
  %v316 = vpop.f32.mrb[0].mxu0
  %v317 = vpop.f32.mrb[0].mxu0
  %v318 = vadd.f32 %v129, %v317
  %v319 = vpop.f32.mrb[0].mxu0
  %320 = vmatprep.mubr.bf16.mxu0 0
  %321 = vmatmul.mubr.bf16.gmra.mrb[0].mxu0 %v154
  %v322 = vpop.f32.mrb[0].mxu0
  %v323 = vadd.f32 %v129, %v322
  %v324 = vpop.f32.mrb[0].mxu0
  %v325 = vpop.f32.mrb[0].mxu0
  %v326 = vadd.f32 %v129, %v325
  %v327 = vpop.f32.mrb[0].mxu0
  %328 = vmatprep.mubr.bf16.mxu0 0
  %329 = vmatmul.mubr.bf16.gmra.mrb[0].mxu0 %v157
  %v330 = vpop.f32.mrb[0].mxu0
  %v331 = vadd.f32 %v129, %v330
  %v332 = vpop.f32.mrb[0].mxu0
  %v333 = vpop.f32.mrb[0].mxu0
  %v334 = vadd.f32 %v129, %v333
  %v335 = vpop.f32.mrb[0].mxu0
  %336 = vmatprep.mubr.bf16.mxu0 0
  %337 = vmatmul.mubr.bf16.gmra.mrb[0].mxu0 %v160
  %v338 = vpop.f32.mrb[0].mxu0
  %v339 = vadd.f32 %v129, %v338
  %v340 = vpop.f32.mrb[0].mxu0
  %v341 = vpop.f32.mrb[0].mxu0
  %v342 = vadd.f32 %v129, %v341
  %v343 = vpop.f32.mrb[0].mxu0
  %344 = vmatprep.mubr.bf16.mxu0 0
  %345 = vmatmul.mubr.bf16.gmra.mrb[0].mxu0 %v163
  %v346 = vpop.f32.mrb[0].mxu0
  %v347 = vadd.f32 %v129, %v346
  %v348 = vpop.f32.mrb[0].mxu0
  %v349 = vpop.f32.mrb[0].mxu0
  %v350 = vadd.f32 %v129, %v349
  %v351 = vpop.f32.mrb[0].mxu0
  %352 = vmatprep.mubr.bf16.mxu0 0
  %353 = vmatmul.mubr.bf16.gmra.mrb[0].mxu0 %v166
  %v354 = vpop.f32.mrb[0].mxu0
  %v355 = vadd.f32 %v129, %v354
  %v356 = vpop.f32.mrb[0].mxu0
  %v357 = vpop.f32.mrb[0].mxu0
  %v358 = vadd.f32 %v129, %v357
  %v359 = vpop.f32.mrb[0].mxu0
  %360 = vmatprep.mubr.bf16.mxu0 0
  %361 = vmatmul.mubr.bf16.gmra.mrb[0].mxu0 %v169
  %v362 = vpop.f32.mrb[0].mxu0
  %v363 = vadd.f32 %v129, %v362
  %v364 = vpop.f32.mrb[0].mxu0
  %v365 = vpop.f32.mrb[0].mxu0
  %v366 = vadd.f32 %v129, %v365
  %v367 = vpop.f32.mrb[0].mxu0
  %368 = vmatprep.mubr.bf16.mxu0 0
  %369 = vmatmul.mubr.bf16.gmra.mrb[0].mxu0 %v172
  %v370 = vpop.f32.mrb[0].mxu0
  %v371 = vadd.f32 %v129, %v370
  %v372 = vpop.f32.mrb[0].mxu0
  %v373 = vpop.f32.mrb[0].mxu0
  %v374 = vadd.f32 %v129, %v373
  %v375 = vpop.f32.mrb[0].mxu0
  %376 = vmatprep.mubr.bf16.mxu0 0
  %377 = vmatmul.mubr.bf16.gmra.mrb[0].mxu0 %v175
  %v378 = vpop.f32.mrb[0].mxu0
  %v379 = vadd.f32 %v129, %v378
  %v380 = vpop.f32.mrb[0].mxu0
  %v381 = vpop.f32.mrb[0].mxu0
  %v382 = vadd.f32 %v129, %v381
  %v383 = vpop.f32.mrb[0].mxu0
  %384 = vmatprep.mubr.bf16.mxu0 0
  %385 = vmatmul.mubr.bf16.gmra.mrb[0].mxu0 %v178
  %v386 = vpop.f32.mrb[0].mxu0
  %v387 = vadd.f32 %v129, %v386
  %v388 = vpop.f32.mrb[0].mxu0
  %v389 = vpop.f32.mrb[0].mxu0
  %v390 = vadd.f32 %v129, %v389
  %v391 = vpop.f32.mrb[0].mxu0
  %392 = vmatprep.mubr.bf16.mxu0 0
  %393 = vmatmul.mubr.bf16.gmra.mrb[0].mxu0 %v181
  %v394 = vpop.f32.mrb[0].mxu0
  %v395 = vadd.f32 %v129, %v394
  %v396 = vpop.f32.mrb[0].mxu0
  %v397 = vpop.f32.mrb[0].mxu0
  %v398 = vadd.f32 %v129, %v397
  %v399 = vpop.f32.mrb[0].mxu0
  %400 = vmatprep.mubr.bf16.mxu0 0
  %401 = vmatmul.mubr.bf16.gmra.mrb[0].mxu0 %v184
  %v402 = vpop.f32.mrb[0].mxu0
  %v403 = vadd.f32 %v129, %v402
  %v404 = vpop.f32.mrb[0].mxu0
  %v405 = vpop.f32.mrb[0].mxu0
  %v406 = vadd.f32 %v129, %v405
  %v407 = vpop.f32.mrb[0].mxu0
  %408 = vmatprep.mubr.bf16.mxu0 0
  %409 = vmatmul.mubr.bf16.gmra.mrb[0].mxu0 %v187
  %v410 = vpop.f32.mrb[0].mxu0
  %v411 = vadd.f32 %v129, %v410
  %v412 = vpop.f32.mrb[0].mxu0
  %v413 = vpop.f32.mrb[0].mxu0
  %v414 = vadd.f32 %v129, %v413
  %v415 = vpop.f32.mrb[0].mxu0
  %416 = vmatprep.mubr.bf16.mxu0 0
  %417 = vmatmul.mubr.bf16.gmra.mrb[0].mxu0 %v190
  %v418 = vpop.f32.mrb[0].mxu0
  %v419 = vadd.f32 %v129, %v418
  %v420 = vpop.f32.mrb[0].mxu0
  %v421 = vpop.f32.mrb[0].mxu0
  %v422 = vadd.f32 %v129, %v421
  %v423 = vpop.f32.mrb[0].mxu0
  %424 = vmatprep.mubr.bf16.mxu0 0
  %425 = vmatmul.mubr.bf16.gmra.mrb[0].mxu0 %v193
  %v426 = vpop.f32.mrb[0].mxu0
  %v427 = vadd.f32 %v129, %v426
  %v428 = vpop.f32.mrb[0].mxu0
  %v429 = vpop.f32.mrb[0].mxu0
  %v430 = vadd.f32 %v129, %v429
  %v431 = vpop.f32.mrb[0].mxu0
  %432 = vmatprep.mubr.bf16.mxu0 0
  %433 = vmatmul.mubr.bf16.gmra.mrb[0].mxu0 %v196
  %v434 = vpop.f32.mrb[0].mxu0
  %v435 = vadd.f32 %v129, %v434
  %v436 = vpop.f32.mrb[0].mxu0
  %v437 = vpop.f32.mrb[0].mxu0
  %v438 = vadd.f32 %v129, %v437
  %v439 = vpop.f32.mrb[0].mxu0
  %440 = vmatprep.mubr.bf16.mxu0 0
  %441 = vmatmul.mubr.bf16.gmra.mrb[0].mxu0 %v199
  %v442 = vpop.f32.mrb[0].mxu0
  %v443 = vadd.f32 %v129, %v442
  %v444 = vpop.f32.mrb[0].mxu0
  %v445 = vpop.f32.mrb[0].mxu0
  %v446 = vadd.f32 %v129, %v445
  %v447 = vpop.f32.mrb[0].mxu0
  %448 = vmatprep.mubr.bf16.mxu0 0
  %449 = vmatmul.mubr.bf16.gmra.mrb[0].mxu0 %v202
  %v450 = vpop.f32.mrb[0].mxu0
  %v451 = vadd.f32 %v129, %v450
  %v452 = vpop.f32.mrb[0].mxu0
  %v453 = vpop.f32.mrb[0].mxu0
  %v454 = vadd.f32 %v129, %v453
  %v455 = vpop.f32.mrb[0].mxu0
  %456 = vmatprep.mubr.bf16.mxu0 0
  %457 = vmatmul.mubr.bf16.gmra.mrb[0].mxu0 %v205
  %v458 = vpop.f32.mrb[0].mxu0
  %v459 = vadd.f32 %v129, %v458
  %v460 = vpop.f32.mrb[0].mxu0
  %v461 = vpop.f32.mrb[0].mxu0
  %v462 = vadd.f32 %v129, %v461
  %v463 = vpop.f32.mrb[0].mxu0
  %464 = vmatprep.mubr.bf16.mxu0 0
  %465 = vmatmul.mubr.bf16.gmra.mrb[0].mxu0 %v208
  %v466 = vpop.f32.mrb[0].mxu0
  %v467 = vadd.f32 %v129, %v466
  %v468 = vpop.f32.mrb[0].mxu0
  %v469 = vpop.f32.mrb[0].mxu0
  %v470 = vadd.f32 %v129, %v469
  %v471 = vpop.f32.mrb[0].mxu0
  %472 = vmatprep.mubr.bf16.mxu0 0
  %473 = vmatmul.mubr.bf16.gmra.mrb[0].mxu0 %v211
  %v474 = vpop.f32.mrb[0].mxu0
  %v475 = vadd.f32 %v129, %v474
  %v476 = vpop.f32.mrb[0].mxu0
  %v477 = vpop.f32.mrb[0].mxu0
  %v478 = vadd.f32 %v129, %v477
  %v479 = vpop.f32.mrb[0].mxu0
  %480 = vmatprep.mubr.bf16.mxu0 0
  %481 = vmatmul.mubr.bf16.gmra.mrb[0].mxu0 %v214
  %v482 = vpop.f32.mrb[0].mxu0
  %v483 = vadd.f32 %v129, %v482
  %v484 = vpop.f32.mrb[0].mxu0
  %v485 = vpop.f32.mrb[0].mxu0
  %v486 = vadd.f32 %v129, %v485
  %v487 = vpop.f32.mrb[0].mxu0
  %488 = vmatprep.mubr.bf16.mxu0 0
  %489 = vmatmul.mubr.bf16.gmra.mrb[0].mxu0 %v217
  %v490 = vpop.f32.mrb[0].mxu0
  %v491 = vadd.f32 %v129, %v490
  %v492 = vpop.f32.mrb[0].mxu0
  %v493 = vpop.f32.mrb[0].mxu0
  %v494 = vadd.f32 %v129, %v493
  %v495 = vpop.f32.mrb[0].mxu0
  %496 = vmatprep.mubr.bf16.mxu0 0
  %497 = vmatmul.mubr.bf16.gmra.mrb[0].mxu0 %v220
  %v498 = vpop.f32.mrb[0].mxu0
  %v499 = vadd.f32 %v129, %v498
  %v500 = vpop.f32.mrb[0].mxu0
  %v501 = vpop.f32.mrb[0].mxu0
  %v502 = vadd.f32 %v129, %v501
  %v503 = vpop.f32.mrb[0].mxu0
  %504 = vmatprep.mubr.bf16.mxu0 0
  %505 = vmatmul.mubr.bf16.gmra.mrb[0].mxu0 %v223
  %v506 = vpop.f32.mrb[0].mxu0
  %v507 = vadd.f32 %v129, %v506
  %v508 = vpop.f32.mrb[0].mxu0
  %v509 = vpop.f32.mrb[0].mxu0
  %v510 = vadd.f32 %v129, %v509
  %v511 = vpop.f32.mrb[0].mxu0
  %512 = vmatprep.mubr.bf16.mxu0 0
  %513 = vmatmul.mubr.bf16.gmra.mrb[0].mxu0 %v226
  %v514 = vpop.f32.mrb[0].mxu0
  %v515 = vadd.f32 %v129, %v514
  %v516 = vpop.f32.mrb[0].mxu0
  %v517 = vpop.f32.mrb[0].mxu0
  %v518 = vadd.f32 %v129, %v517
  %v519 = vpop.f32.mrb[0].mxu0
  %520 = vdwg.mxu0
  %v521 = vmax.f32 %v267, 0.0
  %v522 = vmax.f32 %v270, 0.0
  %v523 = vmax.f32 %v275, 0.0
  %v524 = vmax.f32 %v278, 0.0
  %v525 = vmax.f32 %v283, 0.0
  %v526 = vmax.f32 %v286, 0.0
  %v527 = vmax.f32 %v291, 0.0
  %v528 = vmax.f32 %v294, 0.0
  %v529 = vmax.f32 %v299, 0.0
  %v530 = vmax.f32 %v302, 0.0
  %v531 = vmax.f32 %v307, 0.0
  %v532 = vmax.f32 %v310, 0.0
  %v533 = vmax.f32 %v315, 0.0
  %v534 = vmax.f32 %v318, 0.0
  %v535 = vmax.f32 %v323, 0.0
  %v536 = vmax.f32 %v326, 0.0
  %v537 = vmax.f32 %v331, 0.0
  %v538 = vmax.f32 %v334, 0.0
  %v539 = vmax.f32 %v339, 0.0
  %v540 = vmax.f32 %v342, 0.0
  %v541 = vmax.f32 %v347, 0.0
  %v542 = vmax.f32 %v350, 0.0
  %v543 = vmax.f32 %v355, 0.0
  %v544 = vmax.f32 %v358, 0.0
  %v545 = vmax.f32 %v363, 0.0
  %v546 = vmax.f32 %v366, 0.0
  %v547 = vmax.f32 %v371, 0.0
  %v548 = vmax.f32 %v374, 0.0
  %v549 = vmax.f32 %v379, 0.0
  %v550 = vmax.f32 %v382, 0.0
  %v551 = vmax.f32 %v387, 0.0
  %v552 = vmax.f32 %v390, 0.0
  %v553 = vmax.f32 %v395, 0.0
  %v554 = vmax.f32 %v398, 0.0
  %v555 = vmax.f32 %v403, 0.0
  %v556 = vmax.f32 %v406, 0.0
  %v557 = vmax.f32 %v411, 0.0
  %v558 = vmax.f32 %v414, 0.0
  %v559 = vmax.f32 %v419, 0.0
  %v560 = vmax.f32 %v422, 0.0
  %v561 = vmax.f32 %v427, 0.0
  %v562 = vmax.f32 %v430, 0.0
  %v563 = vmax.f32 %v435, 0.0
  %v564 = vmax.f32 %v438, 0.0
  %v565 = vmax.f32 %v443, 0.0
  %v566 = vmax.f32 %v446, 0.0
  %v567 = vmax.f32 %v451, 0.0
  %v568 = vmax.f32 %v454, 0.0
  %v569 = vmax.f32 %v459, 0.0
  %v570 = vmax.f32 %v462, 0.0
  %v571 = vmax.f32 %v467, 0.0
  %v572 = vmax.f32 %v470, 0.0
  %v573 = vmax.f32 %v475, 0.0
  %v574 = vmax.f32 %v478, 0.0
  %v575 = vmax.f32 %v483, 0.0
  %v576 = vmax.f32 %v486, 0.0
  %v577 = vmax.f32 %v491, 0.0
  %v578 = vmax.f32 %v494, 0.0
  %v579 = vmax.f32 %v499, 0.0
  %v580 = vmax.f32 %v502, 0.0
  %v581 = vmax.f32 %v507, 0.0
  %v582 = vmax.f32 %v510, 0.0
  %v583 = vmax.f32 %v515, 0.0
  %v584 = vmax.f32 %v518, 0.0
  %v585 = vmin.f32 %v521, 6.0
  %v586 = vmin.f32 %v522, 6.0
  %v587 = vmin.f32 %v523, 6.0
  %v588 = vmin.f32 %v524, 6.0
  %v589 = vmin.f32 %v525, 6.0
  %v590 = vmin.f32 %v526, 6.0
  %v591 = vmin.f32 %v527, 6.0
  %v592 = vmin.f32 %v528, 6.0
  %v593 = vmin.f32 %v529, 6.0
  %v594 = vmin.f32 %v530, 6.0
  %v595 = vmin.f32 %v531, 6.0
  %v596 = vmin.f32 %v532, 6.0
  %v597 = vmin.f32 %v533, 6.0
  %v598 = vmin.f32 %v534, 6.0
  %v599 = vmin.f32 %v535, 6.0
  %v600 = vmin.f32 %v536, 6.0
  %v601 = vmin.f32 %v537, 6.0
  %v602 = vmin.f32 %v538, 6.0
  %v603 = vmin.f32 %v539, 6.0
  %v604 = vmin.f32 %v540, 6.0
  %v605 = vmin.f32 %v541, 6.0
  %v606 = vmin.f32 %v542, 6.0
  %v607 = vmin.f32 %v543, 6.0
  %v608 = vmin.f32 %v544, 6.0
  %v609 = vmin.f32 %v545, 6.0
  %v610 = vmin.f32 %v546, 6.0
  %v611 = vmin.f32 %v547, 6.0
  %v612 = vmin.f32 %v548, 6.0
  %v613 = vmin.f32 %v549, 6.0
  %v614 = vmin.f32 %v550, 6.0
  %v615 = vmin.f32 %v551, 6.0
  %v616 = vmin.f32 %v552, 6.0
  %v617 = vmin.f32 %v553, 6.0
  %v618 = vmin.f32 %v554, 6.0
  %v619 = vmin.f32 %v555, 6.0
  %v620 = vmin.f32 %v556, 6.0
  %v621 = vmin.f32 %v557, 6.0
  %v622 = vmin.f32 %v558, 6.0
  %v623 = vmin.f32 %v559, 6.0
  %v624 = vmin.f32 %v560, 6.0
  %v625 = vmin.f32 %v561, 6.0
  %v626 = vmin.f32 %v562, 6.0
  %v627 = vmin.f32 %v563, 6.0
  %v628 = vmin.f32 %v564, 6.0
  %v629 = vmin.f32 %v565, 6.0
  %v630 = vmin.f32 %v566, 6.0
  %v631 = vmin.f32 %v567, 6.0
  %v632 = vmin.f32 %v568, 6.0
  %v633 = vmin.f32 %v569, 6.0
  %v634 = vmin.f32 %v570, 6.0
  %v635 = vmin.f32 %v571, 6.0
  %v636 = vmin.f32 %v572, 6.0
  %v637 = vmin.f32 %v573, 6.0
  %v638 = vmin.f32 %v574, 6.0
  %v639 = vmin.f32 %v575, 6.0
  %v640 = vmin.f32 %v576, 6.0
  %v641 = vmin.f32 %v577, 6.0
  %v642 = vmin.f32 %v578, 6.0
  %v643 = vmin.f32 %v579, 6.0
  %v644 = vmin.f32 %v580, 6.0
  %v645 = vmin.f32 %v581, 6.0
  %v646 = vmin.f32 %v582, 6.0
  %v647 = vmin.f32 %v583, 6.0
  %v648 = vmin.f32 %v584, 6.0
  %vm649 = vcmask 261120
  %650 = vst.msk [vmem:[#allocation2] sm:$0xff] %vm649, 0.0
  %651 = vst.msk [vmem:[#allocation2 + $0x8] sm:$0xff] %vm649, 0.0
  %vm652 = vcmask 254976
  %653 = vst.msk [vmem:[#allocation2 + $0x10] sm:$0x3] %vm652, 0.0
  %654 = vst.msk [vmem:[#allocation2 + $0x1b0] sm:$0xff] %vm649, 0.0
  %655 = vst.msk [vmem:[#allocation2 + $0x1b8] sm:$0xff] %vm649, 0.0
  %656 = vst.msk [vmem:[#allocation2 + $0x1c0] sm:$0x3] %vm652, 0.0
  %s657 = scalar_lea.vmem [#allocation2], 408
  %658 = vst.msk [vmem:[%s657] sm:$0xff] %vm649, 0.0
  %659 = vst.msk [vmem:[%s657 + $0x8] sm:$0xff] %vm649, 0.0
  %660 = vst.msk [vmem:[%s657 + $0x10] sm:$0x3] %vm652, 0.0
  %661 = vst.msk [vmem:[%s657 + $0x1b0] sm:$0xff] %vm649, 0.0
  %662 = vst.msk [vmem:[%s657 + $0x1b8] sm:$0xff] %vm649, 0.0
  %663 = vst.msk [vmem:[%s657 + $0x1c0] sm:$0x3] %vm652, 0.0
  %vm664 = vcmask 253952
  %665 = vst.msk [vmem:[#allocation2] sm:$0x1] %vm664, 0.0
  %666 = vst.msk [vmem:[#allocation2 + $0x18] sm:$0x1] %vm664, 0.0
  %667 = vst.msk [vmem:[#allocation2 + $0x30] sm:$0x1] %vm664, 0.0
  %668 = vst.msk [vmem:[#allocation2 + $0x48] sm:$0x1] %vm664, 0.0
  %669 = vst.msk [vmem:[#allocation2 + $0x60] sm:$0x1] %vm664, 0.0
  %670 = vst.msk [vmem:[#allocation2 + $0x78] sm:$0x1] %vm664, 0.0
  %671 = vst.msk [vmem:[#allocation2 + $0x90] sm:$0x1] %vm664, 0.0
  %672 = vst.msk [vmem:[#allocation2 + $0xa8] sm:$0x1] %vm664, 0.0
  %673 = vst.msk [vmem:[#allocation2 + $0xc0] sm:$0x1] %vm664, 0.0
  %674 = vst.msk [vmem:[#allocation2 + $0xd8] sm:$0x1] %vm664, 0.0
  %675 = vst.msk [vmem:[#allocation2 + $0xf0] sm:$0x1] %vm664, 0.0
  %676 = vst.msk [vmem:[#allocation2 + $0x108] sm:$0x1] %vm664, 0.0
  %677 = vst.msk [vmem:[#allocation2 + $0x120] sm:$0x1] %vm664, 0.0
  %678 = vst.msk [vmem:[#allocation2 + $0x138] sm:$0x1] %vm664, 0.0
  %679 = vst.msk [vmem:[#allocation2 + $0x150] sm:$0x1] %vm664, 0.0
  %680 = vst.msk [vmem:[#allocation2 + $0x168] sm:$0x1] %vm664, 0.0
  %681 = vst.msk [vmem:[#allocation2 + $0x180] sm:$0x1] %vm664, 0.0
  %682 = vst.msk [vmem:[#allocation2 + $0x198] sm:$0x1] %vm664, 0.0
  %683 = vst.msk [vmem:[#allocation2 + $0x1b0] sm:$0x1] %vm664, 0.0
  %684 = vst.msk [vmem:[#allocation2 + $0x1c8] sm:$0x1] %vm664, 0.0
  %685 = vst.msk [vmem:[#allocation2 + $0x1e0] sm:$0x1] %vm664, 0.0
  %686 = vst.msk [vmem:[#allocation2 + $0x1f8] sm:$0x1] %vm664, 0.0
  %687 = vst.msk [vmem:[#allocation2 + $0x210] sm:$0x1] %vm664, 0.0
  %688 = vst.msk [vmem:[#allocation2 + $0x228] sm:$0x1] %vm664, 0.0
  %689 = vst.msk [vmem:[#allocation2 + $0x240] sm:$0x1] %vm664, 0.0
  %690 = vst.msk [vmem:[#allocation2 + $0x258] sm:$0x1] %vm664, 0.0
  %691 = vst.msk [vmem:[#allocation2 + $0x270] sm:$0x1] %vm664, 0.0
  %692 = vst.msk [vmem:[#allocation2 + $0x288] sm:$0x1] %vm664, 0.0
  %693 = vst.msk [vmem:[#allocation2 + $0x2a0] sm:$0x1] %vm664, 0.0
  %694 = vst.msk [vmem:[#allocation2 + $0x2b8] sm:$0x1] %vm664, 0.0
  %695 = vst.msk [vmem:[#allocation2 + $0x2d0] sm:$0x1] %vm664, 0.0
  %696 = vst.msk [vmem:[#allocation2 + $0x2e8] sm:$0x1] %vm664, 0.0
  %697 = vst.msk [vmem:[#allocation2 + $0x300] sm:$0x1] %vm664, 0.0
  %698 = vst.msk [vmem:[#allocation2 + $0x318] sm:$0x1] %vm664, 0.0
  %699 = vst.msk [vmem:[#allocation2 + $0x330] sm:$0x1] %vm664, 0.0
  %700 = vst.msk [vmem:[#allocation2 + $0x348] sm:$0x1] %vm664, 0.0
  %701 = vst.msk [vmem:[#allocation2 + $0x11] sm:$0x1] %vm664, 0.0
  %702 = vst.msk [vmem:[#allocation2 + $0x29] sm:$0x1] %vm664, 0.0
  %703 = vst.msk [vmem:[#allocation2 + $0x41] sm:$0x1] %vm664, 0.0
  %704 = vst.msk [vmem:[#allocation2 + $0x59] sm:$0x1] %vm664, 0.0
  %705 = vst.msk [vmem:[#allocation2 + $0x71] sm:$0x1] %vm664, 0.0
  %706 = vst.msk [vmem:[#allocation2 + $0x89] sm:$0x1] %vm664, 0.0
  %707 = vst.msk [vmem:[#allocation2 + $0xa1] sm:$0x1] %vm664, 0.0
  %708 = vst.msk [vmem:[#allocation2 + $0xb9] sm:$0x1] %vm664, 0.0
  %709 = vst.msk [vmem:[#allocation2 + $0xd1] sm:$0x1] %vm664, 0.0
  %710 = vst.msk [vmem:[#allocation2 + $0xe9] sm:$0x1] %vm664, 0.0
  %711 = vst.msk [vmem:[#allocation2 + $0x101] sm:$0x1] %vm664, 0.0
  %712 = vst.msk [vmem:[#allocation2 + $0x119] sm:$0x1] %vm664, 0.0
  %713 = vst.msk [vmem:[#allocation2 + $0x131] sm:$0x1] %vm664, 0.0
  %714 = vst.msk [vmem:[#allocation2 + $0x149] sm:$0x1] %vm664, 0.0
  %715 = vst.msk [vmem:[#allocation2 + $0x161] sm:$0x1] %vm664, 0.0
  %716 = vst.msk [vmem:[#allocation2 + $0x179] sm:$0x1] %vm664, 0.0
  %717 = vst.msk [vmem:[#allocation2 + $0x191] sm:$0x1] %vm664, 0.0
  %718 = vst.msk [vmem:[#allocation2 + $0x1a9] sm:$0x1] %vm664, 0.0
  %719 = vst.msk [vmem:[#allocation2 + $0x1c1] sm:$0x1] %vm664, 0.0
  %720 = vst.msk [vmem:[#allocation2 + $0x1d9] sm:$0x1] %vm664, 0.0
  %721 = vst.msk [vmem:[#allocation2 + $0x1f1] sm:$0x1] %vm664, 0.0
  %722 = vst.msk [vmem:[#allocation2 + $0x209] sm:$0x1] %vm664, 0.0
  %723 = vst.msk [vmem:[#allocation2 + $0x221] sm:$0x1] %vm664, 0.0
  %724 = vst.msk [vmem:[#allocation2 + $0x239] sm:$0x1] %vm664, 0.0
  %725 = vst.msk [vmem:[#allocation2 + $0x251] sm:$0x1] %vm664, 0.0
  %726 = vst.msk [vmem:[#allocation2 + $0x269] sm:$0x1] %vm664, 0.0
  %727 = vst.msk [vmem:[#allocation2 + $0x281] sm:$0x1] %vm664, 0.0
  %728 = vst.msk [vmem:[#allocation2 + $0x299] sm:$0x1] %vm664, 0.0
  %729 = vst.msk [vmem:[#allocation2 + $0x2b1] sm:$0x1] %vm664, 0.0
  %730 = vst.msk [vmem:[#allocation2 + $0x2c9] sm:$0x1] %vm664, 0.0
  %731 = vst.msk [vmem:[#allocation2 + $0x2e1] sm:$0x1] %vm664, 0.0
  %732 = vst.msk [vmem:[#allocation2 + $0x2f9] sm:$0x1] %vm664, 0.0
  %733 = vst.msk [vmem:[#allocation2 + $0x311] sm:$0x1] %vm664, 0.0
  %734 = vst.msk [vmem:[#allocation2 + $0x329] sm:$0x1] %vm664, 0.0
  %735 = vst.msk [vmem:[#allocation2 + $0x341] sm:$0x1] %vm664, 0.0
  %736 = vst.msk [vmem:[#allocation2 + $0x359] sm:$0x1] %vm664, 0.0
  %s737 = scalar_lea.vmem [#allocation2], 24
  %738 = vst.msk [vmem:[%s737 + $0x1] sm:$0xff] %vm649, %v585
  %739 = vst.msk [vmem:[%s737 + $0x9] sm:$0xff] %vm649, %v586
  %740 = vst.msk [vmem:[%s737 + $0x19] sm:$0xff] %vm649, %v587
  %741 = vst.msk [vmem:[%s737 + $0x21] sm:$0xff] %vm649, %v588
  %742 = vst.msk [vmem:[%s737 + $0x31] sm:$0xff] %vm649, %v589
  %743 = vst.msk [vmem:[%s737 + $0x39] sm:$0xff] %vm649, %v590
  %744 = vst.msk [vmem:[%s737 + $0x49] sm:$0xff] %vm649, %v591
  %745 = vst.msk [vmem:[%s737 + $0x51] sm:$0xff] %vm649, %v592
  %746 = vst.msk [vmem:[%s737 + $0x61] sm:$0xff] %vm649, %v593
  %747 = vst.msk [vmem:[%s737 + $0x69] sm:$0xff] %vm649, %v594
  %748 = vst.msk [vmem:[%s737 + $0x79] sm:$0xff] %vm649, %v595
  %749 = vst.msk [vmem:[%s737 + $0x81] sm:$0xff] %vm649, %v596
  %750 = vst.msk [vmem:[%s737 + $0x91] sm:$0xff] %vm649, %v597
  %751 = vst.msk [vmem:[%s737 + $0x99] sm:$0xff] %vm649, %v598
  %752 = vst.msk [vmem:[%s737 + $0xa9] sm:$0xff] %vm649, %v599
  %753 = vst.msk [vmem:[%s737 + $0xb1] sm:$0xff] %vm649, %v600
  %754 = vst.msk [vmem:[%s737 + $0xc1] sm:$0xff] %vm649, %v601
  %755 = vst.msk [vmem:[%s737 + $0xc9] sm:$0xff] %vm649, %v602
  %756 = vst.msk [vmem:[%s737 + $0xd9] sm:$0xff] %vm649, %v603
  %757 = vst.msk [vmem:[%s737 + $0xe1] sm:$0xff] %vm649, %v604
  %758 = vst.msk [vmem:[%s737 + $0xf1] sm:$0xff] %vm649, %v605
  %759 = vst.msk [vmem:[%s737 + $0xf9] sm:$0xff] %vm649, %v606
  %760 = vst.msk [vmem:[%s737 + $0x109] sm:$0xff] %vm649, %v607
  %761 = vst.msk [vmem:[%s737 + $0x111] sm:$0xff] %vm649, %v608
  %762 = vst.msk [vmem:[%s737 + $0x121] sm:$0xff] %vm649, %v609
  %763 = vst.msk [vmem:[%s737 + $0x129] sm:$0xff] %vm649, %v610
  %764 = vst.msk [vmem:[%s737 + $0x139] sm:$0xff] %vm649, %v611
  %765 = vst.msk [vmem:[%s737 + $0x141] sm:$0xff] %vm649, %v612
  %766 = vst.msk [vmem:[%s737 + $0x151] sm:$0xff] %vm649, %v613
  %767 = vst.msk [vmem:[%s737 + $0x159] sm:$0xff] %vm649, %v614
  %768 = vst.msk [vmem:[%s737 + $0x169] sm:$0xff] %vm649, %v615
  %769 = vst.msk [vmem:[%s737 + $0x171] sm:$0xff] %vm649, %v616
  %770 = vst.msk [vmem:[%s737 + $0x1b1] sm:$0xff] %vm649, %v617
  %771 = vst.msk [vmem:[%s737 + $0x1b9] sm:$0xff] %vm649, %v618
  %772 = vst.msk [vmem:[%s737 + $0x1c9] sm:$0xff] %vm649, %v619
  %773 = vst.msk [vmem:[%s737 + $0x1d1] sm:$0xff] %vm649, %v620
  %774 = vst.msk [vmem:[%s737 + $0x1e1] sm:$0xff] %vm649, %v621
  %775 = vst.msk [vmem:[%s737 + $0x1e9] sm:$0xff] %vm649, %v622
  %776 = vst.msk [vmem:[%s737 + $0x1f9] sm:$0xff] %vm649, %v623
  %777 = vst.msk [vmem:[%s737 + $0x201] sm:$0xff] %vm649, %v624
  %778 = vst.msk [vmem:[%s737 + $0x211] sm:$0xff] %vm649, %v625
  %779 = vst.msk [vmem:[%s737 + $0x219] sm:$0xff] %vm649, %v626
  %780 = vst.msk [vmem:[%s737 + $0x229] sm:$0xff] %vm649, %v627
  %781 = vst.msk [vmem:[%s737 + $0x231] sm:$0xff] %vm649, %v628
  %782 = vst.msk [vmem:[%s737 + $0x241] sm:$0xff] %vm649, %v629
  %783 = vst.msk [vmem:[%s737 + $0x249] sm:$0xff] %vm649, %v630
  %784 = vst.msk [vmem:[%s737 + $0x259] sm:$0xff] %vm649, %v631
  %785 = vst.msk [vmem:[%s737 + $0x261] sm:$0xff] %vm649, %v632
  %786 = vst.msk [vmem:[%s737 + $0x271] sm:$0xff] %vm649, %v633
  %787 = vst.msk [vmem:[%s737 + $0x279] sm:$0xff] %vm649, %v634
  %788 = vst.msk [vmem:[%s737 + $0x289] sm:$0xff] %vm649, %v635
  %789 = vst.msk [vmem:[%s737 + $0x291] sm:$0xff] %vm649, %v636
  %790 = vst.msk [vmem:[%s737 + $0x2a1] sm:$0xff] %vm649, %v637
  %791 = vst.msk [vmem:[%s737 + $0x2a9] sm:$0xff] %vm649, %v638
  %792 = vst.msk [vmem:[%s737 + $0x2b9] sm:$0xff] %vm649, %v639
  %793 = vst.msk [vmem:[%s737 + $0x2c1] sm:$0xff] %vm649, %v640
  %794 = vst.msk [vmem:[%s737 + $0x2d1] sm:$0xff] %vm649, %v641
  %795 = vst.msk [vmem:[%s737 + $0x2d9] sm:$0xff] %vm649, %v642
  %796 = vst.msk [vmem:[%s737 + $0x2e9] sm:$0xff] %vm649, %v643
  %797 = vst.msk [vmem:[%s737 + $0x2f1] sm:$0xff] %vm649, %v644
  %798 = vst.msk [vmem:[%s737 + $0x301] sm:$0xff] %vm649, %v645
  %799 = vst.msk [vmem:[%s737 + $0x309] sm:$0xff] %vm649, %v646
  %800 = vst.msk [vmem:[%s737 + $0x319] sm:$0xff] %vm649, %v647
  %801 = vst.msk [vmem:[%s737 + $0x321] sm:$0xff] %vm649, %v648
  %v802 = vld [vmem:[%s3] sm:$0x7]
  %v803 = vld [vmem:[%s3 + $0x4] sm:$0x7]
  %v804 = vld [vmem:[%s3 + $0x8] sm:$0x7]
  %v805 = vld [vmem:[#allocation2] sm:$0xff]
  %v806 = vld [vmem:[#allocation2 + $0x8] sm:$0xff]
  %v807 = vld [vmem:[#allocation2 + $0x18] sm:$0xff]
  %v808 = vld [vmem:[#allocation2 + $0x20] sm:$0xff]
  %v809 = vld [vmem:[#allocation2 + $0x30] sm:$0xff]
  %v810 = vld [vmem:[#allocation2 + $0x38] sm:$0xff]
  %v811 = vld [vmem:[#allocation2 + $0x48] sm:$0xff]
  %v812 = vld [vmem:[#allocation2 + $0x50] sm:$0xff]
  %v813 = vld [vmem:[#allocation2 + $0x60] sm:$0xff]
  %v814 = vld [vmem:[#allocation2 + $0x68] sm:$0xff]
  %v815 = vld [vmem:[#allocation2 + $0x78] sm:$0xff]
  %v816 = vld [vmem:[#allocation2 + $0x80] sm:$0xff]
  %v817 = vld [vmem:[#allocation2 + $0x90] sm:$0xff]
  %v818 = vld [vmem:[#allocation2 + $0x98] sm:$0xff]
  %v819 = vld [vmem:[#allocation2 + $0xa8] sm:$0xff]
  %v820 = vld [vmem:[#allocation2 + $0xb0] sm:$0xff]
  %v821 = vld [vmem:[#allocation2 + $0xc0] sm:$0xff]
  %v822 = vld [vmem:[#allocation2 + $0xc8] sm:$0xff]
  %v823 = vld [vmem:[#allocation2 + $0xd8] sm:$0xff]
  %v824 = vld [vmem:[#allocation2 + $0xe0] sm:$0xff]
  %v825 = vld [vmem:[#allocation2 + $0xf0] sm:$0xff]
  %v826 = vld [vmem:[#allocation2 + $0xf8] sm:$0xff]
  %v827 = vld [vmem:[#allocation2 + $0x108] sm:$0xff]
  %v828 = vld [vmem:[#allocation2 + $0x110] sm:$0xff]
  %v829 = vld [vmem:[#allocation2 + $0x120] sm:$0xff]
  %v830 = vld [vmem:[#allocation2 + $0x128] sm:$0xff]
  %v831 = vld [vmem:[#allocation2 + $0x138] sm:$0xff]
  %v832 = vld [vmem:[#allocation2 + $0x140] sm:$0xff]
  %v833 = vld [vmem:[#allocation2 + $0x150] sm:$0xff]
  %v834 = vld [vmem:[#allocation2 + $0x158] sm:$0xff]
  %v835 = vld [vmem:[#allocation2 + $0x168] sm:$0xff]
  %v836 = vld [vmem:[#allocation2 + $0x170] sm:$0xff]
  %v837 = vld [vmem:[#allocation2 + $0x1b0] sm:$0xff]
  %v838 = vld [vmem:[#allocation2 + $0x1b8] sm:$0xff]
  %v839 = vld [vmem:[#allocation2 + $0x1c8] sm:$0xff]
  %v840 = vld [vmem:[#allocation2 + $0x1d0] sm:$0xff]
  %v841 = vld [vmem:[#allocation2 + $0x1e0] sm:$0xff]
  %v842 = vld [vmem:[#allocation2 + $0x1e8] sm:$0xff]
  %v843 = vld [vmem:[#allocation2 + $0x1f8] sm:$0xff]
  %v844 = vld [vmem:[#allocation2 + $0x200] sm:$0xff]
  %v845 = vld [vmem:[#allocation2 + $0x210] sm:$0xff]
  %v846 = vld [vmem:[#allocation2 + $0x218] sm:$0xff]
  %v847 = vld [vmem:[#allocation2 + $0x228] sm:$0xff]
  %v848 = vld [vmem:[#allocation2 + $0x230] sm:$0xff]
  %v849 = vld [vmem:[#allocation2 + $0x240] sm:$0xff]
  %v850 = vld [vmem:[#allocation2 + $0x248] sm:$0xff]
  %v851 = vld [vmem:[#allocation2 + $0x258] sm:$0xff]
  %v852 = vld [vmem:[#allocation2 + $0x260] sm:$0xff]
  %v853 = vld [vmem:[#allocation2 + $0x270] sm:$0xff]
  %v854 = vld [vmem:[#allocation2 + $0x278] sm:$0xff]
  %v855 = vld [vmem:[#allocation2 + $0x288] sm:$0xff]
  %v856 = vld [vmem:[#allocation2 + $0x290] sm:$0xff]
  %v857 = vld [vmem:[#allocation2 + $0x2a0] sm:$0xff]
  %v858 = vld [vmem:[#allocation2 + $0x2a8] sm:$0xff]
  %v859 = vld [vmem:[#allocation2 + $0x2b8] sm:$0xff]
  %v860 = vld [vmem:[#allocation2 + $0x2c0] sm:$0xff]
  %v861 = vld [vmem:[#allocation2 + $0x2d0] sm:$0xff]
  %v862 = vld [vmem:[#allocation2 + $0x2d8] sm:$0xff]
  %v863 = vld [vmem:[#allocation2 + $0x2e8] sm:$0xff]
  %v864 = vld [vmem:[#allocation2 + $0x2f0] sm:$0xff]
  %v865 = vld [vmem:[#allocation2 + $0x300] sm:$0xff]
  %v866 = vld [vmem:[#allocation2 + $0x308] sm:$0xff]
  %v867 = vld [vmem:[#allocation2 + $0x318] sm:$0xff]
  %v868 = vld [vmem:[#allocation2 + $0x320] sm:$0xff]
  %v869 = vlaneseq
  %v870 = vshrl.u32 %v869, 7
  %v871 = vsub.s32 0, %v870
  %v872 = vrot.slane %v802, %v871
  %v873 = vmul.f32 %v805, %v872
  %v874 = vmul.f32 %v806, %v872
  %v875 = vmul.f32 %v807, %v872
  %v876 = vmul.f32 %v808, %v872
  %v877 = vmul.f32 %v809, %v872
  %v878 = vmul.f32 %v810, %v872
  %v879 = vmul.f32 %v811, %v872
  %v880 = vmul.f32 %v812, %v872
  %v881 = vmul.f32 %v813, %v872
  %v882 = vmul.f32 %v814, %v872
  %v883 = vmul.f32 %v815, %v872
  %v884 = vmul.f32 %v816, %v872
  %v885 = vmul.f32 %v817, %v872
  %v886 = vmul.f32 %v818, %v872
  %v887 = vmul.f32 %v819, %v872
  %v888 = vmul.f32 %v820, %v872
  %v889 = vmul.f32 %v821, %v872
  %v890 = vmul.f32 %v822, %v872
  %v891 = vmul.f32 %v823, %v872
  %v892 = vmul.f32 %v824, %v872
  %v893 = vmul.f32 %v825, %v872
  %v894 = vmul.f32 %v826, %v872
  %v895 = vmul.f32 %v827, %v872
  %v896 = vmul.f32 %v828, %v872
  %v897 = vmul.f32 %v829, %v872
  %v898 = vmul.f32 %v830, %v872
  %v899 = vmul.f32 %v831, %v872
  %v900 = vmul.f32 %v832, %v872
  %v901 = vmul.f32 %v833, %v872
  %v902 = vmul.f32 %v834, %v872
  %v903 = vmul.f32 %v835, %v872
  %v904 = vmul.f32 %v836, %v872
  %v905 = vmul.f32 %v837, %v872
  %v906 = vmul.f32 %v838, %v872
  %v907 = vmul.f32 %v839, %v872
  %v908 = vmul.f32 %v840, %v872
  %v909 = vmul.f32 %v841, %v872
  %v910 = vmul.f32 %v842, %v872
  %v911 = vmul.f32 %v843, %v872
  %v912 = vmul.f32 %v844, %v872
  %v913 = vmul.f32 %v845, %v872
  %v914 = vmul.f32 %v846, %v872
  %v915 = vmul.f32 %v847, %v872
  %v916 = vmul.f32 %v848, %v872
  %v917 = vmul.f32 %v849, %v872
  %v918 = vmul.f32 %v850, %v872
  %v919 = vmul.f32 %v851, %v872
  %v920 = vmul.f32 %v852, %v872
  %v921 = vmul.f32 %v853, %v872
  %v922 = vmul.f32 %v854, %v872
  %v923 = vmul.f32 %v855, %v872
  %v924 = vmul.f32 %v856, %v872
  %v925 = vmul.f32 %v857, %v872
  %v926 = vmul.f32 %v858, %v872
  %v927 = vmul.f32 %v859, %v872
  %v928 = vmul.f32 %v860, %v872
  %v929 = vmul.f32 %v861, %v872
  %v930 = vmul.f32 %v862, %v872
  %v931 = vmul.f32 %v863, %v872
  %v932 = vmul.f32 %v864, %v872
  %v933 = vmul.f32 %v865, %v872
  %v934 = vmul.f32 %v866, %v872
  %v935 = vmul.f32 %v867, %v872
  %v936 = vmul.f32 %v868, %v872
  %v937 = vld [vmem:[#allocation2 + $0x1] sm:$0xff]
  %v938 = vld [vmem:[#allocation2 + $0x9] sm:$0xff]
  %v939 = vld [vmem:[#allocation2 + $0x19] sm:$0xff]
  %v940 = vld [vmem:[#allocation2 + $0x21] sm:$0xff]
  %v941 = vld [vmem:[#allocation2 + $0x31] sm:$0xff]
  %v942 = vld [vmem:[#allocation2 + $0x39] sm:$0xff]
  %v943 = vld [vmem:[#allocation2 + $0x49] sm:$0xff]
  %v944 = vld [vmem:[#allocation2 + $0x51] sm:$0xff]
  %v945 = vld [vmem:[#allocation2 + $0x61] sm:$0xff]
  %v946 = vld [vmem:[#allocation2 + $0x69] sm:$0xff]
  %v947 = vld [vmem:[#allocation2 + $0x79] sm:$0xff]
  %v948 = vld [vmem:[#allocation2 + $0x81] sm:$0xff]
  %v949 = vld [vmem:[#allocation2 + $0x91] sm:$0xff]
  %v950 = vld [vmem:[#allocation2 + $0x99] sm:$0xff]
  %v951 = vld [vmem:[#allocation2 + $0xa9] sm:$0xff]
  %v952 = vld [vmem:[#allocation2 + $0xb1] sm:$0xff]
  %v953 = vld [vmem:[#allocation2 + $0xc1] sm:$0xff]
  %v954 = vld [vmem:[#allocation2 + $0xc9] sm:$0xff]
  %v955 = vld [vmem:[#allocation2 + $0xd9] sm:$0xff]
  %v956 = vld [vmem:[#allocation2 + $0xe1] sm:$0xff]
  %v957 = vld [vmem:[#allocation2 + $0xf1] sm:$0xff]
  %v958 = vld [vmem:[#allocation2 + $0xf9] sm:$0xff]
  %v959 = vld [vmem:[#allocation2 + $0x109] sm:$0xff]
  %v960 = vld [vmem:[#allocation2 + $0x111] sm:$0xff]
  %v961 = vld [vmem:[#allocation2 + $0x121] sm:$0xff]
  %v962 = vld [vmem:[#allocation2 + $0x129] sm:$0xff]
  %v963 = vld [vmem:[#allocation2 + $0x139] sm:$0xff]
  %v964 = vld [vmem:[#allocation2 + $0x141] sm:$0xff]
  %v965 = vld [vmem:[#allocation2 + $0x151] sm:$0xff]
  %v966 = vld [vmem:[#allocation2 + $0x159] sm:$0xff]
  %v967 = vld [vmem:[#allocation2 + $0x169] sm:$0xff]
  %v968 = vld [vmem:[#allocation2 + $0x171] sm:$0xff]
  %v969 = vld [vmem:[#allocation2 + $0x1b1] sm:$0xff]
  %v970 = vld [vmem:[#allocation2 + $0x1b9] sm:$0xff]
  %v971 = vld [vmem:[#allocation2 + $0x1c9] sm:$0xff]
  %v972 = vld [vmem:[#allocation2 + $0x1d1] sm:$0xff]
  %v973 = vld [vmem:[#allocation2 + $0x1e1] sm:$0xff]
  %v974 = vld [vmem:[#allocation2 + $0x1e9] sm:$0xff]
  %v975 = vld [vmem:[#allocation2 + $0x1f9] sm:$0xff]
  %v976 = vld [vmem:[#allocation2 + $0x201] sm:$0xff]
  %v977 = vld [vmem:[#allocation2 + $0x211] sm:$0xff]
  %v978 = vld [vmem:[#allocation2 + $0x219] sm:$0xff]
  %v979 = vld [vmem:[#allocation2 + $0x229] sm:$0xff]
  %v980 = vld [vmem:[#allocation2 + $0x231] sm:$0xff]
  %v981 = vld [vmem:[#allocation2 + $0x241] sm:$0xff]
  %v982 = vld [vmem:[#allocation2 + $0x249] sm:$0xff]
  %v983 = vld [vmem:[#allocation2 + $0x259] sm:$0xff]
  %v984 = vld [vmem:[#allocation2 + $0x261] sm:$0xff]
  %v985 = vld [vmem:[#allocation2 + $0x271] sm:$0xff]
  %v986 = vld [vmem:[#allocation2 + $0x279] sm:$0xff]
  %v987 = vld [vmem:[#allocation2 + $0x289] sm:$0xff]
  %v988 = vld [vmem:[#allocation2 + $0x291] sm:$0xff]
  %v989 = vld [vmem:[#allocation2 + $0x2a1] sm:$0xff]
  %v990 = vld [vmem:[#allocation2 + $0x2a9] sm:$0xff]
  %v991 = vld [vmem:[#allocation2 + $0x2b9] sm:$0xff]
  %v992 = vld [vmem:[#allocation2 + $0x2c1] sm:$0xff]
  %v993 = vld [vmem:[#allocation2 + $0x2d1] sm:$0xff]
  %v994 = vld [vmem:[#allocation2 + $0x2d9] sm:$0xff]
  %v995 = vld [vmem:[#allocation2 + $0x2e9] sm:$0xff]
  %v996 = vld [vmem:[#allocation2 + $0x2f1] sm:$0xff]
  %v997 = vld [vmem:[#allocation2 + $0x301] sm:$0xff]
  %v998 = vld [vmem:[#allocation2 + $0x309] sm:$0xff]
  %v999 = vld [vmem:[#allocation2 + $0x319] sm:$0xff]
  %v1000 = vld [vmem:[#allocation2 + $0x321] sm:$0xff]
  %v1001 = vlaneseq
  %v1002 = vshrl.u32 %v1001, 7
  %v1003 = vsub.s32 1, %v1002
  %v1004 = vrot.slane %v802, %v1003
  %v1005 = vmul.f32 %v937, %v1004
  %v1006 = vmul.f32 %v938, %v1004
  %v1007 = vmul.f32 %v939, %v1004
  %v1008 = vmul.f32 %v940, %v1004
  %v1009 = vmul.f32 %v941, %v1004
  %v1010 = vmul.f32 %v942, %v1004
  %v1011 = vmul.f32 %v943, %v1004
  %v1012 = vmul.f32 %v944, %v1004
  %v1013 = vmul.f32 %v945, %v1004
  %v1014 = vmul.f32 %v946, %v1004
  %v1015 = vmul.f32 %v947, %v1004
  %v1016 = vmul.f32 %v948, %v1004
  %v1017 = vmul.f32 %v949, %v1004
  %v1018 = vmul.f32 %v950, %v1004
  %v1019 = vmul.f32 %v951, %v1004
  %v1020 = vmul.f32 %v952, %v1004
  %v1021 = vmul.f32 %v953, %v1004
  %v1022 = vmul.f32 %v954, %v1004
  %v1023 = vmul.f32 %v955, %v1004
  %v1024 = vmul.f32 %v956, %v1004
  %v1025 = vmul.f32 %v957, %v1004
  %v1026 = vmul.f32 %v958, %v1004
  %v1027 = vmul.f32 %v959, %v1004
  %v1028 = vmul.f32 %v960, %v1004
  %v1029 = vmul.f32 %v961, %v1004
  %v1030 = vmul.f32 %v962, %v1004
  %v1031 = vmul.f32 %v963, %v1004
  %v1032 = vmul.f32 %v964, %v1004
  %v1033 = vmul.f32 %v965, %v1004
  %v1034 = vmul.f32 %v966, %v1004
  %v1035 = vmul.f32 %v967, %v1004
  %v1036 = vmul.f32 %v968, %v1004
  %v1037 = vmul.f32 %v969, %v1004
  %v1038 = vmul.f32 %v970, %v1004
  %v1039 = vmul.f32 %v971, %v1004
  %v1040 = vmul.f32 %v972, %v1004
  %v1041 = vmul.f32 %v973, %v1004
  %v1042 = vmul.f32 %v974, %v1004
  %v1043 = vmul.f32 %v975, %v1004
  %v1044 = vmul.f32 %v976, %v1004
  %v1045 = vmul.f32 %v977, %v1004
  %v1046 = vmul.f32 %v978, %v1004
  %v1047 = vmul.f32 %v979, %v1004
  %v1048 = vmul.f32 %v980, %v1004
  %v1049 = vmul.f32 %v981, %v1004
  %v1050 = vmul.f32 %v982, %v1004
  %v1051 = vmul.f32 %v983, %v1004
  %v1052 = vmul.f32 %v984, %v1004
  %v1053 = vmul.f32 %v985, %v1004
  %v1054 = vmul.f32 %v986, %v1004
  %v1055 = vmul.f32 %v987, %v1004
  %v1056 = vmul.f32 %v988, %v1004
  %v1057 = vmul.f32 %v989, %v1004
  %v1058 = vmul.f32 %v990, %v1004
  %v1059 = vmul.f32 %v991, %v1004
  %v1060 = vmul.f32 %v992, %v1004
  %v1061 = vmul.f32 %v993, %v1004
  %v1062 = vmul.f32 %v994, %v1004
  %v1063 = vmul.f32 %v995, %v1004
  %v1064 = vmul.f32 %v996, %v1004
  %v1065 = vmul.f32 %v997, %v1004
  %v1066 = vmul.f32 %v998, %v1004
  %v1067 = vmul.f32 %v999, %v1004
  %v1068 = vmul.f32 %v1000, %v1004
  %v1069 = vadd.f32 %v873, %v1005
  %v1070 = vadd.f32 %v874, %v1006
  %v1071 = vadd.f32 %v875, %v1007
  %v1072 = vadd.f32 %v876, %v1008
  %v1073 = vadd.f32 %v877, %v1009
  %v1074 = vadd.f32 %v878, %v1010
  %v1075 = vadd.f32 %v879, %v1011
  %v1076 = vadd.f32 %v880, %v1012
  %v1077 = vadd.f32 %v881, %v1013
  %v1078 = vadd.f32 %v882, %v1014
  %v1079 = vadd.f32 %v883, %v1015
  %v1080 = vadd.f32 %v884, %v1016
  %v1081 = vadd.f32 %v885, %v1017
  %v1082 = vadd.f32 %v886, %v1018
  %v1083 = vadd.f32 %v887, %v1019
  %v1084 = vadd.f32 %v888, %v1020
  %v1085 = vadd.f32 %v889, %v1021
  %v1086 = vadd.f32 %v890, %v1022
  %v1087 = vadd.f32 %v891, %v1023
  %v1088 = vadd.f32 %v892, %v1024
  %v1089 = vadd.f32 %v893, %v1025
  %v1090 = vadd.f32 %v894, %v1026
  %v1091 = vadd.f32 %v895, %v1027
  %v1092 = vadd.f32 %v896, %v1028
  %v1093 = vadd.f32 %v897, %v1029
  %v1094 = vadd.f32 %v898, %v1030
  %v1095 = vadd.f32 %v899, %v1031
  %v1096 = vadd.f32 %v900, %v1032
  %v1097 = vadd.f32 %v901, %v1033
  %v1098 = vadd.f32 %v902, %v1034
  %v1099 = vadd.f32 %v903, %v1035
  %v1100 = vadd.f32 %v904, %v1036
  %v1101 = vadd.f32 %v905, %v1037
  %v1102 = vadd.f32 %v906, %v1038
  %v1103 = vadd.f32 %v907, %v1039
  %v1104 = vadd.f32 %v908, %v1040
  %v1105 = vadd.f32 %v909, %v1041
  %v1106 = vadd.f32 %v910, %v1042
  %v1107 = vadd.f32 %v911, %v1043
  %v1108 = vadd.f32 %v912, %v1044
  %v1109 = vadd.f32 %v913, %v1045
  %v1110 = vadd.f32 %v914, %v1046
  %v1111 = vadd.f32 %v915, %v1047
  %v1112 = vadd.f32 %v916, %v1048
  %v1113 = vadd.f32 %v917, %v1049
  %v1114 = vadd.f32 %v918, %v1050
  %v1115 = vadd.f32 %v919, %v1051
  %v1116 = vadd.f32 %v920, %v1052
  %v1117 = vadd.f32 %v921, %v1053
  %v1118 = vadd.f32 %v922, %v1054
  %v1119 = vadd.f32 %v923, %v1055
  %v1120 = vadd.f32 %v924, %v1056
  %v1121 = vadd.f32 %v925, %v1057
  %v1122 = vadd.f32 %v926, %v1058
  %v1123 = vadd.f32 %v927, %v1059
  %v1124 = vadd.f32 %v928, %v1060
  %v1125 = vadd.f32 %v929, %v1061
  %v1126 = vadd.f32 %v930, %v1062
  %v1127 = vadd.f32 %v931, %v1063
  %v1128 = vadd.f32 %v932, %v1064
  %v1129 = vadd.f32 %v933, %v1065
  %v1130 = vadd.f32 %v934, %v1066
  %v1131 = vadd.f32 %v935, %v1067
  %v1132 = vadd.f32 %v936, %v1068
  %v1133 = vld [vmem:[#allocation2 + $0x2] sm:$0xff]
  %v1134 = vld [vmem:[#allocation2 + $0xa] sm:$0xff]
  %v1135 = vld [vmem:[#allocation2 + $0x1a] sm:$0xff]
  %v1136 = vld [vmem:[#allocation2 + $0x22] sm:$0xff]
  %v1137 = vld [vmem:[#allocation2 + $0x32] sm:$0xff]
  %v1138 = vld [vmem:[#allocation2 + $0x3a] sm:$0xff]
  %v1139 = vld [vmem:[#allocation2 + $0x4a] sm:$0xff]
  %v1140 = vld [vmem:[#allocation2 + $0x52] sm:$0xff]
  %v1141 = vld [vmem:[#allocation2 + $0x62] sm:$0xff]
  %v1142 = vld [vmem:[#allocation2 + $0x6a] sm:$0xff]
  %v1143 = vld [vmem:[#allocation2 + $0x7a] sm:$0xff]
  %v1144 = vld [vmem:[#allocation2 + $0x82] sm:$0xff]
  %v1145 = vld [vmem:[#allocation2 + $0x92] sm:$0xff]
  %v1146 = vld [vmem:[#allocation2 + $0x9a] sm:$0xff]
  %v1147 = vld [vmem:[#allocation2 + $0xaa] sm:$0xff]
  %v1148 = vld [vmem:[#allocation2 + $0xb2] sm:$0xff]
  %v1149 = vld [vmem:[#allocation2 + $0xc2] sm:$0xff]
  %v1150 = vld [vmem:[#allocation2 + $0xca] sm:$0xff]
  %v1151 = vld [vmem:[#allocation2 + $0xda] sm:$0xff]
  %v1152 = vld [vmem:[#allocation2 + $0xe2] sm:$0xff]
  %v1153 = vld [vmem:[#allocation2 + $0xf2] sm:$0xff]
  %v1154 = vld [vmem:[#allocation2 + $0xfa] sm:$0xff]
  %v1155 = vld [vmem:[#allocation2 + $0x10a] sm:$0xff]
  %v1156 = vld [vmem:[#allocation2 + $0x112] sm:$0xff]
  %v1157 = vld [vmem:[#allocation2 + $0x122] sm:$0xff]
  %v1158 = vld [vmem:[#allocation2 + $0x12a] sm:$0xff]
  %v1159 = vld [vmem:[#allocation2 + $0x13a] sm:$0xff]
  %v1160 = vld [vmem:[#allocation2 + $0x142] sm:$0xff]
  %v1161 = vld [vmem:[#allocation2 + $0x152] sm:$0xff]
  %v1162 = vld [vmem:[#allocation2 + $0x15a] sm:$0xff]
  %v1163 = vld [vmem:[#allocation2 + $0x16a] sm:$0xff]
  %v1164 = vld [vmem:[#allocation2 + $0x172] sm:$0xff]
  %v1165 = vld [vmem:[#allocation2 + $0x1b2] sm:$0xff]
  %v1166 = vld [vmem:[#allocation2 + $0x1ba] sm:$0xff]
  %v1167 = vld [vmem:[#allocation2 + $0x1ca] sm:$0xff]
  %v1168 = vld [vmem:[#allocation2 + $0x1d2] sm:$0xff]
  %v1169 = vld [vmem:[#allocation2 + $0x1e2] sm:$0xff]
  %v1170 = vld [vmem:[#allocation2 + $0x1ea] sm:$0xff]
  %v1171 = vld [vmem:[#allocation2 + $0x1fa] sm:$0xff]
  %v1172 = vld [vmem:[#allocation2 + $0x202] sm:$0xff]
  %v1173 = vld [vmem:[#allocation2 + $0x212] sm:$0xff]
  %v1174 = vld [vmem:[#allocation2 + $0x21a] sm:$0xff]
  %v1175 = vld [vmem:[#allocation2 + $0x22a] sm:$0xff]
  %v1176 = vld [vmem:[#allocation2 + $0x232] sm:$0xff]
  %v1177 = vld [vmem:[#allocation2 + $0x242] sm:$0xff]
  %v1178 = vld [vmem:[#allocation2 + $0x24a] sm:$0xff]
  %v1179 = vld [vmem:[#allocation2 + $0x25a] sm:$0xff]
  %v1180 = vld [vmem:[#allocation2 + $0x262] sm:$0xff]
  %v1181 = vld [vmem:[#allocation2 + $0x272] sm:$0xff]
  %v1182 = vld [vmem:[#allocation2 + $0x27a] sm:$0xff]
  %v1183 = vld [vmem:[#allocation2 + $0x28a] sm:$0xff]
  %v1184 = vld [vmem:[#allocation2 + $0x292] sm:$0xff]
  %v1185 = vld [vmem:[#allocation2 + $0x2a2] sm:$0xff]
  %v1186 = vld [vmem:[#allocation2 + $0x2aa] sm:$0xff]
  %v1187 = vld [vmem:[#allocation2 + $0x2ba] sm:$0xff]
  %v1188 = vld [vmem:[#allocation2 + $0x2c2] sm:$0xff]
  %v1189 = vld [vmem:[#allocation2 + $0x2d2] sm:$0xff]
  %v1190 = vld [vmem:[#allocation2 + $0x2da] sm:$0xff]
  %v1191 = vld [vmem:[#allocation2 + $0x2ea] sm:$0xff]
  %v1192 = vld [vmem:[#allocation2 + $0x2f2] sm:$0xff]
  %v1193 = vld [vmem:[#allocation2 + $0x302] sm:$0xff]
  %v1194 = vld [vmem:[#allocation2 + $0x30a] sm:$0xff]
  %v1195 = vld [vmem:[#allocation2 + $0x31a] sm:$0xff]
  %v1196 = vld [vmem:[#allocation2 + $0x322] sm:$0xff]
  %v1197 = vlaneseq
  %v1198 = vshrl.u32 %v1197, 7
  %v1199 = vsub.s32 2, %v1198
  %v1200 = vrot.slane %v802, %v1199
  %v1201 = vmul.f32 %v1133, %v1200
  %v1202 = vmul.f32 %v1134, %v1200
  %v1203 = vmul.f32 %v1135, %v1200
  %v1204 = vmul.f32 %v1136, %v1200
  %v1205 = vmul.f32 %v1137, %v1200
  %v1206 = vmul.f32 %v1138, %v1200
  %v1207 = vmul.f32 %v1139, %v1200
  %v1208 = vmul.f32 %v1140, %v1200
  %v1209 = vmul.f32 %v1141, %v1200
  %v1210 = vmul.f32 %v1142, %v1200
  %v1211 = vmul.f32 %v1143, %v1200
  %v1212 = vmul.f32 %v1144, %v1200
  %v1213 = vmul.f32 %v1145, %v1200
  %v1214 = vmul.f32 %v1146, %v1200
  %v1215 = vmul.f32 %v1147, %v1200
  %v1216 = vmul.f32 %v1148, %v1200
  %v1217 = vmul.f32 %v1149, %v1200
  %v1218 = vmul.f32 %v1150, %v1200
  %v1219 = vmul.f32 %v1151, %v1200
  %v1220 = vmul.f32 %v1152, %v1200
  %v1221 = vmul.f32 %v1153, %v1200
  %v1222 = vmul.f32 %v1154, %v1200
  %v1223 = vmul.f32 %v1155, %v1200
  %v1224 = vmul.f32 %v1156, %v1200
  %v1225 = vmul.f32 %v1157, %v1200
  %v1226 = vmul.f32 %v1158, %v1200
  %v1227 = vmul.f32 %v1159, %v1200
  %v1228 = vmul.f32 %v1160, %v1200
  %v1229 = vmul.f32 %v1161, %v1200
  %v1230 = vmul.f32 %v1162, %v1200
  %v1231 = vmul.f32 %v1163, %v1200
  %v1232 = vmul.f32 %v1164, %v1200
  %v1233 = vmul.f32 %v1165, %v1200
  %v1234 = vmul.f32 %v1166, %v1200
  %v1235 = vmul.f32 %v1167, %v1200
  %v1236 = vmul.f32 %v1168, %v1200
  %v1237 = vmul.f32 %v1169, %v1200
  %v1238 = vmul.f32 %v1170, %v1200
  %v1239 = vmul.f32 %v1171, %v1200
  %v1240 = vmul.f32 %v1172, %v1200
  %v1241 = vmul.f32 %v1173, %v1200
  %v1242 = vmul.f32 %v1174, %v1200
  %v1243 = vmul.f32 %v1175, %v1200
  %v1244 = vmul.f32 %v1176, %v1200
  %v1245 = vmul.f32 %v1177, %v1200
  %v1246 = vmul.f32 %v1178, %v1200
  %v1247 = vmul.f32 %v1179, %v1200
  %v1248 = vmul.f32 %v1180, %v1200
  %v1249 = vmul.f32 %v1181, %v1200
  %v1250 = vmul.f32 %v1182, %v1200
  %v1251 = vmul.f32 %v1183, %v1200
  %v1252 = vmul.f32 %v1184, %v1200
  %v1253 = vmul.f32 %v1185, %v1200
  %v1254 = vmul.f32 %v1186, %v1200
  %v1255 = vmul.f32 %v1187, %v1200
  %v1256 = vmul.f32 %v1188, %v1200
  %v1257 = vmul.f32 %v1189, %v1200
  %v1258 = vmul.f32 %v1190, %v1200
  %v1259 = vmul.f32 %v1191, %v1200
  %v1260 = vmul.f32 %v1192, %v1200
  %v1261 = vmul.f32 %v1193, %v1200
  %v1262 = vmul.f32 %v1194, %v1200
  %v1263 = vmul.f32 %v1195, %v1200
  %v1264 = vmul.f32 %v1196, %v1200
  %v1265 = vadd.f32 %v1069, %v1201
  %v1266 = vadd.f32 %v1070, %v1202
  %v1267 = vadd.f32 %v1071, %v1203
  %v1268 = vadd.f32 %v1072, %v1204
  %v1269 = vadd.f32 %v1073, %v1205
  %v1270 = vadd.f32 %v1074, %v1206
  %v1271 = vadd.f32 %v1075, %v1207
  %v1272 = vadd.f32 %v1076, %v1208
  %v1273 = vadd.f32 %v1077, %v1209
  %v1274 = vadd.f32 %v1078, %v1210
  %v1275 = vadd.f32 %v1079, %v1211
  %v1276 = vadd.f32 %v1080, %v1212
  %v1277 = vadd.f32 %v1081, %v1213
  %v1278 = vadd.f32 %v1082, %v1214
  %v1279 = vadd.f32 %v1083, %v1215
  %v1280 = vadd.f32 %v1084, %v1216
  %v1281 = vadd.f32 %v1085, %v1217
  %v1282 = vadd.f32 %v1086, %v1218
  %v1283 = vadd.f32 %v1087, %v1219
  %v1284 = vadd.f32 %v1088, %v1220
  %v1285 = vadd.f32 %v1089, %v1221
  %v1286 = vadd.f32 %v1090, %v1222
  %v1287 = vadd.f32 %v1091, %v1223
  %v1288 = vadd.f32 %v1092, %v1224
  %v1289 = vadd.f32 %v1093, %v1225
  %v1290 = vadd.f32 %v1094, %v1226
  %v1291 = vadd.f32 %v1095, %v1227
  %v1292 = vadd.f32 %v1096, %v1228
  %v1293 = vadd.f32 %v1097, %v1229
  %v1294 = vadd.f32 %v1098, %v1230
  %v1295 = vadd.f32 %v1099, %v1231
  %v1296 = vadd.f32 %v1100, %v1232
  %v1297 = vadd.f32 %v1101, %v1233
  %v1298 = vadd.f32 %v1102, %v1234
  %v1299 = vadd.f32 %v1103, %v1235
  %v1300 = vadd.f32 %v1104, %v1236
  %v1301 = vadd.f32 %v1105, %v1237
  %v1302 = vadd.f32 %v1106, %v1238
  %v1303 = vadd.f32 %v1107, %v1239
  %v1304 = vadd.f32 %v1108, %v1240
  %v1305 = vadd.f32 %v1109, %v1241
  %v1306 = vadd.f32 %v1110, %v1242
  %v1307 = vadd.f32 %v1111, %v1243
  %v1308 = vadd.f32 %v1112, %v1244
  %v1309 = vadd.f32 %v1113, %v1245
  %v1310 = vadd.f32 %v1114, %v1246
  %v1311 = vadd.f32 %v1115, %v1247
  %v1312 = vadd.f32 %v1116, %v1248
  %v1313 = vadd.f32 %v1117, %v1249
  %v1314 = vadd.f32 %v1118, %v1250
  %v1315 = vadd.f32 %v1119, %v1251
  %v1316 = vadd.f32 %v1120, %v1252
  %v1317 = vadd.f32 %v1121, %v1253
  %v1318 = vadd.f32 %v1122, %v1254
  %v1319 = vadd.f32 %v1123, %v1255
  %v1320 = vadd.f32 %v1124, %v1256
  %v1321 = vadd.f32 %v1125, %v1257
  %v1322 = vadd.f32 %v1126, %v1258
  %v1323 = vadd.f32 %v1127, %v1259
  %v1324 = vadd.f32 %v1128, %v1260
  %v1325 = vadd.f32 %v1129, %v1261
  %v1326 = vadd.f32 %v1130, %v1262
  %v1327 = vadd.f32 %v1131, %v1263
  %v1328 = vadd.f32 %v1132, %v1264
  %v1329 = vld [vmem:[%s737] sm:$0xff]
  %v1330 = vld [vmem:[%s737 + $0x8] sm:$0xff]
  %v1331 = vld [vmem:[%s737 + $0x18] sm:$0xff]
  %v1332 = vld [vmem:[%s737 + $0x20] sm:$0xff]
  %v1333 = vld [vmem:[%s737 + $0x30] sm:$0xff]
  %v1334 = vld [vmem:[%s737 + $0x38] sm:$0xff]
  %v1335 = vld [vmem:[%s737 + $0x48] sm:$0xff]
  %v1336 = vld [vmem:[%s737 + $0x50] sm:$0xff]
  %v1337 = vld [vmem:[%s737 + $0x60] sm:$0xff]
  %v1338 = vld [vmem:[%s737 + $0x68] sm:$0xff]
  %v1339 = vld [vmem:[%s737 + $0x78] sm:$0xff]
  %v1340 = vld [vmem:[%s737 + $0x80] sm:$0xff]
  %v1341 = vld [vmem:[%s737 + $0x90] sm:$0xff]
  %v1342 = vld [vmem:[%s737 + $0x98] sm:$0xff]
  %v1343 = vld [vmem:[%s737 + $0xa8] sm:$0xff]
  %v1344 = vld [vmem:[%s737 + $0xb0] sm:$0xff]
  %v1345 = vld [vmem:[%s737 + $0xc0] sm:$0xff]
  %v1346 = vld [vmem:[%s737 + $0xc8] sm:$0xff]
  %v1347 = vld [vmem:[%s737 + $0xd8] sm:$0xff]
  %v1348 = vld [vmem:[%s737 + $0xe0] sm:$0xff]
  %v1349 = vld [vmem:[%s737 + $0xf0] sm:$0xff]
  %v1350 = vld [vmem:[%s737 + $0xf8] sm:$0xff]
  %v1351 = vld [vmem:[%s737 + $0x108] sm:$0xff]
  %v1352 = vld [vmem:[%s737 + $0x110] sm:$0xff]
  %v1353 = vld [vmem:[%s737 + $0x120] sm:$0xff]
  %v1354 = vld [vmem:[%s737 + $0x128] sm:$0xff]
  %v1355 = vld [vmem:[%s737 + $0x138] sm:$0xff]
  %v1356 = vld [vmem:[%s737 + $0x140] sm:$0xff]
  %v1357 = vld [vmem:[%s737 + $0x150] sm:$0xff]
  %v1358 = vld [vmem:[%s737 + $0x158] sm:$0xff]
  %v1359 = vld [vmem:[%s737 + $0x168] sm:$0xff]
  %v1360 = vld [vmem:[%s737 + $0x170] sm:$0xff]
  %v1361 = vld [vmem:[%s737 + $0x1b0] sm:$0xff]
  %v1362 = vld [vmem:[%s737 + $0x1b8] sm:$0xff]
  %v1363 = vld [vmem:[%s737 + $0x1c8] sm:$0xff]
  %v1364 = vld [vmem:[%s737 + $0x1d0] sm:$0xff]
  %v1365 = vld [vmem:[%s737 + $0x1e0] sm:$0xff]
  %v1366 = vld [vmem:[%s737 + $0x1e8] sm:$0xff]
  %v1367 = vld [vmem:[%s737 + $0x1f8] sm:$0xff]
  %v1368 = vld [vmem:[%s737 + $0x200] sm:$0xff]
  %v1369 = vld [vmem:[%s737 + $0x210] sm:$0xff]
  %v1370 = vld [vmem:[%s737 + $0x218] sm:$0xff]
  %v1371 = vld [vmem:[%s737 + $0x228] sm:$0xff]
  %v1372 = vld [vmem:[%s737 + $0x230] sm:$0xff]
  %v1373 = vld [vmem:[%s737 + $0x240] sm:$0xff]
  %v1374 = vld [vmem:[%s737 + $0x248] sm:$0xff]
  %v1375 = vld [vmem:[%s737 + $0x258] sm:$0xff]
  %v1376 = vld [vmem:[%s737 + $0x260] sm:$0xff]
  %v1377 = vld [vmem:[%s737 + $0x270] sm:$0xff]
  %v1378 = vld [vmem:[%s737 + $0x278] sm:$0xff]
  %v1379 = vld [vmem:[%s737 + $0x288] sm:$0xff]
  %v1380 = vld [vmem:[%s737 + $0x290] sm:$0xff]
  %v1381 = vld [vmem:[%s737 + $0x2a0] sm:$0xff]
  %v1382 = vld [vmem:[%s737 + $0x2a8] sm:$0xff]
  %v1383 = vld [vmem:[%s737 + $0x2b8] sm:$0xff]
  %v1384 = vld [vmem:[%s737 + $0x2c0] sm:$0xff]
  %v1385 = vld [vmem:[%s737 + $0x2d0] sm:$0xff]
  %v1386 = vld [vmem:[%s737 + $0x2d8] sm:$0xff]
  %v1387 = vld [vmem:[%s737 + $0x2e8] sm:$0xff]
  %v1388 = vld [vmem:[%s737 + $0x2f0] sm:$0xff]
  %v1389 = vld [vmem:[%s737 + $0x300] sm:$0xff]
  %v1390 = vld [vmem:[%s737 + $0x308] sm:$0xff]
  %v1391 = vld [vmem:[%s737 + $0x318] sm:$0xff]
  %v1392 = vld [vmem:[%s737 + $0x320] sm:$0xff]
  %v1393 = vlaneseq
  %v1394 = vshrl.u32 %v1393, 7
  %v1395 = vsub.s32 0, %v1394
  %v1396 = vrot.slane %v803, %v1395
  %v1397 = vmul.f32 %v1329, %v1396
  %v1398 = vmul.f32 %v1330, %v1396
  %v1399 = vmul.f32 %v1331, %v1396
  %v1400 = vmul.f32 %v1332, %v1396
  %v1401 = vmul.f32 %v1333, %v1396
  %v1402 = vmul.f32 %v1334, %v1396
  %v1403 = vmul.f32 %v1335, %v1396
  %v1404 = vmul.f32 %v1336, %v1396
  %v1405 = vmul.f32 %v1337, %v1396
  %v1406 = vmul.f32 %v1338, %v1396
  %v1407 = vmul.f32 %v1339, %v1396
  %v1408 = vmul.f32 %v1340, %v1396
  %v1409 = vmul.f32 %v1341, %v1396
  %v1410 = vmul.f32 %v1342, %v1396
  %v1411 = vmul.f32 %v1343, %v1396
  %v1412 = vmul.f32 %v1344, %v1396
  %v1413 = vmul.f32 %v1345, %v1396
  %v1414 = vmul.f32 %v1346, %v1396
  %v1415 = vmul.f32 %v1347, %v1396
  %v1416 = vmul.f32 %v1348, %v1396
  %v1417 = vmul.f32 %v1349, %v1396
  %v1418 = vmul.f32 %v1350, %v1396
  %v1419 = vmul.f32 %v1351, %v1396
  %v1420 = vmul.f32 %v1352, %v1396
  %v1421 = vmul.f32 %v1353, %v1396
  %v1422 = vmul.f32 %v1354, %v1396
  %v1423 = vmul.f32 %v1355, %v1396
  %v1424 = vmul.f32 %v1356, %v1396
  %v1425 = vmul.f32 %v1357, %v1396
  %v1426 = vmul.f32 %v1358, %v1396
  %v1427 = vmul.f32 %v1359, %v1396
  %v1428 = vmul.f32 %v1360, %v1396
  %v1429 = vmul.f32 %v1361, %v1396
  %v1430 = vmul.f32 %v1362, %v1396
  %v1431 = vmul.f32 %v1363, %v1396
  %v1432 = vmul.f32 %v1364, %v1396
  %v1433 = vmul.f32 %v1365, %v1396
  %v1434 = vmul.f32 %v1366, %v1396
  %v1435 = vmul.f32 %v1367, %v1396
  %v1436 = vmul.f32 %v1368, %v1396
  %v1437 = vmul.f32 %v1369, %v1396
  %v1438 = vmul.f32 %v1370, %v1396
  %v1439 = vmul.f32 %v1371, %v1396
  %v1440 = vmul.f32 %v1372, %v1396
  %v1441 = vmul.f32 %v1373, %v1396
  %v1442 = vmul.f32 %v1374, %v1396
  %v1443 = vmul.f32 %v1375, %v1396
  %v1444 = vmul.f32 %v1376, %v1396
  %v1445 = vmul.f32 %v1377, %v1396
  %v1446 = vmul.f32 %v1378, %v1396
  %v1447 = vmul.f32 %v1379, %v1396
  %v1448 = vmul.f32 %v1380, %v1396
  %v1449 = vmul.f32 %v1381, %v1396
  %v1450 = vmul.f32 %v1382, %v1396
  %v1451 = vmul.f32 %v1383, %v1396
  %v1452 = vmul.f32 %v1384, %v1396
  %v1453 = vmul.f32 %v1385, %v1396
  %v1454 = vmul.f32 %v1386, %v1396
  %v1455 = vmul.f32 %v1387, %v1396
  %v1456 = vmul.f32 %v1388, %v1396
  %v1457 = vmul.f32 %v1389, %v1396
  %v1458 = vmul.f32 %v1390, %v1396
  %v1459 = vmul.f32 %v1391, %v1396
  %v1460 = vmul.f32 %v1392, %v1396
  %v1461 = vadd.f32 %v1265, %v1397
  %v1462 = vadd.f32 %v1266, %v1398
  %v1463 = vadd.f32 %v1267, %v1399
  %v1464 = vadd.f32 %v1268, %v1400
  %v1465 = vadd.f32 %v1269, %v1401
  %v1466 = vadd.f32 %v1270, %v1402
  %v1467 = vadd.f32 %v1271, %v1403
  %v1468 = vadd.f32 %v1272, %v1404
  %v1469 = vadd.f32 %v1273, %v1405
  %v1470 = vadd.f32 %v1274, %v1406
  %v1471 = vadd.f32 %v1275, %v1407
  %v1472 = vadd.f32 %v1276, %v1408
  %v1473 = vadd.f32 %v1277, %v1409
  %v1474 = vadd.f32 %v1278, %v1410
  %v1475 = vadd.f32 %v1279, %v1411
  %v1476 = vadd.f32 %v1280, %v1412
  %v1477 = vadd.f32 %v1281, %v1413
  %v1478 = vadd.f32 %v1282, %v1414
  %v1479 = vadd.f32 %v1283, %v1415
  %v1480 = vadd.f32 %v1284, %v1416
  %v1481 = vadd.f32 %v1285, %v1417
  %v1482 = vadd.f32 %v1286, %v1418
  %v1483 = vadd.f32 %v1287, %v1419
  %v1484 = vadd.f32 %v1288, %v1420
  %v1485 = vadd.f32 %v1289, %v1421
  %v1486 = vadd.f32 %v1290, %v1422
  %v1487 = vadd.f32 %v1291, %v1423
  %v1488 = vadd.f32 %v1292, %v1424
  %v1489 = vadd.f32 %v1293, %v1425
  %v1490 = vadd.f32 %v1294, %v1426
  %v1491 = vadd.f32 %v1295, %v1427
  %v1492 = vadd.f32 %v1296, %v1428
  %v1493 = vadd.f32 %v1297, %v1429
  %v1494 = vadd.f32 %v1298, %v1430
  %v1495 = vadd.f32 %v1299, %v1431
  %v1496 = vadd.f32 %v1300, %v1432
  %v1497 = vadd.f32 %v1301, %v1433
  %v1498 = vadd.f32 %v1302, %v1434
  %v1499 = vadd.f32 %v1303, %v1435
  %v1500 = vadd.f32 %v1304, %v1436
  %v1501 = vadd.f32 %v1305, %v1437
  %v1502 = vadd.f32 %v1306, %v1438
  %v1503 = vadd.f32 %v1307, %v1439
  %v1504 = vadd.f32 %v1308, %v1440
  %v1505 = vadd.f32 %v1309, %v1441
  %v1506 = vadd.f32 %v1310, %v1442
  %v1507 = vadd.f32 %v1311, %v1443
  %v1508 = vadd.f32 %v1312, %v1444
  %v1509 = vadd.f32 %v1313, %v1445
  %v1510 = vadd.f32 %v1314, %v1446
  %v1511 = vadd.f32 %v1315, %v1447
  %v1512 = vadd.f32 %v1316, %v1448
  %v1513 = vadd.f32 %v1317, %v1449
  %v1514 = vadd.f32 %v1318, %v1450
  %v1515 = vadd.f32 %v1319, %v1451
  %v1516 = vadd.f32 %v1320, %v1452
  %v1517 = vadd.f32 %v1321, %v1453
  %v1518 = vadd.f32 %v1322, %v1454
  %v1519 = vadd.f32 %v1323, %v1455
  %v1520 = vadd.f32 %v1324, %v1456
  %v1521 = vadd.f32 %v1325, %v1457
  %v1522 = vadd.f32 %v1326, %v1458
  %v1523 = vadd.f32 %v1327, %v1459
  %v1524 = vadd.f32 %v1328, %v1460
  %v1525 = vld [vmem:[%s737 + $0x1] sm:$0xff]
  %v1526 = vld [vmem:[%s737 + $0x9] sm:$0xff]
  %v1527 = vld [vmem:[%s737 + $0x19] sm:$0xff]
  %v1528 = vld [vmem:[%s737 + $0x21] sm:$0xff]
  %v1529 = vld [vmem:[%s737 + $0x31] sm:$0xff]
  %v1530 = vld [vmem:[%s737 + $0x39] sm:$0xff]
  %v1531 = vld [vmem:[%s737 + $0x49] sm:$0xff]
  %v1532 = vld [vmem:[%s737 + $0x51] sm:$0xff]
  %v1533 = vld [vmem:[%s737 + $0x61] sm:$0xff]
  %v1534 = vld [vmem:[%s737 + $0x69] sm:$0xff]
  %v1535 = vld [vmem:[%s737 + $0x79] sm:$0xff]
  %v1536 = vld [vmem:[%s737 + $0x81] sm:$0xff]
  %v1537 = vld [vmem:[%s737 + $0x91] sm:$0xff]
  %v1538 = vld [vmem:[%s737 + $0x99] sm:$0xff]
  %v1539 = vld [vmem:[%s737 + $0xa9] sm:$0xff]
  %v1540 = vld [vmem:[%s737 + $0xb1] sm:$0xff]
  %v1541 = vld [vmem:[%s737 + $0xc1] sm:$0xff]
  %v1542 = vld [vmem:[%s737 + $0xc9] sm:$0xff]
  %v1543 = vld [vmem:[%s737 + $0xd9] sm:$0xff]
  %v1544 = vld [vmem:[%s737 + $0xe1] sm:$0xff]
  %v1545 = vld [vmem:[%s737 + $0xf1] sm:$0xff]
  %v1546 = vld [vmem:[%s737 + $0xf9] sm:$0xff]
  %v1547 = vld [vmem:[%s737 + $0x109] sm:$0xff]
  %v1548 = vld [vmem:[%s737 + $0x111] sm:$0xff]
  %v1549 = vld [vmem:[%s737 + $0x121] sm:$0xff]
  %v1550 = vld [vmem:[%s737 + $0x129] sm:$0xff]
  %v1551 = vld [vmem:[%s737 + $0x139] sm:$0xff]
  %v1552 = vld [vmem:[%s737 + $0x141] sm:$0xff]
  %v1553 = vld [vmem:[%s737 + $0x151] sm:$0xff]
  %v1554 = vld [vmem:[%s737 + $0x159] sm:$0xff]
  %v1555 = vld [vmem:[%s737 + $0x169] sm:$0xff]
  %v1556 = vld [vmem:[%s737 + $0x171] sm:$0xff]
  %v1557 = vld [vmem:[%s737 + $0x1b1] sm:$0xff]
  %v1558 = vld [vmem:[%s737 + $0x1b9] sm:$0xff]
  %v1559 = vld [vmem:[%s737 + $0x1c9] sm:$0xff]
  %v1560 = vld [vmem:[%s737 + $0x1d1] sm:$0xff]
  %v1561 = vld [vmem:[%s737 + $0x1e1] sm:$0xff]
  %v1562 = vld [vmem:[%s737 + $0x1e9] sm:$0xff]
  %v1563 = vld [vmem:[%s737 + $0x1f9] sm:$0xff]
  %v1564 = vld [vmem:[%s737 + $0x201] sm:$0xff]
  %v1565 = vld [vmem:[%s737 + $0x211] sm:$0xff]
  %v1566 = vld [vmem:[%s737 + $0x219] sm:$0xff]
  %v1567 = vld [vmem:[%s737 + $0x229] sm:$0xff]
  %v1568 = vld [vmem:[%s737 + $0x231] sm:$0xff]
  %v1569 = vld [vmem:[%s737 + $0x241] sm:$0xff]
  %v1570 = vld [vmem:[%s737 + $0x249] sm:$0xff]
  %v1571 = vld [vmem:[%s737 + $0x259] sm:$0xff]
  %v1572 = vld [vmem:[%s737 + $0x261] sm:$0xff]
  %v1573 = vld [vmem:[%s737 + $0x271] sm:$0xff]
  %v1574 = vld [vmem:[%s737 + $0x279] sm:$0xff]
  %v1575 = vld [vmem:[%s737 + $0x289] sm:$0xff]
  %v1576 = vld [vmem:[%s737 + $0x291] sm:$0xff]
  %v1577 = vld [vmem:[%s737 + $0x2a1] sm:$0xff]
  %v1578 = vld [vmem:[%s737 + $0x2a9] sm:$0xff]
  %v1579 = vld [vmem:[%s737 + $0x2b9] sm:$0xff]
  %v1580 = vld [vmem:[%s737 + $0x2c1] sm:$0xff]
  %v1581 = vld [vmem:[%s737 + $0x2d1] sm:$0xff]
  %v1582 = vld [vmem:[%s737 + $0x2d9] sm:$0xff]
  %v1583 = vld [vmem:[%s737 + $0x2e9] sm:$0xff]
  %v1584 = vld [vmem:[%s737 + $0x2f1] sm:$0xff]
  %v1585 = vld [vmem:[%s737 + $0x301] sm:$0xff]
  %v1586 = vld [vmem:[%s737 + $0x309] sm:$0xff]
  %v1587 = vld [vmem:[%s737 + $0x319] sm:$0xff]
  %v1588 = vld [vmem:[%s737 + $0x321] sm:$0xff]
  %v1589 = vlaneseq
  %v1590 = vshrl.u32 %v1589, 7
  %v1591 = vsub.s32 1, %v1590
  %v1592 = vrot.slane %v803, %v1591
  %v1593 = vmul.f32 %v1525, %v1592
  %v1594 = vmul.f32 %v1526, %v1592
  %v1595 = vmul.f32 %v1527, %v1592
  %v1596 = vmul.f32 %v1528, %v1592
  %v1597 = vmul.f32 %v1529, %v1592
  %v1598 = vmul.f32 %v1530, %v1592
  %v1599 = vmul.f32 %v1531, %v1592
  %v1600 = vmul.f32 %v1532, %v1592
  %v1601 = vmul.f32 %v1533, %v1592
  %v1602 = vmul.f32 %v1534, %v1592
  %v1603 = vmul.f32 %v1535, %v1592
  %v1604 = vmul.f32 %v1536, %v1592
  %v1605 = vmul.f32 %v1537, %v1592
  %v1606 = vmul.f32 %v1538, %v1592
  %v1607 = vmul.f32 %v1539, %v1592
  %v1608 = vmul.f32 %v1540, %v1592
  %v1609 = vmul.f32 %v1541, %v1592
  %v1610 = vmul.f32 %v1542, %v1592
  %v1611 = vmul.f32 %v1543, %v1592
  %v1612 = vmul.f32 %v1544, %v1592
  %v1613 = vmul.f32 %v1545, %v1592
  %v1614 = vmul.f32 %v1546, %v1592
  %v1615 = vmul.f32 %v1547, %v1592
  %v1616 = vmul.f32 %v1548, %v1592
  %v1617 = vmul.f32 %v1549, %v1592
  %v1618 = vmul.f32 %v1550, %v1592
  %v1619 = vmul.f32 %v1551, %v1592
  %v1620 = vmul.f32 %v1552, %v1592
  %v1621 = vmul.f32 %v1553, %v1592
  %v1622 = vmul.f32 %v1554, %v1592
  %v1623 = vmul.f32 %v1555, %v1592
  %v1624 = vmul.f32 %v1556, %v1592
  %v1625 = vmul.f32 %v1557, %v1592
  %v1626 = vmul.f32 %v1558, %v1592
  %v1627 = vmul.f32 %v1559, %v1592
  %v1628 = vmul.f32 %v1560, %v1592
  %v1629 = vmul.f32 %v1561, %v1592
  %v1630 = vmul.f32 %v1562, %v1592
  %v1631 = vmul.f32 %v1563, %v1592
  %v1632 = vmul.f32 %v1564, %v1592
  %v1633 = vmul.f32 %v1565, %v1592
  %v1634 = vmul.f32 %v1566, %v1592
  %v1635 = vmul.f32 %v1567, %v1592
  %v1636 = vmul.f32 %v1568, %v1592
  %v1637 = vmul.f32 %v1569, %v1592
  %v1638 = vmul.f32 %v1570, %v1592
  %v1639 = vmul.f32 %v1571, %v1592
  %v1640 = vmul.f32 %v1572, %v1592
  %v1641 = vmul.f32 %v1573, %v1592
  %v1642 = vmul.f32 %v1574, %v1592
  %v1643 = vmul.f32 %v1575, %v1592
  %v1644 = vmul.f32 %v1576, %v1592
  %v1645 = vmul.f32 %v1577, %v1592
  %v1646 = vmul.f32 %v1578, %v1592
  %v1647 = vmul.f32 %v1579, %v1592
  %v1648 = vmul.f32 %v1580, %v1592
  %v1649 = vmul.f32 %v1581, %v1592
  %v1650 = vmul.f32 %v1582, %v1592
  %v1651 = vmul.f32 %v1583, %v1592
  %v1652 = vmul.f32 %v1584, %v1592
  %v1653 = vmul.f32 %v1585, %v1592
  %v1654 = vmul.f32 %v1586, %v1592
  %v1655 = vmul.f32 %v1587, %v1592
  %v1656 = vmul.f32 %v1588, %v1592
  %v1657 = vadd.f32 %v1461, %v1593
  %v1658 = vadd.f32 %v1462, %v1594
  %v1659 = vadd.f32 %v1463, %v1595
  %v1660 = vadd.f32 %v1464, %v1596
  %v1661 = vadd.f32 %v1465, %v1597
  %v1662 = vadd.f32 %v1466, %v1598
  %v1663 = vadd.f32 %v1467, %v1599
  %v1664 = vadd.f32 %v1468, %v1600
  %v1665 = vadd.f32 %v1469, %v1601
  %v1666 = vadd.f32 %v1470, %v1602
  %v1667 = vadd.f32 %v1471, %v1603
  %v1668 = vadd.f32 %v1472, %v1604
  %v1669 = vadd.f32 %v1473, %v1605
  %v1670 = vadd.f32 %v1474, %v1606
  %v1671 = vadd.f32 %v1475, %v1607
  %v1672 = vadd.f32 %v1476, %v1608
  %v1673 = vadd.f32 %v1477, %v1609
  %v1674 = vadd.f32 %v1478, %v1610
  %v1675 = vadd.f32 %v1479, %v1611
  %v1676 = vadd.f32 %v1480, %v1612
  %v1677 = vadd.f32 %v1481, %v1613
  %v1678 = vadd.f32 %v1482, %v1614
  %v1679 = vadd.f32 %v1483, %v1615
  %v1680 = vadd.f32 %v1484, %v1616
  %v1681 = vadd.f32 %v1485, %v1617
  %v1682 = vadd.f32 %v1486, %v1618
  %v1683 = vadd.f32 %v1487, %v1619
  %v1684 = vadd.f32 %v1488, %v1620
  %v1685 = vadd.f32 %v1489, %v1621
  %v1686 = vadd.f32 %v1490, %v1622
  %v1687 = vadd.f32 %v1491, %v1623
  %v1688 = vadd.f32 %v1492, %v1624
  %v1689 = vadd.f32 %v1493, %v1625
  %v1690 = vadd.f32 %v1494, %v1626
  %v1691 = vadd.f32 %v1495, %v1627
  %v1692 = vadd.f32 %v1496, %v1628
  %v1693 = vadd.f32 %v1497, %v1629
  %v1694 = vadd.f32 %v1498, %v1630
  %v1695 = vadd.f32 %v1499, %v1631
  %v1696 = vadd.f32 %v1500, %v1632
  %v1697 = vadd.f32 %v1501, %v1633
  %v1698 = vadd.f32 %v1502, %v1634
  %v1699 = vadd.f32 %v1503, %v1635
  %v1700 = vadd.f32 %v1504, %v1636
  %v1701 = vadd.f32 %v1505, %v1637
  %v1702 = vadd.f32 %v1506, %v1638
  %v1703 = vadd.f32 %v1507, %v1639
  %v1704 = vadd.f32 %v1508, %v1640
  %v1705 = vadd.f32 %v1509, %v1641
  %v1706 = vadd.f32 %v1510, %v1642
  %v1707 = vadd.f32 %v1511, %v1643
  %v1708 = vadd.f32 %v1512, %v1644
  %v1709 = vadd.f32 %v1513, %v1645
  %v1710 = vadd.f32 %v1514, %v1646
  %v1711 = vadd.f32 %v1515, %v1647
  %v1712 = vadd.f32 %v1516, %v1648
  %v1713 = vadd.f32 %v1517, %v1649
  %v1714 = vadd.f32 %v1518, %v1650
  %v1715 = vadd.f32 %v1519, %v1651
  %v1716 = vadd.f32 %v1520, %v1652
  %v1717 = vadd.f32 %v1521, %v1653
  %v1718 = vadd.f32 %v1522, %v1654
  %v1719 = vadd.f32 %v1523, %v1655
  %v1720 = vadd.f32 %v1524, %v1656
  %v1721 = vld [vmem:[%s737 + $0x2] sm:$0xff]
  %v1722 = vld [vmem:[%s737 + $0xa] sm:$0xff]
  %v1723 = vld [vmem:[%s737 + $0x1a] sm:$0xff]
  %v1724 = vld [vmem:[%s737 + $0x22] sm:$0xff]
  %v1725 = vld [vmem:[%s737 + $0x32] sm:$0xff]
  %v1726 = vld [vmem:[%s737 + $0x3a] sm:$0xff]
  %v1727 = vld [vmem:[%s737 + $0x4a] sm:$0xff]
  %v1728 = vld [vmem:[%s737 + $0x52] sm:$0xff]
  %v1729 = vld [vmem:[%s737 + $0x62] sm:$0xff]
  %v1730 = vld [vmem:[%s737 + $0x6a] sm:$0xff]
  %v1731 = vld [vmem:[%s737 + $0x7a] sm:$0xff]
  %v1732 = vld [vmem:[%s737 + $0x82] sm:$0xff]
  %v1733 = vld [vmem:[%s737 + $0x92] sm:$0xff]
  %v1734 = vld [vmem:[%s737 + $0x9a] sm:$0xff]
  %v1735 = vld [vmem:[%s737 + $0xaa] sm:$0xff]
  %v1736 = vld [vmem:[%s737 + $0xb2] sm:$0xff]
  %v1737 = vld [vmem:[%s737 + $0xc2] sm:$0xff]
  %v1738 = vld [vmem:[%s737 + $0xca] sm:$0xff]
  %v1739 = vld [vmem:[%s737 + $0xda] sm:$0xff]
  %v1740 = vld [vmem:[%s737 + $0xe2] sm:$0xff]
  %v1741 = vld [vmem:[%s737 + $0xf2] sm:$0xff]
  %v1742 = vld [vmem:[%s737 + $0xfa] sm:$0xff]
  %v1743 = vld [vmem:[%s737 + $0x10a] sm:$0xff]
  %v1744 = vld [vmem:[%s737 + $0x112] sm:$0xff]
  %v1745 = vld [vmem:[%s737 + $0x122] sm:$0xff]
  %v1746 = vld [vmem:[%s737 + $0x12a] sm:$0xff]
  %v1747 = vld [vmem:[%s737 + $0x13a] sm:$0xff]
  %v1748 = vld [vmem:[%s737 + $0x142] sm:$0xff]
  %v1749 = vld [vmem:[%s737 + $0x152] sm:$0xff]
  %v1750 = vld [vmem:[%s737 + $0x15a] sm:$0xff]
  %v1751 = vld [vmem:[%s737 + $0x16a] sm:$0xff]
  %v1752 = vld [vmem:[%s737 + $0x172] sm:$0xff]
  %v1753 = vld [vmem:[%s737 + $0x1b2] sm:$0xff]
  %v1754 = vld [vmem:[%s737 + $0x1ba] sm:$0xff]
  %v1755 = vld [vmem:[%s737 + $0x1ca] sm:$0xff]
  %v1756 = vld [vmem:[%s737 + $0x1d2] sm:$0xff]
  %v1757 = vld [vmem:[%s737 + $0x1e2] sm:$0xff]
  %v1758 = vld [vmem:[%s737 + $0x1ea] sm:$0xff]
  %v1759 = vld [vmem:[%s737 + $0x1fa] sm:$0xff]
  %v1760 = vld [vmem:[%s737 + $0x202] sm:$0xff]
  %v1761 = vld [vmem:[%s737 + $0x212] sm:$0xff]
  %v1762 = vld [vmem:[%s737 + $0x21a] sm:$0xff]
  %v1763 = vld [vmem:[%s737 + $0x22a] sm:$0xff]
  %v1764 = vld [vmem:[%s737 + $0x232] sm:$0xff]
  %v1765 = vld [vmem:[%s737 + $0x242] sm:$0xff]
  %v1766 = vld [vmem:[%s737 + $0x24a] sm:$0xff]
  %v1767 = vld [vmem:[%s737 + $0x25a] sm:$0xff]
  %v1768 = vld [vmem:[%s737 + $0x262] sm:$0xff]
  %v1769 = vld [vmem:[%s737 + $0x272] sm:$0xff]
  %v1770 = vld [vmem:[%s737 + $0x27a] sm:$0xff]
  %v1771 = vld [vmem:[%s737 + $0x28a] sm:$0xff]
  %v1772 = vld [vmem:[%s737 + $0x292] sm:$0xff]
  %v1773 = vld [vmem:[%s737 + $0x2a2] sm:$0xff]
  %v1774 = vld [vmem:[%s737 + $0x2aa] sm:$0xff]
  %v1775 = vld [vmem:[%s737 + $0x2ba] sm:$0xff]
  %v1776 = vld [vmem:[%s737 + $0x2c2] sm:$0xff]
  %v1777 = vld [vmem:[%s737 + $0x2d2] sm:$0xff]
  %v1778 = vld [vmem:[%s737 + $0x2da] sm:$0xff]
  %v1779 = vld [vmem:[%s737 + $0x2ea] sm:$0xff]
  %v1780 = vld [vmem:[%s737 + $0x2f2] sm:$0xff]
  %v1781 = vld [vmem:[%s737 + $0x302] sm:$0xff]
  %v1782 = vld [vmem:[%s737 + $0x30a] sm:$0xff]
  %v1783 = vld [vmem:[%s737 + $0x31a] sm:$0xff]
  %v1784 = vld [vmem:[%s737 + $0x322] sm:$0xff]
  %v1785 = vlaneseq
  %v1786 = vshrl.u32 %v1785, 7
  %v1787 = vsub.s32 2, %v1786
  %v1788 = vrot.slane %v803, %v1787
  %v1789 = vmul.f32 %v1721, %v1788
  %v1790 = vmul.f32 %v1722, %v1788
  %v1791 = vmul.f32 %v1723, %v1788
  %v1792 = vmul.f32 %v1724, %v1788
  %v1793 = vmul.f32 %v1725, %v1788
  %v1794 = vmul.f32 %v1726, %v1788
  %v1795 = vmul.f32 %v1727, %v1788
  %v1796 = vmul.f32 %v1728, %v1788
  %v1797 = vmul.f32 %v1729, %v1788
  %v1798 = vmul.f32 %v1730, %v1788
  %v1799 = vmul.f32 %v1731, %v1788
  %v1800 = vmul.f32 %v1732, %v1788
  %v1801 = vmul.f32 %v1733, %v1788
  %v1802 = vmul.f32 %v1734, %v1788
  %v1803 = vmul.f32 %v1735, %v1788
  %v1804 = vmul.f32 %v1736, %v1788
  %v1805 = vmul.f32 %v1737, %v1788
  %v1806 = vmul.f32 %v1738, %v1788
  %v1807 = vmul.f32 %v1739, %v1788
  %v1808 = vmul.f32 %v1740, %v1788
  %v1809 = vmul.f32 %v1741, %v1788
  %v1810 = vmul.f32 %v1742, %v1788
  %v1811 = vmul.f32 %v1743, %v1788
  %v1812 = vmul.f32 %v1744, %v1788
  %v1813 = vmul.f32 %v1745, %v1788
  %v1814 = vmul.f32 %v1746, %v1788
  %v1815 = vmul.f32 %v1747, %v1788
  %v1816 = vmul.f32 %v1748, %v1788
  %v1817 = vmul.f32 %v1749, %v1788
  %v1818 = vmul.f32 %v1750, %v1788
  %v1819 = vmul.f32 %v1751, %v1788
  %v1820 = vmul.f32 %v1752, %v1788
  %v1821 = vmul.f32 %v1753, %v1788
  %v1822 = vmul.f32 %v1754, %v1788
  %v1823 = vmul.f32 %v1755, %v1788
  %v1824 = vmul.f32 %v1756, %v1788
  %v1825 = vmul.f32 %v1757, %v1788
  %v1826 = vmul.f32 %v1758, %v1788
  %v1827 = vmul.f32 %v1759, %v1788
  %v1828 = vmul.f32 %v1760, %v1788
  %v1829 = vmul.f32 %v1761, %v1788
  %v1830 = vmul.f32 %v1762, %v1788
  %v1831 = vmul.f32 %v1763, %v1788
  %v1832 = vmul.f32 %v1764, %v1788
  %v1833 = vmul.f32 %v1765, %v1788
  %v1834 = vmul.f32 %v1766, %v1788
  %v1835 = vmul.f32 %v1767, %v1788
  %v1836 = vmul.f32 %v1768, %v1788
  %v1837 = vmul.f32 %v1769, %v1788
  %v1838 = vmul.f32 %v1770, %v1788
  %v1839 = vmul.f32 %v1771, %v1788
  %v1840 = vmul.f32 %v1772, %v1788
  %v1841 = vmul.f32 %v1773, %v1788
  %v1842 = vmul.f32 %v1774, %v1788
  %v1843 = vmul.f32 %v1775, %v1788
  %v1844 = vmul.f32 %v1776, %v1788
  %v1845 = vmul.f32 %v1777, %v1788
  %v1846 = vmul.f32 %v1778, %v1788
  %v1847 = vmul.f32 %v1779, %v1788
  %v1848 = vmul.f32 %v1780, %v1788
  %v1849 = vmul.f32 %v1781, %v1788
  %v1850 = vmul.f32 %v1782, %v1788
  %v1851 = vmul.f32 %v1783, %v1788
  %v1852 = vmul.f32 %v1784, %v1788
  %v1853 = vadd.f32 %v1657, %v1789
  %v1854 = vadd.f32 %v1658, %v1790
  %v1855 = vadd.f32 %v1659, %v1791
  %v1856 = vadd.f32 %v1660, %v1792
  %v1857 = vadd.f32 %v1661, %v1793
  %v1858 = vadd.f32 %v1662, %v1794
  %v1859 = vadd.f32 %v1663, %v1795
  %v1860 = vadd.f32 %v1664, %v1796
  %v1861 = vadd.f32 %v1665, %v1797
  %v1862 = vadd.f32 %v1666, %v1798
  %v1863 = vadd.f32 %v1667, %v1799
  %v1864 = vadd.f32 %v1668, %v1800
  %v1865 = vadd.f32 %v1669, %v1801
  %v1866 = vadd.f32 %v1670, %v1802
  %v1867 = vadd.f32 %v1671, %v1803
  %v1868 = vadd.f32 %v1672, %v1804
  %v1869 = vadd.f32 %v1673, %v1805
  %v1870 = vadd.f32 %v1674, %v1806
  %v1871 = vadd.f32 %v1675, %v1807
  %v1872 = vadd.f32 %v1676, %v1808
  %v1873 = vadd.f32 %v1677, %v1809
  %v1874 = vadd.f32 %v1678, %v1810
  %v1875 = vadd.f32 %v1679, %v1811
  %v1876 = vadd.f32 %v1680, %v1812
  %v1877 = vadd.f32 %v1681, %v1813
  %v1878 = vadd.f32 %v1682, %v1814
  %v1879 = vadd.f32 %v1683, %v1815
  %v1880 = vadd.f32 %v1684, %v1816
  %v1881 = vadd.f32 %v1685, %v1817
  %v1882 = vadd.f32 %v1686, %v1818
  %v1883 = vadd.f32 %v1687, %v1819
  %v1884 = vadd.f32 %v1688, %v1820
  %v1885 = vadd.f32 %v1689, %v1821
  %v1886 = vadd.f32 %v1690, %v1822
  %v1887 = vadd.f32 %v1691, %v1823
  %v1888 = vadd.f32 %v1692, %v1824
  %v1889 = vadd.f32 %v1693, %v1825
  %v1890 = vadd.f32 %v1694, %v1826
  %v1891 = vadd.f32 %v1695, %v1827
  %v1892 = vadd.f32 %v1696, %v1828
  %v1893 = vadd.f32 %v1697, %v1829
  %v1894 = vadd.f32 %v1698, %v1830
  %v1895 = vadd.f32 %v1699, %v1831
  %v1896 = vadd.f32 %v1700, %v1832
  %v1897 = vadd.f32 %v1701, %v1833
  %v1898 = vadd.f32 %v1702, %v1834
  %v1899 = vadd.f32 %v1703, %v1835
  %v1900 = vadd.f32 %v1704, %v1836
  %v1901 = vadd.f32 %v1705, %v1837
  %v1902 = vadd.f32 %v1706, %v1838
  %v1903 = vadd.f32 %v1707, %v1839
  %v1904 = vadd.f32 %v1708, %v1840
  %v1905 = vadd.f32 %v1709, %v1841
  %v1906 = vadd.f32 %v1710, %v1842
  %v1907 = vadd.f32 %v1711, %v1843
  %v1908 = vadd.f32 %v1712, %v1844
  %v1909 = vadd.f32 %v1713, %v1845
  %v1910 = vadd.f32 %v1714, %v1846
  %v1911 = vadd.f32 %v1715, %v1847
  %v1912 = vadd.f32 %v1716, %v1848
  %v1913 = vadd.f32 %v1717, %v1849
  %v1914 = vadd.f32 %v1718, %v1850
  %v1915 = vadd.f32 %v1719, %v1851
  %v1916 = vadd.f32 %v1720, %v1852
  %s1917 = scalar_lea.vmem [#allocation2], 48
  %v1918 = vld [vmem:[%s1917] sm:$0xff]
  %v1919 = vld [vmem:[%s1917 + $0x8] sm:$0xff]
  %v1920 = vld [vmem:[%s1917 + $0x18] sm:$0xff]
  %v1921 = vld [vmem:[%s1917 + $0x20] sm:$0xff]
  %v1922 = vld [vmem:[%s1917 + $0x30] sm:$0xff]
  %v1923 = vld [vmem:[%s1917 + $0x38] sm:$0xff]
  %v1924 = vld [vmem:[%s1917 + $0x48] sm:$0xff]
  %v1925 = vld [vmem:[%s1917 + $0x50] sm:$0xff]
  %v1926 = vld [vmem:[%s1917 + $0x60] sm:$0xff]
  %v1927 = vld [vmem:[%s1917 + $0x68] sm:$0xff]
  %v1928 = vld [vmem:[%s1917 + $0x78] sm:$0xff]
  %v1929 = vld [vmem:[%s1917 + $0x80] sm:$0xff]
  %v1930 = vld [vmem:[%s1917 + $0x90] sm:$0xff]
  %v1931 = vld [vmem:[%s1917 + $0x98] sm:$0xff]
  %v1932 = vld [vmem:[%s1917 + $0xa8] sm:$0xff]
  %v1933 = vld [vmem:[%s1917 + $0xb0] sm:$0xff]
  %v1934 = vld [vmem:[%s1917 + $0xc0] sm:$0xff]
  %v1935 = vld [vmem:[%s1917 + $0xc8] sm:$0xff]
  %v1936 = vld [vmem:[%s1917 + $0xd8] sm:$0xff]
  %v1937 = vld [vmem:[%s1917 + $0xe0] sm:$0xff]
  %v1938 = vld [vmem:[%s1917 + $0xf0] sm:$0xff]
  %v1939 = vld [vmem:[%s1917 + $0xf8] sm:$0xff]
  %v1940 = vld [vmem:[%s1917 + $0x108] sm:$0xff]
  %v1941 = vld [vmem:[%s1917 + $0x110] sm:$0xff]
  %v1942 = vld [vmem:[%s1917 + $0x120] sm:$0xff]
  %v1943 = vld [vmem:[%s1917 + $0x128] sm:$0xff]
  %v1944 = vld [vmem:[%s1917 + $0x138] sm:$0xff]
  %v1945 = vld [vmem:[%s1917 + $0x140] sm:$0xff]
  %v1946 = vld [vmem:[%s1917 + $0x150] sm:$0xff]
  %v1947 = vld [vmem:[%s1917 + $0x158] sm:$0xff]
  %v1948 = vld [vmem:[%s1917 + $0x168] sm:$0xff]
  %v1949 = vld [vmem:[%s1917 + $0x170] sm:$0xff]
  %v1950 = vld [vmem:[%s1917 + $0x1b0] sm:$0xff]
  %v1951 = vld [vmem:[%s1917 + $0x1b8] sm:$0xff]
  %v1952 = vld [vmem:[%s1917 + $0x1c8] sm:$0xff]
  %v1953 = vld [vmem:[%s1917 + $0x1d0] sm:$0xff]
  %v1954 = vld [vmem:[%s1917 + $0x1e0] sm:$0xff]
  %v1955 = vld [vmem:[%s1917 + $0x1e8] sm:$0xff]
  %v1956 = vld [vmem:[%s1917 + $0x1f8] sm:$0xff]
  %v1957 = vld [vmem:[%s1917 + $0x200] sm:$0xff]
  %v1958 = vld [vmem:[%s1917 + $0x210] sm:$0xff]
  %v1959 = vld [vmem:[%s1917 + $0x218] sm:$0xff]
  %v1960 = vld [vmem:[%s1917 + $0x228] sm:$0xff]
  %v1961 = vld [vmem:[%s1917 + $0x230] sm:$0xff]
  %v1962 = vld [vmem:[%s1917 + $0x240] sm:$0xff]
  %v1963 = vld [vmem:[%s1917 + $0x248] sm:$0xff]
  %v1964 = vld [vmem:[%s1917 + $0x258] sm:$0xff]
  %v1965 = vld [vmem:[%s1917 + $0x260] sm:$0xff]
  %v1966 = vld [vmem:[%s1917 + $0x270] sm:$0xff]
  %v1967 = vld [vmem:[%s1917 + $0x278] sm:$0xff]
  %v1968 = vld [vmem:[%s1917 + $0x288] sm:$0xff]
  %v1969 = vld [vmem:[%s1917 + $0x290] sm:$0xff]
  %v1970 = vld [vmem:[%s1917 + $0x2a0] sm:$0xff]
  %v1971 = vld [vmem:[%s1917 + $0x2a8] sm:$0xff]
  %v1972 = vld [vmem:[%s1917 + $0x2b8] sm:$0xff]
  %v1973 = vld [vmem:[%s1917 + $0x2c0] sm:$0xff]
  %v1974 = vld [vmem:[%s1917 + $0x2d0] sm:$0xff]
  %v1975 = vld [vmem:[%s1917 + $0x2d8] sm:$0xff]
  %v1976 = vld [vmem:[%s1917 + $0x2e8] sm:$0xff]
  %v1977 = vld [vmem:[%s1917 + $0x2f0] sm:$0xff]
  %v1978 = vld [vmem:[%s1917 + $0x300] sm:$0xff]
  %v1979 = vld [vmem:[%s1917 + $0x308] sm:$0xff]
  %v1980 = vld [vmem:[%s1917 + $0x318] sm:$0xff]
  %v1981 = vld [vmem:[%s1917 + $0x320] sm:$0xff]
  %v1982 = vlaneseq
  %v1983 = vshrl.u32 %v1982, 7
  %v1984 = vsub.s32 0, %v1983
  %v1985 = vrot.slane %v804, %v1984
  %v1986 = vmul.f32 %v1918, %v1985
  %v1987 = vmul.f32 %v1919, %v1985
  %v1988 = vmul.f32 %v1920, %v1985
  %v1989 = vmul.f32 %v1921, %v1985
  %v1990 = vmul.f32 %v1922, %v1985
  %v1991 = vmul.f32 %v1923, %v1985
  %v1992 = vmul.f32 %v1924, %v1985
  %v1993 = vmul.f32 %v1925, %v1985
  %v1994 = vmul.f32 %v1926, %v1985
  %v1995 = vmul.f32 %v1927, %v1985
  %v1996 = vmul.f32 %v1928, %v1985
  %v1997 = vmul.f32 %v1929, %v1985
  %v1998 = vmul.f32 %v1930, %v1985
  %v1999 = vmul.f32 %v1931, %v1985
  %v2000 = vmul.f32 %v1932, %v1985
  %v2001 = vmul.f32 %v1933, %v1985
  %v2002 = vmul.f32 %v1934, %v1985
  %v2003 = vmul.f32 %v1935, %v1985
  %v2004 = vmul.f32 %v1936, %v1985
  %v2005 = vmul.f32 %v1937, %v1985
  %v2006 = vmul.f32 %v1938, %v1985
  %v2007 = vmul.f32 %v1939, %v1985
  %v2008 = vmul.f32 %v1940, %v1985
  %v2009 = vmul.f32 %v1941, %v1985
  %v2010 = vmul.f32 %v1942, %v1985
  %v2011 = vmul.f32 %v1943, %v1985
  %v2012 = vmul.f32 %v1944, %v1985
  %v2013 = vmul.f32 %v1945, %v1985
  %v2014 = vmul.f32 %v1946, %v1985
  %v2015 = vmul.f32 %v1947, %v1985
  %v2016 = vmul.f32 %v1948, %v1985
  %v2017 = vmul.f32 %v1949, %v1985
  %v2018 = vmul.f32 %v1950, %v1985
  %v2019 = vmul.f32 %v1951, %v1985
  %v2020 = vmul.f32 %v1952, %v1985
  %v2021 = vmul.f32 %v1953, %v1985
  %v2022 = vmul.f32 %v1954, %v1985
  %v2023 = vmul.f32 %v1955, %v1985
  %v2024 = vmul.f32 %v1956, %v1985
  %v2025 = vmul.f32 %v1957, %v1985
  %v2026 = vmul.f32 %v1958, %v1985
  %v2027 = vmul.f32 %v1959, %v1985
  %v2028 = vmul.f32 %v1960, %v1985
  %v2029 = vmul.f32 %v1961, %v1985
  %v2030 = vmul.f32 %v1962, %v1985
  %v2031 = vmul.f32 %v1963, %v1985
  %v2032 = vmul.f32 %v1964, %v1985
  %v2033 = vmul.f32 %v1965, %v1985
  %v2034 = vmul.f32 %v1966, %v1985
  %v2035 = vmul.f32 %v1967, %v1985
  %v2036 = vmul.f32 %v1968, %v1985
  %v2037 = vmul.f32 %v1969, %v1985
  %v2038 = vmul.f32 %v1970, %v1985
  %v2039 = vmul.f32 %v1971, %v1985
  %v2040 = vmul.f32 %v1972, %v1985
  %v2041 = vmul.f32 %v1973, %v1985
  %v2042 = vmul.f32 %v1974, %v1985
  %v2043 = vmul.f32 %v1975, %v1985
  %v2044 = vmul.f32 %v1976, %v1985
  %v2045 = vmul.f32 %v1977, %v1985
  %v2046 = vmul.f32 %v1978, %v1985
  %v2047 = vmul.f32 %v1979, %v1985
  %v2048 = vmul.f32 %v1980, %v1985
  %v2049 = vmul.f32 %v1981, %v1985
  %v2050 = vadd.f32 %v1853, %v1986
  %v2051 = vadd.f32 %v1854, %v1987
  %v2052 = vadd.f32 %v1855, %v1988
  %v2053 = vadd.f32 %v1856, %v1989
  %v2054 = vadd.f32 %v1857, %v1990
  %v2055 = vadd.f32 %v1858, %v1991
  %v2056 = vadd.f32 %v1859, %v1992
  %v2057 = vadd.f32 %v1860, %v1993
  %v2058 = vadd.f32 %v1861, %v1994
  %v2059 = vadd.f32 %v1862, %v1995
  %v2060 = vadd.f32 %v1863, %v1996
  %v2061 = vadd.f32 %v1864, %v1997
  %v2062 = vadd.f32 %v1865, %v1998
  %v2063 = vadd.f32 %v1866, %v1999
  %v2064 = vadd.f32 %v1867, %v2000
  %v2065 = vadd.f32 %v1868, %v2001
  %v2066 = vadd.f32 %v1869, %v2002
  %v2067 = vadd.f32 %v1870, %v2003
  %v2068 = vadd.f32 %v1871, %v2004
  %v2069 = vadd.f32 %v1872, %v2005
  %v2070 = vadd.f32 %v1873, %v2006
  %v2071 = vadd.f32 %v1874, %v2007
  %v2072 = vadd.f32 %v1875, %v2008
  %v2073 = vadd.f32 %v1876, %v2009
  %v2074 = vadd.f32 %v1877, %v2010
  %v2075 = vadd.f32 %v1878, %v2011
  %v2076 = vadd.f32 %v1879, %v2012
  %v2077 = vadd.f32 %v1880, %v2013
  %v2078 = vadd.f32 %v1881, %v2014
  %v2079 = vadd.f32 %v1882, %v2015
  %v2080 = vadd.f32 %v1883, %v2016
  %v2081 = vadd.f32 %v1884, %v2017
  %v2082 = vadd.f32 %v1885, %v2018
  %v2083 = vadd.f32 %v1886, %v2019
  %v2084 = vadd.f32 %v1887, %v2020
  %v2085 = vadd.f32 %v1888, %v2021
  %v2086 = vadd.f32 %v1889, %v2022
  %v2087 = vadd.f32 %v1890, %v2023
  %v2088 = vadd.f32 %v1891, %v2024
  %v2089 = vadd.f32 %v1892, %v2025
  %v2090 = vadd.f32 %v1893, %v2026
  %v2091 = vadd.f32 %v1894, %v2027
  %v2092 = vadd.f32 %v1895, %v2028
  %v2093 = vadd.f32 %v1896, %v2029
  %v2094 = vadd.f32 %v1897, %v2030
  %v2095 = vadd.f32 %v1898, %v2031
  %v2096 = vadd.f32 %v1899, %v2032
  %v2097 = vadd.f32 %v1900, %v2033
  %v2098 = vadd.f32 %v1901, %v2034
  %v2099 = vadd.f32 %v1902, %v2035
  %v2100 = vadd.f32 %v1903, %v2036
  %v2101 = vadd.f32 %v1904, %v2037
  %v2102 = vadd.f32 %v1905, %v2038
  %v2103 = vadd.f32 %v1906, %v2039
  %v2104 = vadd.f32 %v1907, %v2040
  %v2105 = vadd.f32 %v1908, %v2041
  %v2106 = vadd.f32 %v1909, %v2042
  %v2107 = vadd.f32 %v1910, %v2043
  %v2108 = vadd.f32 %v1911, %v2044
  %v2109 = vadd.f32 %v1912, %v2045
  %v2110 = vadd.f32 %v1913, %v2046
  %v2111 = vadd.f32 %v1914, %v2047
  %v2112 = vadd.f32 %v1915, %v2048
  %v2113 = vadd.f32 %v1916, %v2049
  %v2114 = vld [vmem:[%s1917 + $0x1] sm:$0xff]
  %v2115 = vld [vmem:[%s1917 + $0x9] sm:$0xff]
  %v2116 = vld [vmem:[%s1917 + $0x19] sm:$0xff]
  %v2117 = vld [vmem:[%s1917 + $0x21] sm:$0xff]
  %v2118 = vld [vmem:[%s1917 + $0x31] sm:$0xff]
  %v2119 = vld [vmem:[%s1917 + $0x39] sm:$0xff]
  %v2120 = vld [vmem:[%s1917 + $0x49] sm:$0xff]
  %v2121 = vld [vmem:[%s1917 + $0x51] sm:$0xff]
  %v2122 = vld [vmem:[%s1917 + $0x61] sm:$0xff]
  %v2123 = vld [vmem:[%s1917 + $0x69] sm:$0xff]
  %v2124 = vld [vmem:[%s1917 + $0x79] sm:$0xff]
  %v2125 = vld [vmem:[%s1917 + $0x81] sm:$0xff]
  %v2126 = vld [vmem:[%s1917 + $0x91] sm:$0xff]
  %v2127 = vld [vmem:[%s1917 + $0x99] sm:$0xff]
  %v2128 = vld [vmem:[%s1917 + $0xa9] sm:$0xff]
  %v2129 = vld [vmem:[%s1917 + $0xb1] sm:$0xff]
  %v2130 = vld [vmem:[%s1917 + $0xc1] sm:$0xff]
  %v2131 = vld [vmem:[%s1917 + $0xc9] sm:$0xff]
  %v2132 = vld [vmem:[%s1917 + $0xd9] sm:$0xff]
  %v2133 = vld [vmem:[%s1917 + $0xe1] sm:$0xff]
  %v2134 = vld [vmem:[%s1917 + $0xf1] sm:$0xff]
  %v2135 = vld [vmem:[%s1917 + $0xf9] sm:$0xff]
  %v2136 = vld [vmem:[%s1917 + $0x109] sm:$0xff]
  %v2137 = vld [vmem:[%s1917 + $0x111] sm:$0xff]
  %v2138 = vld [vmem:[%s1917 + $0x121] sm:$0xff]
  %v2139 = vld [vmem:[%s1917 + $0x129] sm:$0xff]
  %v2140 = vld [vmem:[%s1917 + $0x139] sm:$0xff]
  %v2141 = vld [vmem:[%s1917 + $0x141] sm:$0xff]
  %v2142 = vld [vmem:[%s1917 + $0x151] sm:$0xff]
  %v2143 = vld [vmem:[%s1917 + $0x159] sm:$0xff]
  %v2144 = vld [vmem:[%s1917 + $0x169] sm:$0xff]
  %v2145 = vld [vmem:[%s1917 + $0x171] sm:$0xff]
  %v2146 = vld [vmem:[%s1917 + $0x1b1] sm:$0xff]
  %v2147 = vld [vmem:[%s1917 + $0x1b9] sm:$0xff]
  %v2148 = vld [vmem:[%s1917 + $0x1c9] sm:$0xff]
  %v2149 = vld [vmem:[%s1917 + $0x1d1] sm:$0xff]
  %v2150 = vld [vmem:[%s1917 + $0x1e1] sm:$0xff]
  %v2151 = vld [vmem:[%s1917 + $0x1e9] sm:$0xff]
  %v2152 = vld [vmem:[%s1917 + $0x1f9] sm:$0xff]
  %v2153 = vld [vmem:[%s1917 + $0x201] sm:$0xff]
  %v2154 = vld [vmem:[%s1917 + $0x211] sm:$0xff]
  %v2155 = vld [vmem:[%s1917 + $0x219] sm:$0xff]
  %v2156 = vld [vmem:[%s1917 + $0x229] sm:$0xff]
  %v2157 = vld [vmem:[%s1917 + $0x231] sm:$0xff]
  %v2158 = vld [vmem:[%s1917 + $0x241] sm:$0xff]
  %v2159 = vld [vmem:[%s1917 + $0x249] sm:$0xff]
  %v2160 = vld [vmem:[%s1917 + $0x259] sm:$0xff]
  %v2161 = vld [vmem:[%s1917 + $0x261] sm:$0xff]
  %v2162 = vld [vmem:[%s1917 + $0x271] sm:$0xff]
  %v2163 = vld [vmem:[%s1917 + $0x279] sm:$0xff]
  %v2164 = vld [vmem:[%s1917 + $0x289] sm:$0xff]
  %v2165 = vld [vmem:[%s1917 + $0x291] sm:$0xff]
  %v2166 = vld [vmem:[%s1917 + $0x2a1] sm:$0xff]
  %v2167 = vld [vmem:[%s1917 + $0x2a9] sm:$0xff]
  %v2168 = vld [vmem:[%s1917 + $0x2b9] sm:$0xff]
  %v2169 = vld [vmem:[%s1917 + $0x2c1] sm:$0xff]
  %v2170 = vld [vmem:[%s1917 + $0x2d1] sm:$0xff]
  %v2171 = vld [vmem:[%s1917 + $0x2d9] sm:$0xff]
  %v2172 = vld [vmem:[%s1917 + $0x2e9] sm:$0xff]
  %v2173 = vld [vmem:[%s1917 + $0x2f1] sm:$0xff]
  %v2174 = vld [vmem:[%s1917 + $0x301] sm:$0xff]
  %v2175 = vld [vmem:[%s1917 + $0x309] sm:$0xff]
  %v2176 = vld [vmem:[%s1917 + $0x319] sm:$0xff]
  %v2177 = vld [vmem:[%s1917 + $0x321] sm:$0xff]
  %v2178 = vlaneseq
  %v2179 = vshrl.u32 %v2178, 7
  %v2180 = vsub.s32 1, %v2179
  %v2181 = vrot.slane %v804, %v2180
  %v2182 = vmul.f32 %v2114, %v2181
  %v2183 = vmul.f32 %v2115, %v2181
  %v2184 = vmul.f32 %v2116, %v2181
  %v2185 = vmul.f32 %v2117, %v2181
  %v2186 = vmul.f32 %v2118, %v2181
  %v2187 = vmul.f32 %v2119, %v2181
  %v2188 = vmul.f32 %v2120, %v2181
  %v2189 = vmul.f32 %v2121, %v2181
  %v2190 = vmul.f32 %v2122, %v2181
  %v2191 = vmul.f32 %v2123, %v2181
  %v2192 = vmul.f32 %v2124, %v2181
  %v2193 = vmul.f32 %v2125, %v2181
  %v2194 = vmul.f32 %v2126, %v2181
  %v2195 = vmul.f32 %v2127, %v2181
  %v2196 = vmul.f32 %v2128, %v2181
  %v2197 = vmul.f32 %v2129, %v2181
  %v2198 = vmul.f32 %v2130, %v2181
  %v2199 = vmul.f32 %v2131, %v2181
  %v2200 = vmul.f32 %v2132, %v2181
  %v2201 = vmul.f32 %v2133, %v2181
  %v2202 = vmul.f32 %v2134, %v2181
  %v2203 = vmul.f32 %v2135, %v2181
  %v2204 = vmul.f32 %v2136, %v2181
  %v2205 = vmul.f32 %v2137, %v2181
  %v2206 = vmul.f32 %v2138, %v2181
  %v2207 = vmul.f32 %v2139, %v2181
  %v2208 = vmul.f32 %v2140, %v2181
  %v2209 = vmul.f32 %v2141, %v2181
  %v2210 = vmul.f32 %v2142, %v2181
  %v2211 = vmul.f32 %v2143, %v2181
  %v2212 = vmul.f32 %v2144, %v2181
  %v2213 = vmul.f32 %v2145, %v2181
  %v2214 = vmul.f32 %v2146, %v2181
  %v2215 = vmul.f32 %v2147, %v2181
  %v2216 = vmul.f32 %v2148, %v2181
  %v2217 = vmul.f32 %v2149, %v2181
  %v2218 = vmul.f32 %v2150, %v2181
  %v2219 = vmul.f32 %v2151, %v2181
  %v2220 = vmul.f32 %v2152, %v2181
  %v2221 = vmul.f32 %v2153, %v2181
  %v2222 = vmul.f32 %v2154, %v2181
  %v2223 = vmul.f32 %v2155, %v2181
  %v2224 = vmul.f32 %v2156, %v2181
  %v2225 = vmul.f32 %v2157, %v2181
  %v2226 = vmul.f32 %v2158, %v2181
  %v2227 = vmul.f32 %v2159, %v2181
  %v2228 = vmul.f32 %v2160, %v2181
  %v2229 = vmul.f32 %v2161, %v2181
  %v2230 = vmul.f32 %v2162, %v2181
  %v2231 = vmul.f32 %v2163, %v2181
  %v2232 = vmul.f32 %v2164, %v2181
  %v2233 = vmul.f32 %v2165, %v2181
  %v2234 = vmul.f32 %v2166, %v2181
  %v2235 = vmul.f32 %v2167, %v2181
  %v2236 = vmul.f32 %v2168, %v2181
  %v2237 = vmul.f32 %v2169, %v2181
  %v2238 = vmul.f32 %v2170, %v2181
  %v2239 = vmul.f32 %v2171, %v2181
  %v2240 = vmul.f32 %v2172, %v2181
  %v2241 = vmul.f32 %v2173, %v2181
  %v2242 = vmul.f32 %v2174, %v2181
  %v2243 = vmul.f32 %v2175, %v2181
  %v2244 = vmul.f32 %v2176, %v2181
  %v2245 = vmul.f32 %v2177, %v2181
  %v2246 = vadd.f32 %v2050, %v2182
  %v2247 = vadd.f32 %v2051, %v2183
  %v2248 = vadd.f32 %v2052, %v2184
  %v2249 = vadd.f32 %v2053, %v2185
  %v2250 = vadd.f32 %v2054, %v2186
  %v2251 = vadd.f32 %v2055, %v2187
  %v2252 = vadd.f32 %v2056, %v2188
  %v2253 = vadd.f32 %v2057, %v2189
  %v2254 = vadd.f32 %v2058, %v2190
  %v2255 = vadd.f32 %v2059, %v2191
  %v2256 = vadd.f32 %v2060, %v2192
  %v2257 = vadd.f32 %v2061, %v2193
  %v2258 = vadd.f32 %v2062, %v2194
  %v2259 = vadd.f32 %v2063, %v2195
  %v2260 = vadd.f32 %v2064, %v2196
  %v2261 = vadd.f32 %v2065, %v2197
  %v2262 = vadd.f32 %v2066, %v2198
  %v2263 = vadd.f32 %v2067, %v2199
  %v2264 = vadd.f32 %v2068, %v2200
  %v2265 = vadd.f32 %v2069, %v2201
  %v2266 = vadd.f32 %v2070, %v2202
  %v2267 = vadd.f32 %v2071, %v2203
  %v2268 = vadd.f32 %v2072, %v2204
  %v2269 = vadd.f32 %v2073, %v2205
  %v2270 = vadd.f32 %v2074, %v2206
  %v2271 = vadd.f32 %v2075, %v2207
  %v2272 = vadd.f32 %v2076, %v2208
  %v2273 = vadd.f32 %v2077, %v2209
  %v2274 = vadd.f32 %v2078, %v2210
  %v2275 = vadd.f32 %v2079, %v2211
  %v2276 = vadd.f32 %v2080, %v2212
  %v2277 = vadd.f32 %v2081, %v2213
  %v2278 = vadd.f32 %v2082, %v2214
  %v2279 = vadd.f32 %v2083, %v2215
  %v2280 = vadd.f32 %v2084, %v2216
  %v2281 = vadd.f32 %v2085, %v2217
  %v2282 = vadd.f32 %v2086, %v2218
  %v2283 = vadd.f32 %v2087, %v2219
  %v2284 = vadd.f32 %v2088, %v2220
  %v2285 = vadd.f32 %v2089, %v2221
  %v2286 = vadd.f32 %v2090, %v2222
  %v2287 = vadd.f32 %v2091, %v2223
  %v2288 = vadd.f32 %v2092, %v2224
  %v2289 = vadd.f32 %v2093, %v2225
  %v2290 = vadd.f32 %v2094, %v2226
  %v2291 = vadd.f32 %v2095, %v2227
  %v2292 = vadd.f32 %v2096, %v2228
  %v2293 = vadd.f32 %v2097, %v2229
  %v2294 = vadd.f32 %v2098, %v2230
  %v2295 = vadd.f32 %v2099, %v2231
  %v2296 = vadd.f32 %v2100, %v2232
  %v2297 = vadd.f32 %v2101, %v2233
  %v2298 = vadd.f32 %v2102, %v2234
  %v2299 = vadd.f32 %v2103, %v2235
  %v2300 = vadd.f32 %v2104, %v2236
  %v2301 = vadd.f32 %v2105, %v2237
  %v2302 = vadd.f32 %v2106, %v2238
  %v2303 = vadd.f32 %v2107, %v2239
  %v2304 = vadd.f32 %v2108, %v2240
  %v2305 = vadd.f32 %v2109, %v2241
  %v2306 = vadd.f32 %v2110, %v2242
  %v2307 = vadd.f32 %v2111, %v2243
  %v2308 = vadd.f32 %v2112, %v2244
  %v2309 = vadd.f32 %v2113, %v2245
  %v2310 = vld [vmem:[%s1917 + $0x2] sm:$0xff]
  %v2311 = vld [vmem:[%s1917 + $0xa] sm:$0xff]
  %v2312 = vld [vmem:[%s1917 + $0x1a] sm:$0xff]
  %v2313 = vld [vmem:[%s1917 + $0x22] sm:$0xff]
  %v2314 = vld [vmem:[%s1917 + $0x32] sm:$0xff]
  %v2315 = vld [vmem:[%s1917 + $0x3a] sm:$0xff]
  %v2316 = vld [vmem:[%s1917 + $0x4a] sm:$0xff]
  %v2317 = vld [vmem:[%s1917 + $0x52] sm:$0xff]
  %v2318 = vld [vmem:[%s1917 + $0x62] sm:$0xff]
  %v2319 = vld [vmem:[%s1917 + $0x6a] sm:$0xff]
  %v2320 = vld [vmem:[%s1917 + $0x7a] sm:$0xff]
  %v2321 = vld [vmem:[%s1917 + $0x82] sm:$0xff]
  %v2322 = vld [vmem:[%s1917 + $0x92] sm:$0xff]
  %v2323 = vld [vmem:[%s1917 + $0x9a] sm:$0xff]
  %v2324 = vld [vmem:[%s1917 + $0xaa] sm:$0xff]
  %v2325 = vld [vmem:[%s1917 + $0xb2] sm:$0xff]
  %v2326 = vld [vmem:[%s1917 + $0xc2] sm:$0xff]
  %v2327 = vld [vmem:[%s1917 + $0xca] sm:$0xff]
  %v2328 = vld [vmem:[%s1917 + $0xda] sm:$0xff]
  %v2329 = vld [vmem:[%s1917 + $0xe2] sm:$0xff]
  %v2330 = vld [vmem:[%s1917 + $0xf2] sm:$0xff]
  %v2331 = vld [vmem:[%s1917 + $0xfa] sm:$0xff]
  %v2332 = vld [vmem:[%s1917 + $0x10a] sm:$0xff]
  %v2333 = vld [vmem:[%s1917 + $0x112] sm:$0xff]
  %v2334 = vld [vmem:[%s1917 + $0x122] sm:$0xff]
  %v2335 = vld [vmem:[%s1917 + $0x12a] sm:$0xff]
  %v2336 = vld [vmem:[%s1917 + $0x13a] sm:$0xff]
  %v2337 = vld [vmem:[%s1917 + $0x142] sm:$0xff]
  %v2338 = vld [vmem:[%s1917 + $0x152] sm:$0xff]
  %v2339 = vld [vmem:[%s1917 + $0x15a] sm:$0xff]
  %v2340 = vld [vmem:[%s1917 + $0x16a] sm:$0xff]
  %v2341 = vld [vmem:[%s1917 + $0x172] sm:$0xff]
  %v2342 = vld [vmem:[%s1917 + $0x1b2] sm:$0xff]
  %v2343 = vld [vmem:[%s1917 + $0x1ba] sm:$0xff]
  %v2344 = vld [vmem:[%s1917 + $0x1ca] sm:$0xff]
  %v2345 = vld [vmem:[%s1917 + $0x1d2] sm:$0xff]
  %v2346 = vld [vmem:[%s1917 + $0x1e2] sm:$0xff]
  %v2347 = vld [vmem:[%s1917 + $0x1ea] sm:$0xff]
  %v2348 = vld [vmem:[%s1917 + $0x1fa] sm:$0xff]
  %v2349 = vld [vmem:[%s1917 + $0x202] sm:$0xff]
  %v2350 = vld [vmem:[%s1917 + $0x212] sm:$0xff]
  %v2351 = vld [vmem:[%s1917 + $0x21a] sm:$0xff]
  %v2352 = vld [vmem:[%s1917 + $0x22a] sm:$0xff]
  %v2353 = vld [vmem:[%s1917 + $0x232] sm:$0xff]
  %v2354 = vld [vmem:[%s1917 + $0x242] sm:$0xff]
  %v2355 = vld [vmem:[%s1917 + $0x24a] sm:$0xff]
  %v2356 = vld [vmem:[%s1917 + $0x25a] sm:$0xff]
  %v2357 = vld [vmem:[%s1917 + $0x262] sm:$0xff]
  %v2358 = vld [vmem:[%s1917 + $0x272] sm:$0xff]
  %v2359 = vld [vmem:[%s1917 + $0x27a] sm:$0xff]
  %v2360 = vld [vmem:[%s1917 + $0x28a] sm:$0xff]
  %v2361 = vld [vmem:[%s1917 + $0x292] sm:$0xff]
  %v2362 = vld [vmem:[%s1917 + $0x2a2] sm:$0xff]
  %v2363 = vld [vmem:[%s1917 + $0x2aa] sm:$0xff]
  %v2364 = vld [vmem:[%s1917 + $0x2ba] sm:$0xff]
  %v2365 = vld [vmem:[%s1917 + $0x2c2] sm:$0xff]
  %v2366 = vld [vmem:[%s1917 + $0x2d2] sm:$0xff]
  %v2367 = vld [vmem:[%s1917 + $0x2da] sm:$0xff]
  %v2368 = vld [vmem:[%s1917 + $0x2ea] sm:$0xff]
  %v2369 = vld [vmem:[%s1917 + $0x2f2] sm:$0xff]
  %v2370 = vld [vmem:[%s1917 + $0x302] sm:$0xff]
  %v2371 = vld [vmem:[%s1917 + $0x30a] sm:$0xff]
  %v2372 = vld [vmem:[%s1917 + $0x31a] sm:$0xff]
  %v2373 = vld [vmem:[%s1917 + $0x322] sm:$0xff]
  %v2374 = vlaneseq
  %v2375 = vshrl.u32 %v2374, 7
  %v2376 = vsub.s32 2, %v2375
  %v2377 = vrot.slane %v804, %v2376
  %v2378 = vmul.f32 %v2310, %v2377
  %v2379 = vmul.f32 %v2311, %v2377
  %v2380 = vmul.f32 %v2312, %v2377
  %v2381 = vmul.f32 %v2313, %v2377
  %v2382 = vmul.f32 %v2314, %v2377
  %v2383 = vmul.f32 %v2315, %v2377
  %v2384 = vmul.f32 %v2316, %v2377
  %v2385 = vmul.f32 %v2317, %v2377
  %v2386 = vmul.f32 %v2318, %v2377
  %v2387 = vmul.f32 %v2319, %v2377
  %v2388 = vmul.f32 %v2320, %v2377
  %v2389 = vmul.f32 %v2321, %v2377
  %v2390 = vmul.f32 %v2322, %v2377
  %v2391 = vmul.f32 %v2323, %v2377
  %v2392 = vmul.f32 %v2324, %v2377
  %v2393 = vmul.f32 %v2325, %v2377
  %v2394 = vmul.f32 %v2326, %v2377
  %v2395 = vmul.f32 %v2327, %v2377
  %v2396 = vmul.f32 %v2328, %v2377
  %v2397 = vmul.f32 %v2329, %v2377
  %v2398 = vmul.f32 %v2330, %v2377
  %v2399 = vmul.f32 %v2331, %v2377
  %v2400 = vmul.f32 %v2332, %v2377
  %v2401 = vmul.f32 %v2333, %v2377
  %v2402 = vmul.f32 %v2334, %v2377
  %v2403 = vmul.f32 %v2335, %v2377
  %v2404 = vmul.f32 %v2336, %v2377
  %v2405 = vmul.f32 %v2337, %v2377
  %v2406 = vmul.f32 %v2338, %v2377
  %v2407 = vmul.f32 %v2339, %v2377
  %v2408 = vmul.f32 %v2340, %v2377
  %v2409 = vmul.f32 %v2341, %v2377
  %v2410 = vmul.f32 %v2342, %v2377
  %v2411 = vmul.f32 %v2343, %v2377
  %v2412 = vmul.f32 %v2344, %v2377
  %v2413 = vmul.f32 %v2345, %v2377
  %v2414 = vmul.f32 %v2346, %v2377
  %v2415 = vmul.f32 %v2347, %v2377
  %v2416 = vmul.f32 %v2348, %v2377
  %v2417 = vmul.f32 %v2349, %v2377
  %v2418 = vmul.f32 %v2350, %v2377
  %v2419 = vmul.f32 %v2351, %v2377
  %v2420 = vmul.f32 %v2352, %v2377
  %v2421 = vmul.f32 %v2353, %v2377
  %v2422 = vmul.f32 %v2354, %v2377
  %v2423 = vmul.f32 %v2355, %v2377
  %v2424 = vmul.f32 %v2356, %v2377
  %v2425 = vmul.f32 %v2357, %v2377
  %v2426 = vmul.f32 %v2358, %v2377
  %v2427 = vmul.f32 %v2359, %v2377
  %v2428 = vmul.f32 %v2360, %v2377
  %v2429 = vmul.f32 %v2361, %v2377
  %v2430 = vmul.f32 %v2362, %v2377
  %v2431 = vmul.f32 %v2363, %v2377
  %v2432 = vmul.f32 %v2364, %v2377
  %v2433 = vmul.f32 %v2365, %v2377
  %v2434 = vmul.f32 %v2366, %v2377
  %v2435 = vmul.f32 %v2367, %v2377
  %v2436 = vmul.f32 %v2368, %v2377
  %v2437 = vmul.f32 %v2369, %v2377
  %v2438 = vmul.f32 %v2370, %v2377
  %v2439 = vmul.f32 %v2371, %v2377
  %v2440 = vmul.f32 %v2372, %v2377
  %v2441 = vmul.f32 %v2373, %v2377
  %v2442 = vadd.f32 %v2246, %v2378
  %v2443 = vadd.f32 %v2247, %v2379
  %v2444 = vadd.f32 %v2248, %v2380
  %v2445 = vadd.f32 %v2249, %v2381
  %v2446 = vadd.f32 %v2250, %v2382
  %v2447 = vadd.f32 %v2251, %v2383
  %v2448 = vadd.f32 %v2252, %v2384
  %v2449 = vadd.f32 %v2253, %v2385
  %v2450 = vadd.f32 %v2254, %v2386
  %v2451 = vadd.f32 %v2255, %v2387
  %v2452 = vadd.f32 %v2256, %v2388
  %v2453 = vadd.f32 %v2257, %v2389
  %v2454 = vadd.f32 %v2258, %v2390
  %v2455 = vadd.f32 %v2259, %v2391
  %v2456 = vadd.f32 %v2260, %v2392
  %v2457 = vadd.f32 %v2261, %v2393
  %v2458 = vadd.f32 %v2262, %v2394
  %v2459 = vadd.f32 %v2263, %v2395
  %v2460 = vadd.f32 %v2264, %v2396
  %v2461 = vadd.f32 %v2265, %v2397
  %v2462 = vadd.f32 %v2266, %v2398
  %v2463 = vadd.f32 %v2267, %v2399
  %v2464 = vadd.f32 %v2268, %v2400
  %v2465 = vadd.f32 %v2269, %v2401
  %v2466 = vadd.f32 %v2270, %v2402
  %v2467 = vadd.f32 %v2271, %v2403
  %v2468 = vadd.f32 %v2272, %v2404
  %v2469 = vadd.f32 %v2273, %v2405
  %v2470 = vadd.f32 %v2274, %v2406
  %v2471 = vadd.f32 %v2275, %v2407
  %v2472 = vadd.f32 %v2276, %v2408
  %v2473 = vadd.f32 %v2277, %v2409
  %v2474 = vadd.f32 %v2278, %v2410
  %v2475 = vadd.f32 %v2279, %v2411
  %v2476 = vadd.f32 %v2280, %v2412
  %v2477 = vadd.f32 %v2281, %v2413
  %v2478 = vadd.f32 %v2282, %v2414
  %v2479 = vadd.f32 %v2283, %v2415
  %v2480 = vadd.f32 %v2284, %v2416
  %v2481 = vadd.f32 %v2285, %v2417
  %v2482 = vadd.f32 %v2286, %v2418
  %v2483 = vadd.f32 %v2287, %v2419
  %v2484 = vadd.f32 %v2288, %v2420
  %v2485 = vadd.f32 %v2289, %v2421
  %v2486 = vadd.f32 %v2290, %v2422
  %v2487 = vadd.f32 %v2291, %v2423
  %v2488 = vadd.f32 %v2292, %v2424
  %v2489 = vadd.f32 %v2293, %v2425
  %v2490 = vadd.f32 %v2294, %v2426
  %v2491 = vadd.f32 %v2295, %v2427
  %v2492 = vadd.f32 %v2296, %v2428
  %v2493 = vadd.f32 %v2297, %v2429
  %v2494 = vadd.f32 %v2298, %v2430
  %v2495 = vadd.f32 %v2299, %v2431
  %v2496 = vadd.f32 %v2300, %v2432
  %v2497 = vadd.f32 %v2301, %v2433
  %v2498 = vadd.f32 %v2302, %v2434
  %v2499 = vadd.f32 %v2303, %v2435
  %v2500 = vadd.f32 %v2304, %v2436
  %v2501 = vadd.f32 %v2305, %v2437
  %v2502 = vadd.f32 %v2306, %v2438
  %v2503 = vadd.f32 %v2307, %v2439
  %v2504 = vadd.f32 %v2308, %v2440
  %v2505 = vadd.f32 %v2309, %v2441
  %v2506 = vld [vmem:[%s4] sm:$0x1]
  %v2508 = vlaneseq
  %v2509 = vshrl.u32 %v2508, 7
  %v2510 = vsub.s32 0, %v2509
  %v2511 = vrot.slane %v2506, %v2510
  %v2513 = vadd.f32 %v2442, %v2511
  %v2514 = vadd.f32 %v2443, %v2511
  %v2515 = vadd.f32 %v2444, %v2511
  %v2516 = vadd.f32 %v2445, %v2511
  %v2517 = vadd.f32 %v2446, %v2511
  %v2518 = vadd.f32 %v2447, %v2511
  %v2519 = vadd.f32 %v2448, %v2511
  %v2520 = vadd.f32 %v2449, %v2511
  %v2521 = vadd.f32 %v2450, %v2511
  %v2522 = vadd.f32 %v2451, %v2511
  %v2523 = vadd.f32 %v2452, %v2511
  %v2524 = vadd.f32 %v2453, %v2511
  %v2525 = vadd.f32 %v2454, %v2511
  %v2526 = vadd.f32 %v2455, %v2511
  %v2527 = vadd.f32 %v2456, %v2511
  %v2528 = vadd.f32 %v2457, %v2511
  %v2529 = vadd.f32 %v2458, %v2511
  %v2530 = vadd.f32 %v2459, %v2511
  %v2531 = vadd.f32 %v2460, %v2511
  %v2532 = vadd.f32 %v2461, %v2511
  %v2533 = vadd.f32 %v2462, %v2511
  %v2534 = vadd.f32 %v2463, %v2511
  %v2535 = vadd.f32 %v2464, %v2511
  %v2536 = vadd.f32 %v2465, %v2511
  %v2537 = vadd.f32 %v2466, %v2511
  %v2538 = vadd.f32 %v2467, %v2511
  %v2539 = vadd.f32 %v2468, %v2511
  %v2540 = vadd.f32 %v2469, %v2511
  %v2541 = vadd.f32 %v2470, %v2511
  %v2542 = vadd.f32 %v2471, %v2511
  %v2543 = vadd.f32 %v2472, %v2511
  %v2544 = vadd.f32 %v2473, %v2511
  %v2545 = vadd.f32 %v2474, %v2511
  %v2546 = vadd.f32 %v2475, %v2511
  %v2547 = vadd.f32 %v2476, %v2511
  %v2548 = vadd.f32 %v2477, %v2511
  %v2549 = vadd.f32 %v2478, %v2511
  %v2550 = vadd.f32 %v2479, %v2511
  %v2551 = vadd.f32 %v2480, %v2511
  %v2552 = vadd.f32 %v2481, %v2511
  %v2553 = vadd.f32 %v2482, %v2511
  %v2554 = vadd.f32 %v2483, %v2511
  %v2555 = vadd.f32 %v2484, %v2511
  %v2556 = vadd.f32 %v2485, %v2511
  %v2557 = vadd.f32 %v2486, %v2511
  %v2558 = vadd.f32 %v2487, %v2511
  %v2559 = vadd.f32 %v2488, %v2511
  %v2560 = vadd.f32 %v2489, %v2511
  %v2561 = vadd.f32 %v2490, %v2511
  %v2562 = vadd.f32 %v2491, %v2511
  %v2563 = vadd.f32 %v2492, %v2511
  %v2564 = vadd.f32 %v2493, %v2511
  %v2565 = vadd.f32 %v2494, %v2511
  %v2566 = vadd.f32 %v2495, %v2511
  %v2567 = vadd.f32 %v2496, %v2511
  %v2568 = vadd.f32 %v2497, %v2511
  %v2569 = vadd.f32 %v2498, %v2511
  %v2570 = vadd.f32 %v2499, %v2511
  %v2571 = vadd.f32 %v2500, %v2511
  %v2572 = vadd.f32 %v2501, %v2511
  %v2573 = vadd.f32 %v2502, %v2511
  %v2574 = vadd.f32 %v2503, %v2511
  %v2575 = vadd.f32 %v2504, %v2511
  %v2576 = vadd.f32 %v2505, %v2511
  %v2577 = vmax.f32 %v2513, 0.0
  %v2578 = vmax.f32 %v2514, 0.0
  %v2579 = vmax.f32 %v2515, 0.0
  %v2580 = vmax.f32 %v2516, 0.0
  %v2581 = vmax.f32 %v2517, 0.0
  %v2582 = vmax.f32 %v2518, 0.0
  %v2583 = vmax.f32 %v2519, 0.0
  %v2584 = vmax.f32 %v2520, 0.0
  %v2585 = vmax.f32 %v2521, 0.0
  %v2586 = vmax.f32 %v2522, 0.0
  %v2587 = vmax.f32 %v2523, 0.0
  %v2588 = vmax.f32 %v2524, 0.0
  %v2589 = vmax.f32 %v2525, 0.0
  %v2590 = vmax.f32 %v2526, 0.0
  %v2591 = vmax.f32 %v2527, 0.0
  %v2592 = vmax.f32 %v2528, 0.0
  %v2593 = vmax.f32 %v2529, 0.0
  %v2594 = vmax.f32 %v2530, 0.0
  %v2595 = vmax.f32 %v2531, 0.0
  %v2596 = vmax.f32 %v2532, 0.0
  %v2597 = vmax.f32 %v2533, 0.0
  %v2598 = vmax.f32 %v2534, 0.0
  %v2599 = vmax.f32 %v2535, 0.0
  %v2600 = vmax.f32 %v2536, 0.0
  %v2601 = vmax.f32 %v2537, 0.0
  %v2602 = vmax.f32 %v2538, 0.0
  %v2603 = vmax.f32 %v2539, 0.0
  %v2604 = vmax.f32 %v2540, 0.0
  %v2605 = vmax.f32 %v2541, 0.0
  %v2606 = vmax.f32 %v2542, 0.0
  %v2607 = vmax.f32 %v2543, 0.0
  %v2608 = vmax.f32 %v2544, 0.0
  %v2609 = vmax.f32 %v2545, 0.0
  %v2610 = vmax.f32 %v2546, 0.0
  %v2611 = vmax.f32 %v2547, 0.0
  %v2612 = vmax.f32 %v2548, 0.0
  %v2613 = vmax.f32 %v2549, 0.0
  %v2614 = vmax.f32 %v2550, 0.0
  %v2615 = vmax.f32 %v2551, 0.0
  %v2616 = vmax.f32 %v2552, 0.0
  %v2617 = vmax.f32 %v2553, 0.0
  %v2618 = vmax.f32 %v2554, 0.0
  %v2619 = vmax.f32 %v2555, 0.0
  %v2620 = vmax.f32 %v2556, 0.0
  %v2621 = vmax.f32 %v2557, 0.0
  %v2622 = vmax.f32 %v2558, 0.0
  %v2623 = vmax.f32 %v2559, 0.0
  %v2624 = vmax.f32 %v2560, 0.0
  %v2625 = vmax.f32 %v2561, 0.0
  %v2626 = vmax.f32 %v2562, 0.0
  %v2627 = vmax.f32 %v2563, 0.0
  %v2628 = vmax.f32 %v2564, 0.0
  %v2629 = vmax.f32 %v2565, 0.0
  %v2630 = vmax.f32 %v2566, 0.0
  %v2631 = vmax.f32 %v2567, 0.0
  %v2632 = vmax.f32 %v2568, 0.0
  %v2633 = vmax.f32 %v2569, 0.0
  %v2634 = vmax.f32 %v2570, 0.0
  %v2635 = vmax.f32 %v2571, 0.0
  %v2636 = vmax.f32 %v2572, 0.0
  %v2637 = vmax.f32 %v2573, 0.0
  %v2638 = vmax.f32 %v2574, 0.0
  %v2639 = vmax.f32 %v2575, 0.0
  %v2640 = vmax.f32 %v2576, 0.0
  %v2641 = vmin.f32 %v2577, 6.0
  %v2642 = vmin.f32 %v2578, 6.0
  %v2643 = vmin.f32 %v2579, 6.0
  %v2644 = vmin.f32 %v2580, 6.0
  %v2645 = vmin.f32 %v2581, 6.0
  %v2646 = vmin.f32 %v2582, 6.0
  %v2647 = vmin.f32 %v2583, 6.0
  %v2648 = vmin.f32 %v2584, 6.0
  %v2649 = vmin.f32 %v2585, 6.0
  %v2650 = vmin.f32 %v2586, 6.0
  %v2651 = vmin.f32 %v2587, 6.0
  %v2652 = vmin.f32 %v2588, 6.0
  %v2653 = vmin.f32 %v2589, 6.0
  %v2654 = vmin.f32 %v2590, 6.0
  %v2655 = vmin.f32 %v2591, 6.0
  %v2656 = vmin.f32 %v2592, 6.0
  %v2657 = vmin.f32 %v2593, 6.0
  %v2658 = vmin.f32 %v2594, 6.0
  %v2659 = vmin.f32 %v2595, 6.0
  %v2660 = vmin.f32 %v2596, 6.0
  %v2661 = vmin.f32 %v2597, 6.0
  %v2662 = vmin.f32 %v2598, 6.0
  %v2663 = vmin.f32 %v2599, 6.0
  %v2664 = vmin.f32 %v2600, 6.0
  %v2665 = vmin.f32 %v2601, 6.0
  %v2666 = vmin.f32 %v2602, 6.0
  %v2667 = vmin.f32 %v2603, 6.0
  %v2668 = vmin.f32 %v2604, 6.0
  %v2669 = vmin.f32 %v2605, 6.0
  %v2670 = vmin.f32 %v2606, 6.0
  %v2671 = vmin.f32 %v2607, 6.0
  %v2672 = vmin.f32 %v2608, 6.0
  %v2673 = vmin.f32 %v2609, 6.0
  %v2674 = vmin.f32 %v2610, 6.0
  %v2675 = vmin.f32 %v2611, 6.0
  %v2676 = vmin.f32 %v2612, 6.0
  %v2677 = vmin.f32 %v2613, 6.0
  %v2678 = vmin.f32 %v2614, 6.0
  %v2679 = vmin.f32 %v2615, 6.0
  %v2680 = vmin.f32 %v2616, 6.0
  %v2681 = vmin.f32 %v2617, 6.0
  %v2682 = vmin.f32 %v2618, 6.0
  %v2683 = vmin.f32 %v2619, 6.0
  %v2684 = vmin.f32 %v2620, 6.0
  %v2685 = vmin.f32 %v2621, 6.0
  %v2686 = vmin.f32 %v2622, 6.0
  %v2687 = vmin.f32 %v2623, 6.0
  %v2688 = vmin.f32 %v2624, 6.0
  %v2689 = vmin.f32 %v2625, 6.0
  %v2690 = vmin.f32 %v2626, 6.0
  %v2691 = vmin.f32 %v2627, 6.0
  %v2692 = vmin.f32 %v2628, 6.0
  %v2693 = vmin.f32 %v2629, 6.0
  %v2694 = vmin.f32 %v2630, 6.0
  %v2695 = vmin.f32 %v2631, 6.0
  %v2696 = vmin.f32 %v2632, 6.0
  %v2697 = vmin.f32 %v2633, 6.0
  %v2698 = vmin.f32 %v2634, 6.0
  %v2699 = vmin.f32 %v2635, 6.0
  %v2700 = vmin.f32 %v2636, 6.0
  %v2701 = vmin.f32 %v2637, 6.0
  %v2702 = vmin.f32 %v2638, 6.0
  %v2703 = vmin.f32 %v2639, 6.0
  %v2704 = vmin.f32 %v2640, 6.0
  %v2705 = vpack.c.bf16 %v2642, %v2641
  %v2706 = vpack.c.bf16 %v2644, %v2643
  %v2707 = vpack.c.bf16 %v2646, %v2645
  %v2708 = vpack.c.bf16 %v2648, %v2647
  %v2709 = vpack.c.bf16 %v2650, %v2649
  %v2710 = vpack.c.bf16 %v2652, %v2651
  %v2711 = vpack.c.bf16 %v2654, %v2653
  %v2712 = vpack.c.bf16 %v2656, %v2655
  %v2713 = vpack.c.bf16 %v2658, %v2657
  %v2714 = vpack.c.bf16 %v2660, %v2659
  %v2715 = vpack.c.bf16 %v2662, %v2661
  %v2716 = vpack.c.bf16 %v2664, %v2663
  %v2717 = vpack.c.bf16 %v2666, %v2665
  %v2718 = vpack.c.bf16 %v2668, %v2667
  %v2719 = vpack.c.bf16 %v2670, %v2669
  %v2720 = vpack.c.bf16 %v2672, %v2671
  %v2721 = vpack.c.bf16 %v2674, %v2673
  %v2722 = vpack.c.bf16 %v2676, %v2675
  %v2723 = vpack.c.bf16 %v2678, %v2677
  %v2724 = vpack.c.bf16 %v2680, %v2679
  %v2725 = vpack.c.bf16 %v2682, %v2681
  %v2726 = vpack.c.bf16 %v2684, %v2683
  %v2727 = vpack.c.bf16 %v2686, %v2685
  %v2728 = vpack.c.bf16 %v2688, %v2687
  %v2729 = vpack.c.bf16 %v2690, %v2689
  %v2730 = vpack.c.bf16 %v2692, %v2691
  %v2731 = vpack.c.bf16 %v2694, %v2693
  %v2732 = vpack.c.bf16 %v2696, %v2695
  %v2733 = vpack.c.bf16 %v2698, %v2697
  %v2734 = vpack.c.bf16 %v2700, %v2699
  %v2735 = vpack.c.bf16 %v2702, %v2701
  %v2736 = vpack.c.bf16 %v2704, %v2703
  %v2737 = vld [vmem:[%s5] sm:$0xf]
  %v2738 = vld [vmem:[%s5 + $0x4] sm:$0xf]
  %v2739 = vld [vmem:[%s5 + $0x8] sm:$0xf]
  %v2740 = vld [vmem:[%s5 + $0xc] sm:$0xf]
  %v2741 = vld [vmem:[%s6] sm:$0x1]
  %v2743 = vlaneseq
  %v2744 = vshrl.u32 %v2743, 7
  %v2745 = vsub.s32 0, %v2744
  %v2746 = vrot.slane %v2741, %v2745
  %v2752 = vunpack.c.l.b16 %v2737
  %v2753 = vunpack.c.l.b16 %v2738
  %v2754 = vunpack.c.l.b16 %v2739
  %v2755 = vunpack.c.l.b16 %v2740
  %v2756 = vpack.c.b16 %v2753, %v2752
  %v2757 = vpack.c.b16 %v2755, %v2754
  %v2761 = vsel %vm649, %v2705, 0
  %v2764 = vsel %vm649, %v2706, 0
  %v2767 = vsel %vm649, %v2707, 0
  %v2770 = vsel %vm649, %v2708, 0
  %v2773 = vsel %vm649, %v2709, 0
  %v2776 = vsel %vm649, %v2710, 0
  %v2779 = vsel %vm649, %v2711, 0
  %v2782 = vsel %vm649, %v2712, 0
  %v2785 = vsel %vm649, %v2713, 0
  %v2788 = vsel %vm649, %v2714, 0
  %v2791 = vsel %vm649, %v2715, 0
  %v2794 = vsel %vm649, %v2716, 0
  %v2797 = vsel %vm649, %v2717, 0
  %v2800 = vsel %vm649, %v2718, 0
  %v2803 = vsel %vm649, %v2719, 0
  %v2806 = vsel %vm649, %v2720, 0
  %v2809 = vsel %vm649, %v2721, 0
  %v2812 = vsel %vm649, %v2722, 0
  %v2815 = vsel %vm649, %v2723, 0
  %v2818 = vsel %vm649, %v2724, 0
  %v2821 = vsel %vm649, %v2725, 0
  %v2824 = vsel %vm649, %v2726, 0
  %v2827 = vsel %vm649, %v2727, 0
  %v2830 = vsel %vm649, %v2728, 0
  %v2833 = vsel %vm649, %v2729, 0
  %v2836 = vsel %vm649, %v2730, 0
  %v2839 = vsel %vm649, %v2731, 0
  %v2842 = vsel %vm649, %v2732, 0
  %v2845 = vsel %vm649, %v2733, 0
  %v2848 = vsel %vm649, %v2734, 0
  %v2851 = vsel %vm649, %v2735, 0
  %v2854 = vsel %vm649, %v2736, 0
  %2856 = vmatprep.subr.bf16.mxu0 0
  %2857 = vmatpush1.bf16.msra.mxu0 %v2756
  %2858 = vmatprep.subr.bf16.mxu0 0
  %2859 = vmatpush1.bf16.msra.mxu0 %v2757
  %2860 = vmatprep.subr.bf16.mxu0 0
  %2861 = vmatpush1.bf16.msra.mxu0 0
  %2862 = vmatprep.subr.bf16.mxu0 0
  %2863 = vmatpush1.bf16.msra.mxu0 0
  %2864 = vmatprep.subr.bf16.mxu0 0
  %2865 = vmatpush1.bf16.msra.mxu0 0
  %2866 = vmatprep.subr.bf16.mxu0 0
  %2867 = vmatpush1.bf16.msra.mxu0 0
  %2868 = vmatprep.subr.bf16.mxu0 0
  %2869 = vmatpush1.bf16.msra.mxu0 0
  %2870 = vmatprep.subr.bf16.mxu0 0
  %2871 = vmatpush1.bf16.msra.mxu0 0
  %2872 = vmatprep.subr.bf16.mxu0 0
  %2873 = vmatpush1.bf16.msra.mxu0 0
  %2874 = vmatprep.subr.bf16.mxu0 0
  %2875 = vmatpush1.bf16.msra.mxu0 0
  %2876 = vmatprep.subr.bf16.mxu0 0
  %2877 = vmatpush1.bf16.msra.mxu0 0
  %2878 = vmatprep.subr.bf16.mxu0 0
  %2879 = vmatpush1.bf16.msra.mxu0 0
  %2880 = vmatprep.subr.bf16.mxu0 0
  %2881 = vmatpush1.bf16.msra.mxu0 0
  %2882 = vmatprep.subr.bf16.mxu0 0
  %2883 = vmatpush1.bf16.msra.mxu0 0
  %2884 = vmatprep.subr.bf16.mxu0 0
  %2885 = vmatpush1.bf16.msra.mxu0 0
  %2886 = vmatprep.subr.bf16.mxu0 0
  %2887 = vmatpush1.bf16.msra.mxu0 0
  %2888 = vmatprep.mubr.bf16.mxu0 0
  %2889 = vmatmul.mubr.bf16.gmra.mrb[0].mxu0 %v2761
  %v2890 = vpop.f32.mrb[0].mxu0
  %v2891 = vadd.f32 %v2746, %v2890
  %v2892 = vpop.f32.mrb[0].mxu0
  %v2893 = vpop.f32.mrb[0].mxu0
  %v2894 = vadd.f32 %v2746, %v2893
  %v2895 = vpop.f32.mrb[0].mxu0
  %2896 = vmatprep.mubr.bf16.mxu0 0
  %2897 = vmatmul.mubr.bf16.gmra.mrb[0].mxu0 %v2764
  %v2898 = vpop.f32.mrb[0].mxu0
  %v2899 = vadd.f32 %v2746, %v2898
  %v2900 = vpop.f32.mrb[0].mxu0
  %v2901 = vpop.f32.mrb[0].mxu0
  %v2902 = vadd.f32 %v2746, %v2901
  %v2903 = vpop.f32.mrb[0].mxu0
  %2904 = vmatprep.mubr.bf16.mxu0 0
  %2905 = vmatmul.mubr.bf16.gmra.mrb[0].mxu0 %v2767
  %v2906 = vpop.f32.mrb[0].mxu0
  %v2907 = vadd.f32 %v2746, %v2906
  %v2908 = vpop.f32.mrb[0].mxu0
  %v2909 = vpop.f32.mrb[0].mxu0
  %v2910 = vadd.f32 %v2746, %v2909
  %v2911 = vpop.f32.mrb[0].mxu0
  %2912 = vmatprep.mubr.bf16.mxu0 0
  %2913 = vmatmul.mubr.bf16.gmra.mrb[0].mxu0 %v2770
  %v2914 = vpop.f32.mrb[0].mxu0
  %v2915 = vadd.f32 %v2746, %v2914
  %v2916 = vpop.f32.mrb[0].mxu0
  %v2917 = vpop.f32.mrb[0].mxu0
  %v2918 = vadd.f32 %v2746, %v2917
  %v2919 = vpop.f32.mrb[0].mxu0
  %2920 = vmatprep.mubr.bf16.mxu0 0
  %2921 = vmatmul.mubr.bf16.gmra.mrb[0].mxu0 %v2773
  %v2922 = vpop.f32.mrb[0].mxu0
  %v2923 = vadd.f32 %v2746, %v2922
  %v2924 = vpop.f32.mrb[0].mxu0
  %v2925 = vpop.f32.mrb[0].mxu0
  %v2926 = vadd.f32 %v2746, %v2925
  %v2927 = vpop.f32.mrb[0].mxu0
  %2928 = vmatprep.mubr.bf16.mxu0 0
  %2929 = vmatmul.mubr.bf16.gmra.mrb[0].mxu0 %v2776
  %v2930 = vpop.f32.mrb[0].mxu0
  %v2931 = vadd.f32 %v2746, %v2930
  %v2932 = vpop.f32.mrb[0].mxu0
  %v2933 = vpop.f32.mrb[0].mxu0
  %v2934 = vadd.f32 %v2746, %v2933
  %v2935 = vpop.f32.mrb[0].mxu0
  %2936 = vmatprep.mubr.bf16.mxu0 0
  %2937 = vmatmul.mubr.bf16.gmra.mrb[0].mxu0 %v2779
  %v2938 = vpop.f32.mrb[0].mxu0
  %v2939 = vadd.f32 %v2746, %v2938
  %v2940 = vpop.f32.mrb[0].mxu0
  %v2941 = vpop.f32.mrb[0].mxu0
  %v2942 = vadd.f32 %v2746, %v2941
  %v2943 = vpop.f32.mrb[0].mxu0
  %2944 = vmatprep.mubr.bf16.mxu0 0
  %2945 = vmatmul.mubr.bf16.gmra.mrb[0].mxu0 %v2782
  %v2946 = vpop.f32.mrb[0].mxu0
  %v2947 = vadd.f32 %v2746, %v2946
  %v2948 = vpop.f32.mrb[0].mxu0
  %v2949 = vpop.f32.mrb[0].mxu0
  %v2950 = vadd.f32 %v2746, %v2949
  %v2951 = vpop.f32.mrb[0].mxu0
  %2952 = vmatprep.mubr.bf16.mxu0 0
  %2953 = vmatmul.mubr.bf16.gmra.mrb[0].mxu0 %v2785
  %v2954 = vpop.f32.mrb[0].mxu0
  %v2955 = vadd.f32 %v2746, %v2954
  %v2956 = vpop.f32.mrb[0].mxu0
  %v2957 = vpop.f32.mrb[0].mxu0
  %v2958 = vadd.f32 %v2746, %v2957
  %v2959 = vpop.f32.mrb[0].mxu0
  %2960 = vmatprep.mubr.bf16.mxu0 0
  %2961 = vmatmul.mubr.bf16.gmra.mrb[0].mxu0 %v2788
  %v2962 = vpop.f32.mrb[0].mxu0
  %v2963 = vadd.f32 %v2746, %v2962
  %v2964 = vpop.f32.mrb[0].mxu0
  %v2965 = vpop.f32.mrb[0].mxu0
  %v2966 = vadd.f32 %v2746, %v2965
  %v2967 = vpop.f32.mrb[0].mxu0
  %2968 = vmatprep.mubr.bf16.mxu0 0
  %2969 = vmatmul.mubr.bf16.gmra.mrb[0].mxu0 %v2791
  %v2970 = vpop.f32.mrb[0].mxu0
  %v2971 = vadd.f32 %v2746, %v2970
  %v2972 = vpop.f32.mrb[0].mxu0
  %v2973 = vpop.f32.mrb[0].mxu0
  %v2974 = vadd.f32 %v2746, %v2973
  %v2975 = vpop.f32.mrb[0].mxu0
  %2976 = vmatprep.mubr.bf16.mxu0 0
  %2977 = vmatmul.mubr.bf16.gmra.mrb[0].mxu0 %v2794
  %v2978 = vpop.f32.mrb[0].mxu0
  %v2979 = vadd.f32 %v2746, %v2978
  %v2980 = vpop.f32.mrb[0].mxu0
  %v2981 = vpop.f32.mrb[0].mxu0
  %v2982 = vadd.f32 %v2746, %v2981
  %v2983 = vpop.f32.mrb[0].mxu0
  %2984 = vmatprep.mubr.bf16.mxu0 0
  %2985 = vmatmul.mubr.bf16.gmra.mrb[0].mxu0 %v2797
  %v2986 = vpop.f32.mrb[0].mxu0
  %v2987 = vadd.f32 %v2746, %v2986
  %v2988 = vpop.f32.mrb[0].mxu0
  %v2989 = vpop.f32.mrb[0].mxu0
  %v2990 = vadd.f32 %v2746, %v2989
  %v2991 = vpop.f32.mrb[0].mxu0
  %2992 = vmatprep.mubr.bf16.mxu0 0
  %2993 = vmatmul.mubr.bf16.gmra.mrb[0].mxu0 %v2800
  %v2994 = vpop.f32.mrb[0].mxu0
  %v2995 = vadd.f32 %v2746, %v2994
  %v2996 = vpop.f32.mrb[0].mxu0
  %v2997 = vpop.f32.mrb[0].mxu0
  %v2998 = vadd.f32 %v2746, %v2997
  %v2999 = vpop.f32.mrb[0].mxu0
  %3000 = vmatprep.mubr.bf16.mxu0 0
  %3001 = vmatmul.mubr.bf16.gmra.mrb[0].mxu0 %v2803
  %v3002 = vpop.f32.mrb[0].mxu0
  %v3003 = vadd.f32 %v2746, %v3002
  %v3004 = vpop.f32.mrb[0].mxu0
  %v3005 = vpop.f32.mrb[0].mxu0
  %v3006 = vadd.f32 %v2746, %v3005
  %v3007 = vpop.f32.mrb[0].mxu0
  %3008 = vmatprep.mubr.bf16.mxu0 0
  %3009 = vmatmul.mubr.bf16.gmra.mrb[0].mxu0 %v2806
  %v3010 = vpop.f32.mrb[0].mxu0
  %v3011 = vadd.f32 %v2746, %v3010
  %v3012 = vpop.f32.mrb[0].mxu0
  %v3013 = vpop.f32.mrb[0].mxu0
  %v3014 = vadd.f32 %v2746, %v3013
  %v3015 = vpop.f32.mrb[0].mxu0
  %3016 = vmatprep.mubr.bf16.mxu0 0
  %3017 = vmatmul.mubr.bf16.gmra.mrb[0].mxu0 %v2809
  %v3018 = vpop.f32.mrb[0].mxu0
  %v3019 = vadd.f32 %v2746, %v3018
  %v3020 = vpop.f32.mrb[0].mxu0
  %v3021 = vpop.f32.mrb[0].mxu0
  %v3022 = vadd.f32 %v2746, %v3021
  %v3023 = vpop.f32.mrb[0].mxu0
  %3024 = vmatprep.mubr.bf16.mxu0 0
  %3025 = vmatmul.mubr.bf16.gmra.mrb[0].mxu0 %v2812
  %v3026 = vpop.f32.mrb[0].mxu0
  %v3027 = vadd.f32 %v2746, %v3026
  %v3028 = vpop.f32.mrb[0].mxu0
  %v3029 = vpop.f32.mrb[0].mxu0
  %v3030 = vadd.f32 %v2746, %v3029
  %v3031 = vpop.f32.mrb[0].mxu0
  %3032 = vmatprep.mubr.bf16.mxu0 0
  %3033 = vmatmul.mubr.bf16.gmra.mrb[0].mxu0 %v2815
  %v3034 = vpop.f32.mrb[0].mxu0
  %v3035 = vadd.f32 %v2746, %v3034
  %v3036 = vpop.f32.mrb[0].mxu0
  %v3037 = vpop.f32.mrb[0].mxu0
  %v3038 = vadd.f32 %v2746, %v3037
  %v3039 = vpop.f32.mrb[0].mxu0
  %3040 = vmatprep.mubr.bf16.mxu0 0
  %3041 = vmatmul.mubr.bf16.gmra.mrb[0].mxu0 %v2818
  %v3042 = vpop.f32.mrb[0].mxu0
  %v3043 = vadd.f32 %v2746, %v3042
  %v3044 = vpop.f32.mrb[0].mxu0
  %v3045 = vpop.f32.mrb[0].mxu0
  %v3046 = vadd.f32 %v2746, %v3045
  %v3047 = vpop.f32.mrb[0].mxu0
  %3048 = vmatprep.mubr.bf16.mxu0 0
  %3049 = vmatmul.mubr.bf16.gmra.mrb[0].mxu0 %v2821
  %v3050 = vpop.f32.mrb[0].mxu0
  %v3051 = vadd.f32 %v2746, %v3050
  %v3052 = vpop.f32.mrb[0].mxu0
  %v3053 = vpop.f32.mrb[0].mxu0
  %v3054 = vadd.f32 %v2746, %v3053
  %v3055 = vpop.f32.mrb[0].mxu0
  %3056 = vmatprep.mubr.bf16.mxu0 0
  %3057 = vmatmul.mubr.bf16.gmra.mrb[0].mxu0 %v2824
  %v3058 = vpop.f32.mrb[0].mxu0
  %v3059 = vadd.f32 %v2746, %v3058
  %v3060 = vpop.f32.mrb[0].mxu0
  %v3061 = vpop.f32.mrb[0].mxu0
  %v3062 = vadd.f32 %v2746, %v3061
  %v3063 = vpop.f32.mrb[0].mxu0
  %3064 = vmatprep.mubr.bf16.mxu0 0
  %3065 = vmatmul.mubr.bf16.gmra.mrb[0].mxu0 %v2827
  %v3066 = vpop.f32.mrb[0].mxu0
  %v3067 = vadd.f32 %v2746, %v3066
  %v3068 = vpop.f32.mrb[0].mxu0
  %v3069 = vpop.f32.mrb[0].mxu0
  %v3070 = vadd.f32 %v2746, %v3069
  %v3071 = vpop.f32.mrb[0].mxu0
  %3072 = vmatprep.mubr.bf16.mxu0 0
  %3073 = vmatmul.mubr.bf16.gmra.mrb[0].mxu0 %v2830
  %v3074 = vpop.f32.mrb[0].mxu0
  %v3075 = vadd.f32 %v2746, %v3074
  %v3076 = vpop.f32.mrb[0].mxu0
  %v3077 = vpop.f32.mrb[0].mxu0
  %v3078 = vadd.f32 %v2746, %v3077
  %v3079 = vpop.f32.mrb[0].mxu0
  %3080 = vmatprep.mubr.bf16.mxu0 0
  %3081 = vmatmul.mubr.bf16.gmra.mrb[0].mxu0 %v2833
  %v3082 = vpop.f32.mrb[0].mxu0
  %v3083 = vadd.f32 %v2746, %v3082
  %v3084 = vpop.f32.mrb[0].mxu0
  %v3085 = vpop.f32.mrb[0].mxu0
  %v3086 = vadd.f32 %v2746, %v3085
  %v3087 = vpop.f32.mrb[0].mxu0
  %3088 = vmatprep.mubr.bf16.mxu0 0
  %3089 = vmatmul.mubr.bf16.gmra.mrb[0].mxu0 %v2836
  %v3090 = vpop.f32.mrb[0].mxu0
  %v3091 = vadd.f32 %v2746, %v3090
  %v3092 = vpop.f32.mrb[0].mxu0
  %v3093 = vpop.f32.mrb[0].mxu0
  %v3094 = vadd.f32 %v2746, %v3093
  %v3095 = vpop.f32.mrb[0].mxu0
  %3096 = vmatprep.mubr.bf16.mxu0 0
  %3097 = vmatmul.mubr.bf16.gmra.mrb[0].mxu0 %v2839
  %v3098 = vpop.f32.mrb[0].mxu0
  %v3099 = vadd.f32 %v2746, %v3098
  %v3100 = vpop.f32.mrb[0].mxu0
  %v3101 = vpop.f32.mrb[0].mxu0
  %v3102 = vadd.f32 %v2746, %v3101
  %v3103 = vpop.f32.mrb[0].mxu0
  %3104 = vmatprep.mubr.bf16.mxu0 0
  %3105 = vmatmul.mubr.bf16.gmra.mrb[0].mxu0 %v2842
  %v3106 = vpop.f32.mrb[0].mxu0
  %v3107 = vadd.f32 %v2746, %v3106
  %v3108 = vpop.f32.mrb[0].mxu0
  %v3109 = vpop.f32.mrb[0].mxu0
  %v3110 = vadd.f32 %v2746, %v3109
  %v3111 = vpop.f32.mrb[0].mxu0
  %3112 = vmatprep.mubr.bf16.mxu0 0
  %3113 = vmatmul.mubr.bf16.gmra.mrb[0].mxu0 %v2845
  %v3114 = vpop.f32.mrb[0].mxu0
  %v3115 = vadd.f32 %v2746, %v3114
  %v3116 = vpop.f32.mrb[0].mxu0
  %v3117 = vpop.f32.mrb[0].mxu0
  %v3118 = vadd.f32 %v2746, %v3117
  %v3119 = vpop.f32.mrb[0].mxu0
  %3120 = vmatprep.mubr.bf16.mxu0 0
  %3121 = vmatmul.mubr.bf16.gmra.mrb[0].mxu0 %v2848
  %v3122 = vpop.f32.mrb[0].mxu0
  %v3123 = vadd.f32 %v2746, %v3122
  %v3124 = vpop.f32.mrb[0].mxu0
  %v3125 = vpop.f32.mrb[0].mxu0
  %v3126 = vadd.f32 %v2746, %v3125
  %v3127 = vpop.f32.mrb[0].mxu0
  %3128 = vmatprep.mubr.bf16.mxu0 0
  %3129 = vmatmul.mubr.bf16.gmra.mrb[0].mxu0 %v2851
  %v3130 = vpop.f32.mrb[0].mxu0
  %v3131 = vadd.f32 %v2746, %v3130
  %v3132 = vpop.f32.mrb[0].mxu0
  %v3133 = vpop.f32.mrb[0].mxu0
  %v3134 = vadd.f32 %v2746, %v3133
  %v3135 = vpop.f32.mrb[0].mxu0
  %3136 = vmatprep.mubr.bf16.mxu0 0
  %3137 = vmatmul.mubr.bf16.gmra.mrb[0].mxu0 %v2854
  %v3138 = vpop.f32.mrb[0].mxu0
  %v3139 = vadd.f32 %v2746, %v3138
  %v3140 = vpop.f32.mrb[0].mxu0
  %v3141 = vpop.f32.mrb[0].mxu0
  %v3142 = vadd.f32 %v2746, %v3141
  %v3143 = vpop.f32.mrb[0].mxu0
  %3144 = vdwg.mxu0
  %v3145 = vadd.f32 %v2891, %v27
  %v3146 = vadd.f32 %v2894, %v28
  %v3147 = vadd.f32 %v2899, %v29
  %v3148 = vadd.f32 %v2902, %v30
  %v3149 = vadd.f32 %v2907, %v31
  %v3150 = vadd.f32 %v2910, %v32
  %v3151 = vadd.f32 %v2915, %v33
  %v3152 = vadd.f32 %v2918, %v34
  %v3153 = vadd.f32 %v2923, %v35
  %v3154 = vadd.f32 %v2926, %v36
  %v3155 = vadd.f32 %v2931, %v37
  %v3156 = vadd.f32 %v2934, %v38
  %v3157 = vadd.f32 %v2939, %v39
  %v3158 = vadd.f32 %v2942, %v40
  %v3159 = vadd.f32 %v2947, %v41
  %v3160 = vadd.f32 %v2950, %v42
  %v3161 = vadd.f32 %v2955, %v43
  %v3162 = vadd.f32 %v2958, %v44
  %v3163 = vadd.f32 %v2963, %v45
  %v3164 = vadd.f32 %v2966, %v46
  %v3165 = vadd.f32 %v2971, %v47
  %v3166 = vadd.f32 %v2974, %v48
  %v3167 = vadd.f32 %v2979, %v49
  %v3168 = vadd.f32 %v2982, %v50
  %v3169 = vadd.f32 %v2987, %v51
  %v3170 = vadd.f32 %v2990, %v52
  %v3171 = vadd.f32 %v2995, %v53
  %v3172 = vadd.f32 %v2998, %v54
  %v3173 = vadd.f32 %v3003, %v55
  %v3174 = vadd.f32 %v3006, %v56
  %v3175 = vadd.f32 %v3011, %v57
  %v3176 = vadd.f32 %v3014, %v58
  %v3177 = vadd.f32 %v3019, %v59
  %v3178 = vadd.f32 %v3022, %v60
  %v3179 = vadd.f32 %v3027, %v61
  %v3180 = vadd.f32 %v3030, %v62
  %v3181 = vadd.f32 %v3035, %v63
  %v3182 = vadd.f32 %v3038, %v64
  %v3183 = vadd.f32 %v3043, %v65
  %v3184 = vadd.f32 %v3046, %v66
  %v3185 = vadd.f32 %v3051, %v67
  %v3186 = vadd.f32 %v3054, %v68
  %v3187 = vadd.f32 %v3059, %v69
  %v3188 = vadd.f32 %v3062, %v70
  %v3189 = vadd.f32 %v3067, %v71
  %v3190 = vadd.f32 %v3070, %v72
  %v3191 = vadd.f32 %v3075, %v73
  %v3192 = vadd.f32 %v3078, %v74
  %v3193 = vadd.f32 %v3083, %v75
  %v3194 = vadd.f32 %v3086, %v76
  %v3195 = vadd.f32 %v3091, %v77
  %v3196 = vadd.f32 %v3094, %v78
  %v3197 = vadd.f32 %v3099, %v79
  %v3198 = vadd.f32 %v3102, %v80
  %v3199 = vadd.f32 %v3107, %v81
  %v3200 = vadd.f32 %v3110, %v82
  %v3201 = vadd.f32 %v3115, %v83
  %v3202 = vadd.f32 %v3118, %v84
  %v3203 = vadd.f32 %v3123, %v85
  %v3204 = vadd.f32 %v3126, %v86
  %v3205 = vadd.f32 %v3131, %v87
  %v3206 = vadd.f32 %v3134, %v88
  %v3207 = vadd.f32 %v3139, %v89
  %v3208 = vadd.f32 %v3142, %v90
  %3209 = vst.msk [vmem:[%s7] sm:$0xff] %vm131, %v3145
  %3210 = vst.msk [vmem:[%s7 + $0x8] sm:$0xff] %vm131, %v3146
  %3211 = vst.msk [vmem:[%s7 + $0x10] sm:$0xff] %vm131, %v3147
  %3212 = vst.msk [vmem:[%s7 + $0x18] sm:$0xff] %vm131, %v3148
  %3213 = vst.msk [vmem:[%s7 + $0x20] sm:$0xff] %vm131, %v3149
  %3214 = vst.msk [vmem:[%s7 + $0x28] sm:$0xff] %vm131, %v3150
  %3215 = vst.msk [vmem:[%s7 + $0x30] sm:$0xff] %vm131, %v3151
  %3216 = vst.msk [vmem:[%s7 + $0x38] sm:$0xff] %vm131, %v3152
  %3217 = vst.msk [vmem:[%s7 + $0x40] sm:$0xff] %vm131, %v3153
  %3218 = vst.msk [vmem:[%s7 + $0x48] sm:$0xff] %vm131, %v3154
  %3219 = vst.msk [vmem:[%s7 + $0x50] sm:$0xff] %vm131, %v3155
  %3220 = vst.msk [vmem:[%s7 + $0x58] sm:$0xff] %vm131, %v3156
  %3221 = vst.msk [vmem:[%s7 + $0x60] sm:$0xff] %vm131, %v3157
  %3222 = vst.msk [vmem:[%s7 + $0x68] sm:$0xff] %vm131, %v3158
  %3223 = vst.msk [vmem:[%s7 + $0x70] sm:$0xff] %vm131, %v3159
  %3224 = vst.msk [vmem:[%s7 + $0x78] sm:$0xff] %vm131, %v3160
  %3225 = vst.msk [vmem:[%s7 + $0x80] sm:$0xff] %vm131, %v3161
  %3226 = vst.msk [vmem:[%s7 + $0x88] sm:$0xff] %vm131, %v3162
  %3227 = vst.msk [vmem:[%s7 + $0x90] sm:$0xff] %vm131, %v3163
  %3228 = vst.msk [vmem:[%s7 + $0x98] sm:$0xff] %vm131, %v3164
  %3229 = vst.msk [vmem:[%s7 + $0xa0] sm:$0xff] %vm131, %v3165
  %3230 = vst.msk [vmem:[%s7 + $0xa8] sm:$0xff] %vm131, %v3166
  %3231 = vst.msk [vmem:[%s7 + $0xb0] sm:$0xff] %vm131, %v3167
  %3232 = vst.msk [vmem:[%s7 + $0xb8] sm:$0xff] %vm131, %v3168
  %3233 = vst.msk [vmem:[%s7 + $0xc0] sm:$0xff] %vm131, %v3169
  %3234 = vst.msk [vmem:[%s7 + $0xc8] sm:$0xff] %vm131, %v3170
  %3235 = vst.msk [vmem:[%s7 + $0xd0] sm:$0xff] %vm131, %v3171
  %3236 = vst.msk [vmem:[%s7 + $0xd8] sm:$0xff] %vm131, %v3172
  %3237 = vst.msk [vmem:[%s7 + $0xe0] sm:$0xff] %vm131, %v3173
  %3238 = vst.msk [vmem:[%s7 + $0xe8] sm:$0xff] %vm131, %v3174
  %3239 = vst.msk [vmem:[%s7 + $0xf0] sm:$0xff] %vm131, %v3175
  %3240 = vst.msk [vmem:[%s7 + $0xf8] sm:$0xff] %vm131, %v3176
  %3241 = vst.msk [vmem:[%s7 + $0x100] sm:$0xff] %vm131, %v3177
  %3242 = vst.msk [vmem:[%s7 + $0x108] sm:$0xff] %vm131, %v3178
  %3243 = vst.msk [vmem:[%s7 + $0x110] sm:$0xff] %vm131, %v3179
  %3244 = vst.msk [vmem:[%s7 + $0x118] sm:$0xff] %vm131, %v3180
  %3245 = vst.msk [vmem:[%s7 + $0x120] sm:$0xff] %vm131, %v3181
  %3246 = vst.msk [vmem:[%s7 + $0x128] sm:$0xff] %vm131, %v3182
  %3247 = vst.msk [vmem:[%s7 + $0x130] sm:$0xff] %vm131, %v3183
  %3248 = vst.msk [vmem:[%s7 + $0x138] sm:$0xff] %vm131, %v3184
  %3249 = vst.msk [vmem:[%s7 + $0x140] sm:$0xff] %vm131, %v3185
  %3250 = vst.msk [vmem:[%s7 + $0x148] sm:$0xff] %vm131, %v3186
  %3251 = vst.msk [vmem:[%s7 + $0x150] sm:$0xff] %vm131, %v3187
  %3252 = vst.msk [vmem:[%s7 + $0x158] sm:$0xff] %vm131, %v3188
  %3253 = vst.msk [vmem:[%s7 + $0x160] sm:$0xff] %vm131, %v3189
  %3254 = vst.msk [vmem:[%s7 + $0x168] sm:$0xff] %vm131, %v3190
  %3255 = vst.msk [vmem:[%s7 + $0x170] sm:$0xff] %vm131, %v3191
  %3256 = vst.msk [vmem:[%s7 + $0x178] sm:$0xff] %vm131, %v3192
  %3257 = vst.msk [vmem:[%s7 + $0x180] sm:$0xff] %vm131, %v3193
  %3258 = vst.msk [vmem:[%s7 + $0x188] sm:$0xff] %vm131, %v3194
  %3259 = vst.msk [vmem:[%s7 + $0x190] sm:$0xff] %vm131, %v3195
  %3260 = vst.msk [vmem:[%s7 + $0x198] sm:$0xff] %vm131, %v3196
  %3261 = vst.msk [vmem:[%s7 + $0x1a0] sm:$0xff] %vm131, %v3197
  %3262 = vst.msk [vmem:[%s7 + $0x1a8] sm:$0xff] %vm131, %v3198
  %3263 = vst.msk [vmem:[%s7 + $0x1b0] sm:$0xff] %vm131, %v3199
  %3264 = vst.msk [vmem:[%s7 + $0x1b8] sm:$0xff] %vm131, %v3200
  %3265 = vst.msk [vmem:[%s7 + $0x1c0] sm:$0xff] %vm131, %v3201
  %3266 = vst.msk [vmem:[%s7 + $0x1c8] sm:$0xff] %vm131, %v3202
  %3267 = vst.msk [vmem:[%s7 + $0x1d0] sm:$0xff] %vm131, %v3203
  %3268 = vst.msk [vmem:[%s7 + $0x1d8] sm:$0xff] %vm131, %v3204
  %3269 = vst.msk [vmem:[%s7 + $0x1e0] sm:$0xff] %vm131, %v3205
  %3270 = vst.msk [vmem:[%s7 + $0x1e8] sm:$0xff] %vm131, %v3206
  %3271 = vst.msk [vmem:[%s7 + $0x1f0] sm:$0xff] %vm131, %v3207
  %3272 = vst.msk [vmem:[%s7 + $0x1f8] sm:$0xff] %vm131, %v3208
  // Predicated region
  $region30: #{inverted_residual_pallas.1} parent=0 // pred_check
    _
  $region31: #{inverted_residual_pallas.1} parent=0 // pred_check_branch
    %3274 = sbr.rel (0) target = $region33
  $region32: #{inverted_residual_pallas.1} parent=0 // pred_region
    _
  $region33: #{inverted_residual_pallas.1} parent=0 // pred_fallthru
    _
  // Predicated region
  $region34: #{inverted_residual_pallas.1} parent=0 // pred_check
    _
  $region35: #{inverted_residual_pallas.1} parent=0 // pred_check_branch
    %3276 = sbr.rel (0) target = $region37
  $region36: #{inverted_residual_pallas.1} parent=0 // pred_region
    _
  $region37: #{inverted_residual_pallas.1} parent=0 // pred_fallthru
    _

</llo_original>
